<compile_context>
chip_gen: v6e
topology: v6e:2x2x1
jax: 0.10.0
libtpu: 0.0.40
codegen_flags: <defaults>
</compile_context>

<pallas_src>
import functools

import jax
import jax.numpy as jnp
from jax.experimental import pallas as pl
from jax.experimental.pallas import tpu as pltpu

LN_EPS = 1e-5  # PyTorch nn.LayerNorm default


def _layernorm(x, g, b):
    mu = jnp.mean(x, axis=-1, keepdims=True)
    var = jnp.mean((x - mu) ** 2, axis=-1, keepdims=True)
    return (x - mu) * jax.lax.rsqrt(var + LN_EPS) * g + b


def _erf(z):
    # Abramowitz & Stegun 7.1.26 polynomial erf (|abs err| < 1.5e-7) so the
    # exact (erf-based) nn.GELU() is reproduced with only exp/div, which are
    # guaranteed to lower on Mosaic.
    a1, a2, a3, a4, a5 = 0.254829592, -0.284496736, 1.421413741, -1.453152027, 1.061405429
    p = 0.3275911
    s = jnp.where(z >= 0.0, 1.0, -1.0)
    az = jnp.abs(z)
    t = 1.0 / (1.0 + p * az)
    poly = ((((a5 * t + a4) * t + a3) * t + a2) * t + a1) * t
    return s * (1.0 - poly * jnp.exp(-az * az))


# ----------------------------- Attention kernel ------------------------------

def _attn_kernel(x_ref, g_ref, b_ref, wqkv_ref, wout_ref, out_ref, cres_ref,
                 *, heads, dim_head, scale):
    inner = heads * dim_head

    x = x_ref[...]                                            # (N, D) f32
    xn = _layernorm(x, g_ref[...], b_ref[...])                # nn.LayerNorm(dim)

    # Fused QKV projection: bf16 operands -> f32 accumulation on the MXU.
    qkv = jnp.dot(xn.astype(jnp.bfloat16), wqkv_ref[...],
                  preferred_element_type=jnp.float32)         # (N, 3*inner)

    # Head-major (H, N, dh) tensors built once (static lane slices + stack);
    # all per-head matmuls are then batched einsums over the leading head axis.
    def to_heads(base):
        return jnp.stack(
            [qkv[:, base + h * dim_head: base + (h + 1) * dim_head]
             for h in range(heads)], axis=0)                  # (H, N, dh)

    q = to_heads(0)
    k = to_heads(inner)
    v = to_heads(2 * inner)

    # Batched scores; contraction over d avoids any explicit k.T transpose.
    dots = jnp.einsum('hnd,hmd->hnm',
                      q.astype(jnp.bfloat16), k.astype(jnp.bfloat16),
                      preferred_element_type=jnp.float32) * scale   # (H, N, N)

    m = jnp.max(dots, axis=-1, keepdims=True)
    e = jnp.exp(dots - m)
    attn = e / jnp.sum(e, axis=-1, keepdims=True)             # exact softmax (feeds top-k)

    # Context for all heads in one batched matmul, then one fused output
    # projection: sum_h o_h @ W_out[h]  ==  concat_h(o_h) @ W_out.
    o = jnp.einsum('hnm,hmd->hnd',
                   attn.astype(jnp.bfloat16), v.astype(jnp.bfloat16),
                   preferred_element_type=jnp.float32)        # (H, N, dh)
    y = jnp.einsum('hnd,hde->hne',
                   o.astype(jnp.bfloat16), wout_ref[...],
                   preferred_element_type=jnp.float32)        # (H, N, D)
    out_ref[...] = jnp.sum(y, axis=0)                         # (N, D)

    # Fused centrality reduction (replaces emitting the (H, N, N) attn tensor):
    #   att_max[i, j] = max_h attn[h, i, j]
    #   c_in[i]       = sum_r att_max[r, i]              (column sums)
    #   c_resc[j]     = sum_i att_max[i, j] * c_in[i]    == (c_in_row @ att_max)
    att_max = jnp.max(attn, axis=0)                           # (N, N) f32
    c_in = jnp.sum(att_max, axis=0, keepdims=True)            # (1, N) f32
    cres_ref[...] = jnp.dot(c_in, att_max,
                            preferred_element_type=jnp.float32)   # (1, N)


def attention_pallas(x, ln_g, ln_b, w_qkv, w_out, *, heads, dim_head):
    B, N, D = x.shape
    inner = heads * dim_head
    kernel = functools.partial(_attn_kernel, heads=heads, dim_head=dim_head,
                               scale=dim_head ** -0.5)
    w_qkv_b = w_qkv.astype(jnp.bfloat16)                              # (D, 3*inner)
    w_out_b = w_out.astype(jnp.bfloat16).reshape(heads, dim_head, D)  # head-major

    out, cres = pl.pallas_call(
        kernel,
        out_shape=(jax.ShapeDtypeStruct((B, N, D), jnp.float32),
                   jax.ShapeDtypeStruct((B, 1, N), jnp.float32)),
        grid=(B,),
        in_specs=[
            pl.BlockSpec((None, N, D), lambda b: (b, 0, 0)),
            pl.BlockSpec((1, D), lambda b: (0, 0)),
            pl.BlockSpec((1, D), lambda b: (0, 0)),
            pl.BlockSpec((D, 3 * inner), lambda b: (0, 0)),
            pl.BlockSpec((heads, dim_head, D), lambda b: (0, 0, 0)),
        ],
        out_specs=(
            pl.BlockSpec((None, N, D), lambda b: (b, 0, 0)),
            pl.BlockSpec((None, 1, N), lambda b: (b, 0, 0)),
        ),
        compiler_params=pltpu.CompilerParams(
            dimension_semantics=("parallel",),        # batch axis -> both TCs on v7x
            vmem_limit_bytes=32 * 1024 * 1024),
    )(x, ln_g[None, :], ln_b[None, :], w_qkv_b, w_out_b)
    return out, cres[:, 0, :]                                 # (B, N, D), (B, N)


# ----------------------------- FeedForward kernel -----------------------------

def _ff_kernel(x_ref, g_ref, b_ref, w1_ref, b1_ref, w2_ref, b2_ref, out_ref):
    x = x_ref[...]                                            # (B*M, D) f32
    xn = _layernorm(x, g_ref[...], b_ref[...])
    h = jnp.dot(xn.astype(jnp.bfloat16), w1_ref[...],
                preferred_element_type=jnp.float32) + b1_ref[...]
    h = 0.5 * h * (1.0 + _erf(h * 0.7071067811865476))        # exact (erf) GELU
    y = jnp.dot(h.astype(jnp.bfloat16), w2_ref[...],
                preferred_element_type=jnp.float32) + b2_ref[...]
    out_ref[...] = y + x                                      # ff(x) + x residual fused


def feedforward_pallas(x, ln_g, ln_b, w1, b1, w2, b2):
    B, M, D = x.shape
    R = B * M                 # fold batch into the matmul M dimension
    y = pl.pallas_call(
        _ff_kernel,
        out_shape=jax.ShapeDtypeStruct((R, D), jnp.float32),
        compiler_params=pltpu.CompilerParams(vmem_limit_bytes=32 * 1024 * 1024),
    )(x.reshape(R, D), ln_g[None, :], ln_b[None, :],
      w1.astype(jnp.bfloat16), b1[None, :],
      w2.astype(jnp.bfloat16), b2[None, :])
    return y.reshape(B, M, D)


# ------------------------------ Final LayerNorm -------------------------------

def _ln_kernel(x_ref, g_ref, b_ref, out_ref):
    out_ref[...] = _layernorm(x_ref[...], g_ref[...], b_ref[...])


def layernorm_pallas(x, g, b):
    B, M, D = x.shape
    R = B * M
    y = pl.pallas_call(
        _ln_kernel,
        out_shape=jax.ShapeDtypeStruct((R, D), jnp.float32),
    )(x.reshape(R, D), g[None, :], b[None, :])
    return y.reshape(B, M, D)


# ------------------------------ Parameter init --------------------------------

def init_params(key, dim, depth, heads, dim_head, mlp_dim):
    inner = heads * dim_head
    layers = []
    for _ in range(depth):
        key, k1, k2, k3, k4 = jax.random.split(key, 5)
        layers.append(dict(
            attn_ln_g=jnp.ones((dim,), jnp.float32),
            attn_ln_b=jnp.zeros((dim,), jnp.float32),
            # matmul weights stored in bf16 (MXU-native, half the weight DMA)
            w_qkv=(jax.random.normal(k1, (dim, inner * 3), jnp.float32)
                   * (dim ** -0.5)).astype(jnp.bfloat16),
            w_out=(jax.random.normal(k2, (inner, dim), jnp.float32)
                   * (inner ** -0.5)).astype(jnp.bfloat16),
            ff_ln_g=jnp.ones((dim,), jnp.float32),
            ff_ln_b=jnp.zeros((dim,), jnp.float32),
            w1=(jax.random.normal(k3, (dim, mlp_dim), jnp.float32)
                * (dim ** -0.5)).astype(jnp.bfloat16),
            b1=jnp.zeros((mlp_dim,), jnp.float32),
            w2=(jax.random.normal(k4, (mlp_dim, dim), jnp.float32)
                * (mlp_dim ** -0.5)).astype(jnp.bfloat16),
            b2=jnp.zeros((dim,), jnp.float32),
        ))
    return dict(layers=layers,
                norm_g=jnp.ones((dim,), jnp.float32),
                norm_b=jnp.zeros((dim,), jnp.float32))


# ----------------------------- Transformer_simple -----------------------------

def _forward_impl(x, params, *, n_patch, heads, dim_head):
    centrality = 0.0
    mask_list = []
    for idx, lp in enumerate(params["layers"]):
        # att_emb = attention output; c_resc = in-kernel fused
        # sum_i max_h(attn)[i, j] * (sum_r max_h(attn)[r, i])
        att_emb, c_resc = attention_pallas(x, lp["attn_ln_g"], lp["attn_ln_b"],
                                           lp["w_qkv"], lp["w_out"],
                                           heads=heads, dim_head=dim_head)
        # TODO(synk): top-k / sort / row-gather of the centrality masking has no
        # clean Pallas TPU equivalent; kept as plain JAX glue (compiled by jit).
        cent = (idx + 1) / 12.0 * c_resc + centrality          # matches PyTorch (idx+1)/12
        value, mask = jax.lax.top_k(cent, n_patch[idx])        # largest=True
        order = jnp.argsort(mask, axis=1)
        mask_sorted = jnp.take_along_axis(mask, order, axis=1)
        centrality = jnp.take_along_axis(value, order, axis=1)
        mask_list.append(mask_sorted)
        idx3 = mask_sorted[:, :, None]                         # (B, n_patch, 1)
        x = (jnp.take_along_axis(att_emb, idx3, axis=1)
             + jnp.take_along_axis(x, idx3, axis=1))
        x = feedforward_pallas(x, lp["ff_ln_g"], lp["ff_ln_b"],
                               lp["w1"], lp["b1"], lp["w2"], lp["b2"])
    x = layernorm_pallas(x, params["norm_g"], params["norm_b"])  # final nn.LayerNorm
    return x, mask_list


transformer_simple_forward = jax.jit(
    _forward_impl, static_argnames=("n_patch", "heads", "dim_head"))


if __name__ == "__main__":
    dim, depth, heads, dim_head, mlp_dim = 32, 2, 4, 8, 64
    B, N = 2, 16
    n_patch = (12, 8)

    key = jax.random.PRNGKey(0)
    kx, kp = jax.random.split(key)
    x = jax.random.normal(kx, (B, N, dim), jnp.float32)
    params = init_params(kp, dim, depth, heads, dim_head, mlp_dim)

    out, masks = transformer_simple_forward(x, params, n_patch=n_patch,
                                            heads=heads, dim_head=dim_head)
    jax.block_until_ready(out)
    for m in masks:
        jax.block_until_ready(m)

    assert out.shape == (B, n_patch[-1], dim)
    assert [tuple(m.shape) for m in masks] == [(B, n_patch[0]), (B, n_patch[1])]
    print("KERNEL_OK")
</pallas_src>

<mosaic_0001>
module attributes {stable_mosaic.version = 11 : i64} {
  func.func @_attn_kernel(%arg0: i32, %arg1: memref<1x16x32xf32, #tpu.memory_space<vmem>>, %arg2: memref<1x32xf32, #tpu.memory_space<vmem>>, %arg3: memref<1x32xf32, #tpu.memory_space<vmem>>, %arg4: memref<32x96xbf16, #tpu.memory_space<vmem>>, %arg5: memref<4x8x32xbf16, #tpu.memory_space<vmem>>, %arg6: memref<1x16x32xf32, #tpu.memory_space<vmem>>, %arg7: memref<1x1x16xf32, #tpu.memory_space<vmem>>) attributes {dimension_semantics = [#tpu.dimension_semantics<parallel>], iteration_bounds = array<i64: 2>, scalar_prefetch = 0 : i64, scratch_operands = 0 : i64, tpu.core_type = #tpu.core_type<tc>, window_params = [{transform_indices = @transform_0, window_bounds = array<i64: 1, 16, 32>}, {pipeline_mode = #tpu.pipeline_mode<synchronous>, transform_indices = @transform_1, window_bounds = array<i64: 1, 32>}, {pipeline_mode = #tpu.pipeline_mode<synchronous>, transform_indices = @transform_2, window_bounds = array<i64: 1, 32>}, {pipeline_mode = #tpu.pipeline_mode<synchronous>, transform_indices = @transform_3, window_bounds = array<i64: 32, 96>}, {pipeline_mode = #tpu.pipeline_mode<synchronous>, transform_indices = @transform_4, window_bounds = array<i64: 4, 8, 32>}, {transform_indices = @transform_5, window_bounds = array<i64: 1, 16, 32>}, {transform_indices = @transform_6, window_bounds = array<i64: 1, 1, 16>}]} {
    %c0 = arith.constant 0 : index
    %c0_0 = arith.constant 0 : index
    %c0_1 = arith.constant 0 : index
    %0 = vector.load %arg1[%c0, %c0_0, %c0_1] : memref<1x16x32xf32, #tpu.memory_space<vmem>>, vector<1x16x32xf32>
    %1 = vector.shape_cast %0 : vector<1x16x32xf32> to vector<16x32xf32>
    %c0_2 = arith.constant 0 : index
    %c0_3 = arith.constant 0 : index
    %2 = vector.load %arg2[%c0_2, %c0_3] : memref<1x32xf32, #tpu.memory_space<vmem>>, vector<1x32xf32>
    %c0_4 = arith.constant 0 : index
    %c0_5 = arith.constant 0 : index
    %3 = vector.load %arg3[%c0_4, %c0_5] : memref<1x32xf32, #tpu.memory_space<vmem>>, vector<1x32xf32>
    %cst = arith.constant dense<0.000000e+00> : vector<16xf32>
    %4 = vector.multi_reduction <add>, %1, %cst [1] : vector<16x32xf32> to vector<16xf32>
    %5 = vector.shape_cast %4 : vector<16xf32> to vector<16x1xf32>
    %cst_6 = arith.constant 3.200000e+01 : f32
    %6 = vector.broadcast %cst_6 : f32 to vector<16x1xf32>
    %7 = arith.divf %5, %6 : vector<16x1xf32>
    %8 = vector.broadcast %7 : vector<16x1xf32> to vector<16x32xf32>
    %9 = arith.subf %1, %8 : vector<16x32xf32>
    %10 = arith.mulf %9, %9 : vector<16x32xf32>
    %cst_7 = arith.constant dense<0.000000e+00> : vector<16xf32>
    %11 = vector.multi_reduction <add>, %10, %cst_7 [1] : vector<16x32xf32> to vector<16xf32>
    %12 = vector.shape_cast %11 : vector<16xf32> to vector<16x1xf32>
    %cst_8 = arith.constant 3.200000e+01 : f32
    %13 = vector.broadcast %cst_8 : f32 to vector<16x1xf32>
    %14 = arith.divf %12, %13 : vector<16x1xf32>
    %15 = vector.broadcast %7 : vector<16x1xf32> to vector<16x32xf32>
    %16 = arith.subf %1, %15 : vector<16x32xf32>
    %cst_9 = arith.constant 9.99999974E-6 : f32
    %17 = vector.broadcast %cst_9 : f32 to vector<16x1xf32>
    %18 = arith.addf %14, %17 : vector<16x1xf32>
    %19 = math.rsqrt %18 : vector<16x1xf32>
    %20 = vector.broadcast %19 : vector<16x1xf32> to vector<16x32xf32>
    %21 = arith.mulf %16, %20 : vector<16x32xf32>
    %22 = vector.broadcast %2 : vector<1x32xf32> to vector<16x32xf32>
    %23 = arith.mulf %21, %22 : vector<16x32xf32>
    %24 = vector.broadcast %3 : vector<1x32xf32> to vector<16x32xf32>
    %25 = arith.addf %23, %24 : vector<16x32xf32>
    %26 = arith.truncf %25 : vector<16x32xf32> to vector<16x32xbf16>
    %c0_10 = arith.constant 0 : index
    %c0_11 = arith.constant 0 : index
    %27 = vector.load %arg4[%c0_10, %c0_11] : memref<32x96xbf16, #tpu.memory_space<vmem>>, vector<32x96xbf16>
    %cst_12 = arith.constant dense<0.000000e+00> : vector<16x96xf32>
    %28 = tpu.matmul %26, %27, %cst_12 {dimension_numbers = #tpu.dot_dimension_numbers<[1], [0], [0], [1], [0, 0, 1, 1], [], []>} : vector<16x32xbf16>, vector<32x96xbf16>, vector<16x96xf32> -> vector<16x96xf32>
    %29 = vector.extract_strided_slice %28 {offsets = [0, 0], sizes = [16, 8], strides = [1, 1]} : vector<16x96xf32> to vector<16x8xf32>
    %30 = vector.extract_strided_slice %28 {offsets = [0, 8], sizes = [16, 8], strides = [1, 1]} : vector<16x96xf32> to vector<16x8xf32>
    %31 = vector.extract_strided_slice %28 {offsets = [0, 16], sizes = [16, 8], strides = [1, 1]} : vector<16x96xf32> to vector<16x8xf32>
    %32 = vector.extract_strided_slice %28 {offsets = [0, 24], sizes = [16, 8], strides = [1, 1]} : vector<16x96xf32> to vector<16x8xf32>
    %33 = vector.shape_cast %29 : vector<16x8xf32> to vector<1x16x8xf32>
    %34 = vector.shape_cast %30 : vector<16x8xf32> to vector<1x16x8xf32>
    %35 = vector.shape_cast %31 : vector<16x8xf32> to vector<1x16x8xf32>
    %36 = vector.shape_cast %32 : vector<16x8xf32> to vector<1x16x8xf32>
    %37 = tpu.concatenate %33, %34, %35, %36 in 0 : vector<1x16x8xf32>, vector<1x16x8xf32>, vector<1x16x8xf32>, vector<1x16x8xf32> -> vector<4x16x8xf32>
    %38 = vector.extract_strided_slice %28 {offsets = [0, 32], sizes = [16, 8], strides = [1, 1]} : vector<16x96xf32> to vector<16x8xf32>
    %39 = vector.extract_strided_slice %28 {offsets = [0, 40], sizes = [16, 8], strides = [1, 1]} : vector<16x96xf32> to vector<16x8xf32>
    %40 = vector.extract_strided_slice %28 {offsets = [0, 48], sizes = [16, 8], strides = [1, 1]} : vector<16x96xf32> to vector<16x8xf32>
    %41 = vector.extract_strided_slice %28 {offsets = [0, 56], sizes = [16, 8], strides = [1, 1]} : vector<16x96xf32> to vector<16x8xf32>
    %42 = vector.shape_cast %38 : vector<16x8xf32> to vector<1x16x8xf32>
    %43 = vector.shape_cast %39 : vector<16x8xf32> to vector<1x16x8xf32>
    %44 = vector.shape_cast %40 : vector<16x8xf32> to vector<1x16x8xf32>
    %45 = vector.shape_cast %41 : vector<16x8xf32> to vector<1x16x8xf32>
    %46 = tpu.concatenate %42, %43, %44, %45 in 0 : vector<1x16x8xf32>, vector<1x16x8xf32>, vector<1x16x8xf32>, vector<1x16x8xf32> -> vector<4x16x8xf32>
    %47 = vector.extract_strided_slice %28 {offsets = [0, 64], sizes = [16, 8], strides = [1, 1]} : vector<16x96xf32> to vector<16x8xf32>
    %48 = vector.extract_strided_slice %28 {offsets = [0, 72], sizes = [16, 8], strides = [1, 1]} : vector<16x96xf32> to vector<16x8xf32>
    %49 = vector.extract_strided_slice %28 {offsets = [0, 80], sizes = [16, 8], strides = [1, 1]} : vector<16x96xf32> to vector<16x8xf32>
    %50 = vector.extract_strided_slice %28 {offsets = [0, 88], sizes = [16, 8], strides = [1, 1]} : vector<16x96xf32> to vector<16x8xf32>
    %51 = vector.shape_cast %47 : vector<16x8xf32> to vector<1x16x8xf32>
    %52 = vector.shape_cast %48 : vector<16x8xf32> to vector<1x16x8xf32>
    %53 = vector.shape_cast %49 : vector<16x8xf32> to vector<1x16x8xf32>
    %54 = vector.shape_cast %50 : vector<16x8xf32> to vector<1x16x8xf32>
    %55 = tpu.concatenate %51, %52, %53, %54 in 0 : vector<1x16x8xf32>, vector<1x16x8xf32>, vector<1x16x8xf32>, vector<1x16x8xf32> -> vector<4x16x8xf32>
    %56 = arith.truncf %37 : vector<4x16x8xf32> to vector<4x16x8xbf16>
    %57 = arith.truncf %46 : vector<4x16x8xf32> to vector<4x16x8xbf16>
    "tpu.trace_start"() <{level = 10 : i32, message = "hnd,hmd->hnm"}> : () -> ()
    %cst_13 = arith.constant dense<0.000000e+00> : vector<4x16x16xf32>
    %58 = tpu.matmul %56, %57, %cst_13 {dimension_numbers = #tpu.dot_dimension_numbers<[2], [2], [1], [1], [0, 0, 0, 1, 1, 1], [0], [0]>} : vector<4x16x8xbf16>, vector<4x16x8xbf16>, vector<4x16x16xf32> -> vector<4x16x16xf32>
    "tpu.trace_stop"() : () -> ()
    %cst_14 = arith.constant 0.353553385 : f32
    %59 = vector.broadcast %cst_14 : f32 to vector<4x16x16xf32>
    %60 = arith.mulf %58, %59 : vector<4x16x16xf32>
    %cst_15 = arith.constant dense<0xFF800000> : vector<4x16xf32>
    %61 = vector.multi_reduction <maximumf>, %60, %cst_15 [2] : vector<4x16x16xf32> to vector<4x16xf32>
    %62 = vector.shape_cast %61 : vector<4x16xf32> to vector<4x16x1xf32>
    %63 = vector.broadcast %62 : vector<4x16x1xf32> to vector<4x16x16xf32>
    %64 = arith.subf %60, %63 : vector<4x16x16xf32>
    %65 = math.exp %64 : vector<4x16x16xf32>
    %cst_16 = arith.constant dense<0.000000e+00> : vector<4x16xf32>
    %66 = vector.multi_reduction <add>, %65, %cst_16 [2] : vector<4x16x16xf32> to vector<4x16xf32>
    %67 = vector.shape_cast %66 : vector<4x16xf32> to vector<4x16x1xf32>
    %68 = vector.broadcast %67 : vector<4x16x1xf32> to vector<4x16x16xf32>
    %69 = arith.divf %65, %68 : vector<4x16x16xf32>
    %70 = arith.truncf %69 : vector<4x16x16xf32> to vector<4x16x16xbf16>
    %71 = arith.truncf %55 : vector<4x16x8xf32> to vector<4x16x8xbf16>
    "tpu.trace_start"() <{level = 10 : i32, message = "hnm,hmd->hnd"}> : () -> ()
    %cst_17 = arith.constant dense<0.000000e+00> : vector<4x16x8xf32>
    %72 = tpu.matmul %70, %71, %cst_17 {dimension_numbers = #tpu.dot_dimension_numbers<[2], [1], [1], [2], [0, 0, 0, 1, 1, 2], [0], [0]>} : vector<4x16x16xbf16>, vector<4x16x8xbf16>, vector<4x16x8xf32> -> vector<4x16x8xf32>
    "tpu.trace_stop"() : () -> ()
    %73 = arith.truncf %72 : vector<4x16x8xf32> to vector<4x16x8xbf16>
    %c0_18 = arith.constant 0 : index
    %c0_19 = arith.constant 0 : index
    %c0_20 = arith.constant 0 : index
    %74 = vector.load %arg5[%c0_18, %c0_19, %c0_20] : memref<4x8x32xbf16, #tpu.memory_space<vmem>>, vector<4x8x32xbf16>
    "tpu.trace_start"() <{level = 10 : i32, message = "hnd,hde->hne"}> : () -> ()
    %cst_21 = arith.constant dense<0.000000e+00> : vector<4x16x32xf32>
    %75 = tpu.matmul %73, %74, %cst_21 {dimension_numbers = #tpu.dot_dimension_numbers<[2], [1], [1], [2], [0, 0, 0, 1, 1, 2], [0], [0]>} : vector<4x16x8xbf16>, vector<4x8x32xbf16>, vector<4x16x32xf32> -> vector<4x16x32xf32>
    "tpu.trace_stop"() : () -> ()
    %cst_22 = arith.constant dense<0.000000e+00> : vector<16x32xf32>
    %76 = vector.multi_reduction <add>, %75, %cst_22 [0] : vector<4x16x32xf32> to vector<16x32xf32>
    %c0_23 = arith.constant 0 : index
    %c0_24 = arith.constant 0 : index
    %c0_25 = arith.constant 0 : index
    %77 = vector.load %arg6[%c0_23, %c0_24, %c0_25] : memref<1x16x32xf32, #tpu.memory_space<vmem>>, vector<1x16x32xf32>
    %78 = vector.shape_cast %77 : vector<1x16x32xf32> to vector<16x32xf32>
    %79 = vector.shape_cast %76 : vector<16x32xf32> to vector<1x16x32xf32>
    tpu.vector_store %arg6[%c0_23, %c0_24, %c0_25], %79 {strides = array<i32>} : memref<1x16x32xf32, #tpu.memory_space<vmem>>, vector<1x16x32xf32>,
    %cst_26 = arith.constant dense<0xFF800000> : vector<16x16xf32>
    %80 = vector.multi_reduction <maximumf>, %69, %cst_26 [0] : vector<4x16x16xf32> to vector<16x16xf32>
    %cst_27 = arith.constant dense<0.000000e+00> : vector<16xf32>
    %81 = vector.multi_reduction <add>, %80, %cst_27 [0] : vector<16x16xf32> to vector<16xf32>
    %82 = vector.shape_cast %81 : vector<16xf32> to vector<1x16xf32>
    %cst_28 = arith.constant dense<0.000000e+00> : vector<1x16xf32>
    %83 = tpu.matmul %82, %80, %cst_28 {dimension_numbers = #tpu.dot_dimension_numbers<[1], [0], [0], [1], [0, 0, 1, 1], [], []>} : vector<1x16xf32>, vector<16x16xf32>, vector<1x16xf32> -> vector<1x16xf32>
    %c0_29 = arith.constant 0 : index
    %c0_30 = arith.constant 0 : index
    %c0_31 = arith.constant 0 : index
    %84 = vector.load %arg7[%c0_29, %c0_30, %c0_31] : memref<1x1x16xf32, #tpu.memory_space<vmem>>, vector<1x1x16xf32>
    %85 = vector.shape_cast %84 : vector<1x1x16xf32> to vector<1x16xf32>
    %86 = vector.shape_cast %83 : vector<1x16xf32> to vector<1x1x16xf32>
    tpu.vector_store %arg7[%c0_29, %c0_30, %c0_31], %86 {strides = array<i32>} : memref<1x1x16xf32, #tpu.memory_space<vmem>>, vector<1x1x16xf32>,
    return
  }
  func.func @transform_0(%arg0: i32) -> (i32, i32, i32) {
    %c0_i32 = arith.constant 0 : i32
    %c0_i32_0 = arith.constant 0 : i32
    %c0_i32_1 = arith.constant 0 : i32
    return %arg0, %c0_i32, %c0_i32_0 : i32, i32, i32
  }
  func.func @transform_1(%arg0: i32) -> (i32, i32) {
    %c0_i32 = arith.constant 0 : i32
    %c0_i32_0 = arith.constant 0 : i32
    %c0_i32_1 = arith.constant 0 : i32
    return %c0_i32, %c0_i32_0 : i32, i32
  }
  func.func @transform_2(%arg0: i32) -> (i32, i32) {
    %c0_i32 = arith.constant 0 : i32
    %c0_i32_0 = arith.constant 0 : i32
    %c0_i32_1 = arith.constant 0 : i32
    return %c0_i32, %c0_i32_0 : i32, i32
  }
  func.func @transform_3(%arg0: i32) -> (i32, i32) {
    %c0_i32 = arith.constant 0 : i32
    %c0_i32_0 = arith.constant 0 : i32
    %c0_i32_1 = arith.constant 0 : i32
    return %c0_i32, %c0_i32_0 : i32, i32
  }
  func.func @transform_4(%arg0: i32) -> (i32, i32, i32) {
    %c0_i32 = arith.constant 0 : i32
    %c0_i32_0 = arith.constant 0 : i32
    %c0_i32_1 = arith.constant 0 : i32
    %c0_i32_2 = arith.constant 0 : i32
    return %c0_i32, %c0_i32_0, %c0_i32_1 : i32, i32, i32
  }
  func.func @transform_5(%arg0: i32) -> (i32, i32, i32) {
    %c0_i32 = arith.constant 0 : i32
    %c0_i32_0 = arith.constant 0 : i32
    %c0_i32_1 = arith.constant 0 : i32
    return %arg0, %c0_i32, %c0_i32_0 : i32, i32, i32
  }
  func.func @transform_6(%arg0: i32) -> (i32, i32, i32) {
    %c0_i32 = arith.constant 0 : i32
    %c0_i32_0 = arith.constant 0 : i32
    %c0_i32_1 = arith.constant 0 : i32
    return %arg0, %c0_i32, %c0_i32_0 : i32, i32, i32
  }
}

module attributes {stable_mosaic.version = 11 : i64} {
  func.func @_ff_kernel(%arg0: memref<24x32xf32, #tpu.memory_space<vmem>>, %arg1: memref<1x32xf32, #tpu.memory_space<vmem>>, %arg2: memref<1x32xf32, #tpu.memory_space<vmem>>, %arg3: memref<32x64xbf16, #tpu.memory_space<vmem>>, %arg4: memref<1x64xf32, #tpu.memory_space<vmem>>, %arg5: memref<64x32xbf16, #tpu.memory_space<vmem>>, %arg6: memref<1x32xf32, #tpu.memory_space<vmem>>, %arg7: memref<24x32xf32, #tpu.memory_space<vmem>>) attributes {dimension_semantics = [], scalar_prefetch = 0 : i64, scratch_operands = 0 : i64, tpu.core_type = #tpu.core_type<tc>} {
    %c0 = arith.constant 0 : index
    %c0_0 = arith.constant 0 : index
    %0 = vector.load %arg0[%c0, %c0_0] : memref<24x32xf32, #tpu.memory_space<vmem>>, vector<24x32xf32>
    %c0_1 = arith.constant 0 : index
    %c0_2 = arith.constant 0 : index
    %1 = vector.load %arg1[%c0_1, %c0_2] : memref<1x32xf32, #tpu.memory_space<vmem>>, vector<1x32xf32>
    %c0_3 = arith.constant 0 : index
    %c0_4 = arith.constant 0 : index
    %2 = vector.load %arg2[%c0_3, %c0_4] : memref<1x32xf32, #tpu.memory_space<vmem>>, vector<1x32xf32>
    %cst = arith.constant dense<0.000000e+00> : vector<24xf32>
    %3 = vector.multi_reduction <add>, %0, %cst [1] : vector<24x32xf32> to vector<24xf32>
    %4 = vector.shape_cast %3 : vector<24xf32> to vector<24x1xf32>
    %cst_5 = arith.constant 3.200000e+01 : f32
    %5 = vector.broadcast %cst_5 : f32 to vector<24x1xf32>
    %6 = arith.divf %4, %5 : vector<24x1xf32>
    %7 = vector.broadcast %6 : vector<24x1xf32> to vector<24x32xf32>
    %8 = arith.subf %0, %7 : vector<24x32xf32>
    %9 = arith.mulf %8, %8 : vector<24x32xf32>
    %cst_6 = arith.constant dense<0.000000e+00> : vector<24xf32>
    %10 = vector.multi_reduction <add>, %9, %cst_6 [1] : vector<24x32xf32> to vector<24xf32>
    %11 = vector.shape_cast %10 : vector<24xf32> to vector<24x1xf32>
    %cst_7 = arith.constant 3.200000e+01 : f32
    %12 = vector.broadcast %cst_7 : f32 to vector<24x1xf32>
    %13 = arith.divf %11, %12 : vector<24x1xf32>
    %14 = vector.broadcast %6 : vector<24x1xf32> to vector<24x32xf32>
    %15 = arith.subf %0, %14 : vector<24x32xf32>
    %cst_8 = arith.constant 9.99999974E-6 : f32
    %16 = vector.broadcast %cst_8 : f32 to vector<24x1xf32>
    %17 = arith.addf %13, %16 : vector<24x1xf32>
    %18 = math.rsqrt %17 : vector<24x1xf32>
    %19 = vector.broadcast %18 : vector<24x1xf32> to vector<24x32xf32>
    %20 = arith.mulf %15, %19 : vector<24x32xf32>
    %21 = vector.broadcast %1 : vector<1x32xf32> to vector<24x32xf32>
    %22 = arith.mulf %20, %21 : vector<24x32xf32>
    %23 = vector.broadcast %2 : vector<1x32xf32> to vector<24x32xf32>
    %24 = arith.addf %22, %23 : vector<24x32xf32>
    %25 = arith.truncf %24 : vector<24x32xf32> to vector<24x32xbf16>
    %c0_9 = arith.constant 0 : index
    %c0_10 = arith.constant 0 : index
    %26 = vector.load %arg3[%c0_9, %c0_10] : memref<32x64xbf16, #tpu.memory_space<vmem>>, vector<32x64xbf16>
    %cst_11 = arith.constant dense<0.000000e+00> : vector<24x64xf32>
    %27 = tpu.matmul %25, %26, %cst_11 {dimension_numbers = #tpu.dot_dimension_numbers<[1], [0], [0], [1], [0, 0, 1, 1], [], []>} : vector<24x32xbf16>, vector<32x64xbf16>, vector<24x64xf32> -> vector<24x64xf32>
    %c0_12 = arith.constant 0 : index
    %c0_13 = arith.constant 0 : index
    %28 = vector.load %arg4[%c0_12, %c0_13] : memref<1x64xf32, #tpu.memory_space<vmem>>, vector<1x64xf32>
    %29 = vector.broadcast %28 : vector<1x64xf32> to vector<24x64xf32>
    %30 = arith.addf %27, %29 : vector<24x64xf32>
    %cst_14 = arith.constant 5.000000e-01 : f32
    %31 = vector.broadcast %cst_14 : f32 to vector<24x64xf32>
    %32 = arith.mulf %31, %30 : vector<24x64xf32>
    %cst_15 = arith.constant 0.707106769 : f32
    %33 = vector.broadcast %cst_15 : f32 to vector<24x64xf32>
    %34 = arith.mulf %30, %33 : vector<24x64xf32>
    %cst_16 = arith.constant 0.000000e+00 : f32
    %35 = vector.broadcast %cst_16 : f32 to vector<24x64xf32>
    %36 = arith.cmpf oge, %34, %35 : vector<24x64xf32>
    %cst_17 = arith.constant 1.000000e+00 : f32
    %cst_18 = arith.constant -1.000000e+00 : f32
    %37 = vector.broadcast %cst_17 : f32 to vector<24x64xf32>
    %38 = vector.broadcast %cst_18 : f32 to vector<24x64xf32>
    %39 = arith.select %36, %37, %38 : vector<24x64xi1>, vector<24x64xf32>
    %40 = math.absf %34 : vector<24x64xf32>
    %cst_19 = arith.constant 0.327591091 : f32
    %41 = vector.broadcast %cst_19 : f32 to vector<24x64xf32>
    %42 = arith.mulf %41, %40 : vector<24x64xf32>
    %cst_20 = arith.constant 1.000000e+00 : f32
    %43 = vector.broadcast %cst_20 : f32 to vector<24x64xf32>
    %44 = arith.addf %43, %42 : vector<24x64xf32>
    %cst_21 = arith.constant 1.000000e+00 : f32
    %45 = vector.broadcast %cst_21 : f32 to vector<24x64xf32>
    %46 = arith.divf %45, %44 : vector<24x64xf32>
    %cst_22 = arith.constant 1.06140542 : f32
    %47 = vector.broadcast %cst_22 : f32 to vector<24x64xf32>
    %48 = arith.mulf %47, %46 : vector<24x64xf32>
    %cst_23 = arith.constant -1.45315206 : f32
    %49 = vector.broadcast %cst_23 : f32 to vector<24x64xf32>
    %50 = arith.addf %48, %49 : vector<24x64xf32>
    %51 = arith.mulf %50, %46 : vector<24x64xf32>
    %cst_24 = arith.constant 1.42141378 : f32
    %52 = vector.broadcast %cst_24 : f32 to vector<24x64xf32>
    %53 = arith.addf %51, %52 : vector<24x64xf32>
    %54 = arith.mulf %53, %46 : vector<24x64xf32>
    %cst_25 = arith.constant -0.284496725 : f32
    %55 = vector.broadcast %cst_25 : f32 to vector<24x64xf32>
    %56 = arith.addf %54, %55 : vector<24x64xf32>
    %57 = arith.mulf %56, %46 : vector<24x64xf32>
    %cst_26 = arith.constant 0.254829586 : f32
    %58 = vector.broadcast %cst_26 : f32 to vector<24x64xf32>
    %59 = arith.addf %57, %58 : vector<24x64xf32>
    %60 = arith.mulf %59, %46 : vector<24x64xf32>
    %cst_27 = arith.constant 0.000000e+00 : f32
    %61 = vector.broadcast %cst_27 : f32 to vector<24x64xf32>
    %62 = arith.subf %61, %40 : vector<24x64xf32>
    %63 = arith.mulf %62, %40 : vector<24x64xf32>
    %64 = math.exp %63 : vector<24x64xf32>
    %65 = arith.mulf %60, %64 : vector<24x64xf32>
    %cst_28 = arith.constant 1.000000e+00 : f32
    %66 = vector.broadcast %cst_28 : f32 to vector<24x64xf32>
    %67 = arith.subf %66, %65 : vector<24x64xf32>
    %68 = arith.mulf %39, %67 : vector<24x64xf32>
    %cst_29 = arith.constant 1.000000e+00 : f32
    %69 = vector.broadcast %cst_29 : f32 to vector<24x64xf32>
    %70 = arith.addf %69, %68 : vector<24x64xf32>
    %71 = arith.mulf %32, %70 : vector<24x64xf32>
    %72 = arith.truncf %71 : vector<24x64xf32> to vector<24x64xbf16>
    %c0_30 = arith.constant 0 : index
    %c0_31 = arith.constant 0 : index
    %73 = vector.load %arg5[%c0_30, %c0_31] : memref<64x32xbf16, #tpu.memory_space<vmem>>, vector<64x32xbf16>
    %cst_32 = arith.constant dense<0.000000e+00> : vector<24x32xf32>
    %74 = tpu.matmul %72, %73, %cst_32 {dimension_numbers = #tpu.dot_dimension_numbers<[1], [0], [0], [1], [0, 0, 1, 1], [], []>} : vector<24x64xbf16>, vector<64x32xbf16>, vector<24x32xf32> -> vector<24x32xf32>
    %c0_33 = arith.constant 0 : index
    %c0_34 = arith.constant 0 : index
    %75 = vector.load %arg6[%c0_33, %c0_34] : memref<1x32xf32, #tpu.memory_space<vmem>>, vector<1x32xf32>
    %76 = vector.broadcast %75 : vector<1x32xf32> to vector<24x32xf32>
    %77 = arith.addf %74, %76 : vector<24x32xf32>
    %78 = arith.addf %77, %0 : vector<24x32xf32>
    %c0_35 = arith.constant 0 : index
    %c0_36 = arith.constant 0 : index
    %79 = vector.load %arg7[%c0_35, %c0_36] : memref<24x32xf32, #tpu.memory_space<vmem>>, vector<24x32xf32>
    tpu.vector_store %arg7[%c0_35, %c0_36], %78 {strides = array<i32>} : memref<24x32xf32, #tpu.memory_space<vmem>>, vector<24x32xf32>,
    return
  }
}

module attributes {stable_mosaic.version = 11 : i64} {
  func.func @_attn_kernel(%arg0: i32, %arg1: memref<1x12x32xf32, #tpu.memory_space<vmem>>, %arg2: memref<1x32xf32, #tpu.memory_space<vmem>>, %arg3: memref<1x32xf32, #tpu.memory_space<vmem>>, %arg4: memref<32x96xbf16, #tpu.memory_space<vmem>>, %arg5: memref<4x8x32xbf16, #tpu.memory_space<vmem>>, %arg6: memref<1x12x32xf32, #tpu.memory_space<vmem>>, %arg7: memref<1x1x12xf32, #tpu.memory_space<vmem>>) attributes {dimension_semantics = [#tpu.dimension_semantics<parallel>], iteration_bounds = array<i64: 2>, scalar_prefetch = 0 : i64, scratch_operands = 0 : i64, tpu.core_type = #tpu.core_type<tc>, window_params = [{transform_indices = @transform_0, window_bounds = array<i64: 1, 12, 32>}, {pipeline_mode = #tpu.pipeline_mode<synchronous>, transform_indices = @transform_1, window_bounds = array<i64: 1, 32>}, {pipeline_mode = #tpu.pipeline_mode<synchronous>, transform_indices = @transform_2, window_bounds = array<i64: 1, 32>}, {pipeline_mode = #tpu.pipeline_mode<synchronous>, transform_indices = @transform_3, window_bounds = array<i64: 32, 96>}, {pipeline_mode = #tpu.pipeline_mode<synchronous>, transform_indices = @transform_4, window_bounds = array<i64: 4, 8, 32>}, {transform_indices = @transform_5, window_bounds = array<i64: 1, 12, 32>}, {transform_indices = @transform_6, window_bounds = array<i64: 1, 1, 12>}]} {
    %c0 = arith.constant 0 : index
    %c0_0 = arith.constant 0 : index
    %c0_1 = arith.constant 0 : index
    %0 = vector.load %arg1[%c0, %c0_0, %c0_1] : memref<1x12x32xf32, #tpu.memory_space<vmem>>, vector<1x12x32xf32>
    %1 = vector.shape_cast %0 : vector<1x12x32xf32> to vector<12x32xf32>
    %c0_2 = arith.constant 0 : index
    %c0_3 = arith.constant 0 : index
    %2 = vector.load %arg2[%c0_2, %c0_3] : memref<1x32xf32, #tpu.memory_space<vmem>>, vector<1x32xf32>
    %c0_4 = arith.constant 0 : index
    %c0_5 = arith.constant 0 : index
    %3 = vector.load %arg3[%c0_4, %c0_5] : memref<1x32xf32, #tpu.memory_space<vmem>>, vector<1x32xf32>
    %cst = arith.constant dense<0.000000e+00> : vector<12xf32>
    %4 = vector.multi_reduction <add>, %1, %cst [1] : vector<12x32xf32> to vector<12xf32>
    %5 = vector.shape_cast %4 : vector<12xf32> to vector<12x1xf32>
    %cst_6 = arith.constant 3.200000e+01 : f32
    %6 = vector.broadcast %cst_6 : f32 to vector<12x1xf32>
    %7 = arith.divf %5, %6 : vector<12x1xf32>
    %8 = vector.broadcast %7 : vector<12x1xf32> to vector<12x32xf32>
    %9 = arith.subf %1, %8 : vector<12x32xf32>
    %10 = arith.mulf %9, %9 : vector<12x32xf32>
    %cst_7 = arith.constant dense<0.000000e+00> : vector<12xf32>
    %11 = vector.multi_reduction <add>, %10, %cst_7 [1] : vector<12x32xf32> to vector<12xf32>
    %12 = vector.shape_cast %11 : vector<12xf32> to vector<12x1xf32>
    %cst_8 = arith.constant 3.200000e+01 : f32
    %13 = vector.broadcast %cst_8 : f32 to vector<12x1xf32>
    %14 = arith.divf %12, %13 : vector<12x1xf32>
    %15 = vector.broadcast %7 : vector<12x1xf32> to vector<12x32xf32>
    %16 = arith.subf %1, %15 : vector<12x32xf32>
    %cst_9 = arith.constant 9.99999974E-6 : f32
    %17 = vector.broadcast %cst_9 : f32 to vector<12x1xf32>
    %18 = arith.addf %14, %17 : vector<12x1xf32>
    %19 = math.rsqrt %18 : vector<12x1xf32>
    %20 = vector.broadcast %19 : vector<12x1xf32> to vector<12x32xf32>
    %21 = arith.mulf %16, %20 : vector<12x32xf32>
    %22 = vector.broadcast %2 : vector<1x32xf32> to vector<12x32xf32>
    %23 = arith.mulf %21, %22 : vector<12x32xf32>
    %24 = vector.broadcast %3 : vector<1x32xf32> to vector<12x32xf32>
    %25 = arith.addf %23, %24 : vector<12x32xf32>
    %26 = arith.truncf %25 : vector<12x32xf32> to vector<12x32xbf16>
    %c0_10 = arith.constant 0 : index
    %c0_11 = arith.constant 0 : index
    %27 = vector.load %arg4[%c0_10, %c0_11] : memref<32x96xbf16, #tpu.memory_space<vmem>>, vector<32x96xbf16>
    %cst_12 = arith.constant dense<0.000000e+00> : vector<12x96xf32>
    %28 = tpu.matmul %26, %27, %cst_12 {dimension_numbers = #tpu.dot_dimension_numbers<[1], [0], [0], [1], [0, 0, 1, 1], [], []>} : vector<12x32xbf16>, vector<32x96xbf16>, vector<12x96xf32> -> vector<12x96xf32>
    %29 = vector.extract_strided_slice %28 {offsets = [0, 0], sizes = [12, 8], strides = [1, 1]} : vector<12x96xf32> to vector<12x8xf32>
    %30 = vector.extract_strided_slice %28 {offsets = [0, 8], sizes = [12, 8], strides = [1, 1]} : vector<12x96xf32> to vector<12x8xf32>
    %31 = vector.extract_strided_slice %28 {offsets = [0, 16], sizes = [12, 8], strides = [1, 1]} : vector<12x96xf32> to vector<12x8xf32>
    %32 = vector.extract_strided_slice %28 {offsets = [0, 24], sizes = [12, 8], strides = [1, 1]} : vector<12x96xf32> to vector<12x8xf32>
    %33 = vector.shape_cast %29 : vector<12x8xf32> to vector<1x12x8xf32>
    %34 = vector.shape_cast %30 : vector<12x8xf32> to vector<1x12x8xf32>
    %35 = vector.shape_cast %31 : vector<12x8xf32> to vector<1x12x8xf32>
    %36 = vector.shape_cast %32 : vector<12x8xf32> to vector<1x12x8xf32>
    %37 = tpu.concatenate %33, %34, %35, %36 in 0 : vector<1x12x8xf32>, vector<1x12x8xf32>, vector<1x12x8xf32>, vector<1x12x8xf32> -> vector<4x12x8xf32>
    %38 = vector.extract_strided_slice %28 {offsets = [0, 32], sizes = [12, 8], strides = [1, 1]} : vector<12x96xf32> to vector<12x8xf32>
    %39 = vector.extract_strided_slice %28 {offsets = [0, 40], sizes = [12, 8], strides = [1, 1]} : vector<12x96xf32> to vector<12x8xf32>
    %40 = vector.extract_strided_slice %28 {offsets = [0, 48], sizes = [12, 8], strides = [1, 1]} : vector<12x96xf32> to vector<12x8xf32>
    %41 = vector.extract_strided_slice %28 {offsets = [0, 56], sizes = [12, 8], strides = [1, 1]} : vector<12x96xf32> to vector<12x8xf32>
    %42 = vector.shape_cast %38 : vector<12x8xf32> to vector<1x12x8xf32>
    %43 = vector.shape_cast %39 : vector<12x8xf32> to vector<1x12x8xf32>
    %44 = vector.shape_cast %40 : vector<12x8xf32> to vector<1x12x8xf32>
    %45 = vector.shape_cast %41 : vector<12x8xf32> to vector<1x12x8xf32>
    %46 = tpu.concatenate %42, %43, %44, %45 in 0 : vector<1x12x8xf32>, vector<1x12x8xf32>, vector<1x12x8xf32>, vector<1x12x8xf32> -> vector<4x12x8xf32>
    %47 = vector.extract_strided_slice %28 {offsets = [0, 64], sizes = [12, 8], strides = [1, 1]} : vector<12x96xf32> to vector<12x8xf32>
    %48 = vector.extract_strided_slice %28 {offsets = [0, 72], sizes = [12, 8], strides = [1, 1]} : vector<12x96xf32> to vector<12x8xf32>
    %49 = vector.extract_strided_slice %28 {offsets = [0, 80], sizes = [12, 8], strides = [1, 1]} : vector<12x96xf32> to vector<12x8xf32>
    %50 = vector.extract_strided_slice %28 {offsets = [0, 88], sizes = [12, 8], strides = [1, 1]} : vector<12x96xf32> to vector<12x8xf32>
    %51 = vector.shape_cast %47 : vector<12x8xf32> to vector<1x12x8xf32>
    %52 = vector.shape_cast %48 : vector<12x8xf32> to vector<1x12x8xf32>
    %53 = vector.shape_cast %49 : vector<12x8xf32> to vector<1x12x8xf32>
    %54 = vector.shape_cast %50 : vector<12x8xf32> to vector<1x12x8xf32>
    %55 = tpu.concatenate %51, %52, %53, %54 in 0 : vector<1x12x8xf32>, vector<1x12x8xf32>, vector<1x12x8xf32>, vector<1x12x8xf32> -> vector<4x12x8xf32>
    %56 = arith.truncf %37 : vector<4x12x8xf32> to vector<4x12x8xbf16>
    %57 = arith.truncf %46 : vector<4x12x8xf32> to vector<4x12x8xbf16>
    "tpu.trace_start"() <{level = 10 : i32, message = "hnd,hmd->hnm"}> : () -> ()
    %cst_13 = arith.constant dense<0.000000e+00> : vector<4x12x12xf32>
    %58 = tpu.matmul %56, %57, %cst_13 {dimension_numbers = #tpu.dot_dimension_numbers<[2], [2], [1], [1], [0, 0, 0, 1, 1, 1], [0], [0]>} : vector<4x12x8xbf16>, vector<4x12x8xbf16>, vector<4x12x12xf32> -> vector<4x12x12xf32>
    "tpu.trace_stop"() : () -> ()
    %cst_14 = arith.constant 0.353553385 : f32
    %59 = vector.broadcast %cst_14 : f32 to vector<4x12x12xf32>
    %60 = arith.mulf %58, %59 : vector<4x12x12xf32>
    %cst_15 = arith.constant dense<0xFF800000> : vector<4x12xf32>
    %61 = vector.multi_reduction <maximumf>, %60, %cst_15 [2] : vector<4x12x12xf32> to vector<4x12xf32>
    %62 = vector.shape_cast %61 : vector<4x12xf32> to vector<4x12x1xf32>
    %63 = vector.broadcast %62 : vector<4x12x1xf32> to vector<4x12x12xf32>
    %64 = arith.subf %60, %63 : vector<4x12x12xf32>
    %65 = math.exp %64 : vector<4x12x12xf32>
    %cst_16 = arith.constant dense<0.000000e+00> : vector<4x12xf32>
    %66 = vector.multi_reduction <add>, %65, %cst_16 [2] : vector<4x12x12xf32> to vector<4x12xf32>
    %67 = vector.shape_cast %66 : vector<4x12xf32> to vector<4x12x1xf32>
    %68 = vector.broadcast %67 : vector<4x12x1xf32> to vector<4x12x12xf32>
    %69 = arith.divf %65, %68 : vector<4x12x12xf32>
    %70 = arith.truncf %69 : vector<4x12x12xf32> to vector<4x12x12xbf16>
    %71 = arith.truncf %55 : vector<4x12x8xf32> to vector<4x12x8xbf16>
    "tpu.trace_start"() <{level = 10 : i32, message = "hnm,hmd->hnd"}> : () -> ()
    %cst_17 = arith.constant dense<0.000000e+00> : vector<4x12x8xf32>
    %72 = tpu.matmul %70, %71, %cst_17 {dimension_numbers = #tpu.dot_dimension_numbers<[2], [1], [1], [2], [0, 0, 0, 1, 1, 2], [0], [0]>} : vector<4x12x12xbf16>, vector<4x12x8xbf16>, vector<4x12x8xf32> -> vector<4x12x8xf32>
    "tpu.trace_stop"() : () -> ()
    %73 = arith.truncf %72 : vector<4x12x8xf32> to vector<4x12x8xbf16>
    %c0_18 = arith.constant 0 : index
    %c0_19 = arith.constant 0 : index
    %c0_20 = arith.constant 0 : index
    %74 = vector.load %arg5[%c0_18, %c0_19, %c0_20] : memref<4x8x32xbf16, #tpu.memory_space<vmem>>, vector<4x8x32xbf16>
    "tpu.trace_start"() <{level = 10 : i32, message = "hnd,hde->hne"}> : () -> ()
    %cst_21 = arith.constant dense<0.000000e+00> : vector<4x12x32xf32>
    %75 = tpu.matmul %73, %74, %cst_21 {dimension_numbers = #tpu.dot_dimension_numbers<[2], [1], [1], [2], [0, 0, 0, 1, 1, 2], [0], [0]>} : vector<4x12x8xbf16>, vector<4x8x32xbf16>, vector<4x12x32xf32> -> vector<4x12x32xf32>
    "tpu.trace_stop"() : () -> ()
    %cst_22 = arith.constant dense<0.000000e+00> : vector<12x32xf32>
    %76 = vector.multi_reduction <add>, %75, %cst_22 [0] : vector<4x12x32xf32> to vector<12x32xf32>
    %c0_23 = arith.constant 0 : index
    %c0_24 = arith.constant 0 : index
    %c0_25 = arith.constant 0 : index
    %77 = vector.load %arg6[%c0_23, %c0_24, %c0_25] : memref<1x12x32xf32, #tpu.memory_space<vmem>>, vector<1x12x32xf32>
    %78 = vector.shape_cast %77 : vector<1x12x32xf32> to vector<12x32xf32>
    %79 = vector.shape_cast %76 : vector<12x32xf32> to vector<1x12x32xf32>
    tpu.vector_store %arg6[%c0_23, %c0_24, %c0_25], %79 {strides = array<i32>} : memref<1x12x32xf32, #tpu.memory_space<vmem>>, vector<1x12x32xf32>,
    %cst_26 = arith.constant dense<0xFF800000> : vector<12x12xf32>
    %80 = vector.multi_reduction <maximumf>, %69, %cst_26 [0] : vector<4x12x12xf32> to vector<12x12xf32>
    %cst_27 = arith.constant dense<0.000000e+00> : vector<12xf32>
    %81 = vector.multi_reduction <add>, %80, %cst_27 [0] : vector<12x12xf32> to vector<12xf32>
    %82 = vector.shape_cast %81 : vector<12xf32> to vector<1x12xf32>
    %cst_28 = arith.constant dense<0.000000e+00> : vector<1x12xf32>
    %83 = tpu.matmul %82, %80, %cst_28 {dimension_numbers = #tpu.dot_dimension_numbers<[1], [0], [0], [1], [0, 0, 1, 1], [], []>} : vector<1x12xf32>, vector<12x12xf32>, vector<1x12xf32> -> vector<1x12xf32>
    %c0_29 = arith.constant 0 : index
    %c0_30 = arith.constant 0 : index
    %c0_31 = arith.constant 0 : index
    %84 = vector.load %arg7[%c0_29, %c0_30, %c0_31] : memref<1x1x12xf32, #tpu.memory_space<vmem>>, vector<1x1x12xf32>
    %85 = vector.shape_cast %84 : vector<1x1x12xf32> to vector<1x12xf32>
    %86 = vector.shape_cast %83 : vector<1x12xf32> to vector<1x1x12xf32>
    tpu.vector_store %arg7[%c0_29, %c0_30, %c0_31], %86 {strides = array<i32>} : memref<1x1x12xf32, #tpu.memory_space<vmem>>, vector<1x1x12xf32>,
    return
  }
  func.func @transform_0(%arg0: i32) -> (i32, i32, i32) {
    %c0_i32 = arith.constant 0 : i32
    %c0_i32_0 = arith.constant 0 : i32
    %c0_i32_1 = arith.constant 0 : i32
    return %arg0, %c0_i32, %c0_i32_0 : i32, i32, i32
  }
  func.func @transform_1(%arg0: i32) -> (i32, i32) {
    %c0_i32 = arith.constant 0 : i32
    %c0_i32_0 = arith.constant 0 : i32
    %c0_i32_1 = arith.constant 0 : i32
    return %c0_i32, %c0_i32_0 : i32, i32
  }
  func.func @transform_2(%arg0: i32) -> (i32, i32) {
    %c0_i32 = arith.constant 0 : i32
    %c0_i32_0 = arith.constant 0 : i32
    %c0_i32_1 = arith.constant 0 : i32
    return %c0_i32, %c0_i32_0 : i32, i32
  }
  func.func @transform_3(%arg0: i32) -> (i32, i32) {
    %c0_i32 = arith.constant 0 : i32
    %c0_i32_0 = arith.constant 0 : i32
    %c0_i32_1 = arith.constant 0 : i32
    return %c0_i32, %c0_i32_0 : i32, i32
  }
  func.func @transform_4(%arg0: i32) -> (i32, i32, i32) {
    %c0_i32 = arith.constant 0 : i32
    %c0_i32_0 = arith.constant 0 : i32
    %c0_i32_1 = arith.constant 0 : i32
    %c0_i32_2 = arith.constant 0 : i32
    return %c0_i32, %c0_i32_0, %c0_i32_1 : i32, i32, i32
  }
  func.func @transform_5(%arg0: i32) -> (i32, i32, i32) {
    %c0_i32 = arith.constant 0 : i32
    %c0_i32_0 = arith.constant 0 : i32
    %c0_i32_1 = arith.constant 0 : i32
    return %arg0, %c0_i32, %c0_i32_0 : i32, i32, i32
  }
  func.func @transform_6(%arg0: i32) -> (i32, i32, i32) {
    %c0_i32 = arith.constant 0 : i32
    %c0_i32_0 = arith.constant 0 : i32
    %c0_i32_1 = arith.constant 0 : i32
    return %arg0, %c0_i32, %c0_i32_0 : i32, i32, i32
  }
}

module attributes {stable_mosaic.version = 11 : i64} {
  func.func @_ln_kernel(%arg0: memref<16x32xf32, #tpu.memory_space<vmem>>, %arg1: memref<1x32xf32, #tpu.memory_space<vmem>>, %arg2: memref<1x32xf32, #tpu.memory_space<vmem>>, %arg3: memref<16x32xf32, #tpu.memory_space<vmem>>) attributes {dimension_semantics = [], scalar_prefetch = 0 : i64, scratch_operands = 0 : i64, tpu.core_type = #tpu.core_type<tc>} {
    %c0 = arith.constant 0 : index
    %c0_0 = arith.constant 0 : index
    %0 = vector.load %arg0[%c0, %c0_0] : memref<16x32xf32, #tpu.memory_space<vmem>>, vector<16x32xf32>
    %c0_1 = arith.constant 0 : index
    %c0_2 = arith.constant 0 : index
    %1 = vector.load %arg1[%c0_1, %c0_2] : memref<1x32xf32, #tpu.memory_space<vmem>>, vector<1x32xf32>
    %c0_3 = arith.constant 0 : index
    %c0_4 = arith.constant 0 : index
    %2 = vector.load %arg2[%c0_3, %c0_4] : memref<1x32xf32, #tpu.memory_space<vmem>>, vector<1x32xf32>
    %cst = arith.constant dense<0.000000e+00> : vector<16xf32>
    %3 = vector.multi_reduction <add>, %0, %cst [1] : vector<16x32xf32> to vector<16xf32>
    %4 = vector.shape_cast %3 : vector<16xf32> to vector<16x1xf32>
    %cst_5 = arith.constant 3.200000e+01 : f32
    %5 = vector.broadcast %cst_5 : f32 to vector<16x1xf32>
    %6 = arith.divf %4, %5 : vector<16x1xf32>
    %7 = vector.broadcast %6 : vector<16x1xf32> to vector<16x32xf32>
    %8 = arith.subf %0, %7 : vector<16x32xf32>
    %9 = arith.mulf %8, %8 : vector<16x32xf32>
    %cst_6 = arith.constant dense<0.000000e+00> : vector<16xf32>
    %10 = vector.multi_reduction <add>, %9, %cst_6 [1] : vector<16x32xf32> to vector<16xf32>
    %11 = vector.shape_cast %10 : vector<16xf32> to vector<16x1xf32>
    %cst_7 = arith.constant 3.200000e+01 : f32
    %12 = vector.broadcast %cst_7 : f32 to vector<16x1xf32>
    %13 = arith.divf %11, %12 : vector<16x1xf32>
    %14 = vector.broadcast %6 : vector<16x1xf32> to vector<16x32xf32>
    %15 = arith.subf %0, %14 : vector<16x32xf32>
    %cst_8 = arith.constant 9.99999974E-6 : f32
    %16 = vector.broadcast %cst_8 : f32 to vector<16x1xf32>
    %17 = arith.addf %13, %16 : vector<16x1xf32>
    %18 = math.rsqrt %17 : vector<16x1xf32>
    %19 = vector.broadcast %18 : vector<16x1xf32> to vector<16x32xf32>
    %20 = arith.mulf %15, %19 : vector<16x32xf32>
    %21 = vector.broadcast %1 : vector<1x32xf32> to vector<16x32xf32>
    %22 = arith.mulf %20, %21 : vector<16x32xf32>
    %23 = vector.broadcast %2 : vector<1x32xf32> to vector<16x32xf32>
    %24 = arith.addf %22, %23 : vector<16x32xf32>
    %c0_9 = arith.constant 0 : index
    %c0_10 = arith.constant 0 : index
    %25 = vector.load %arg3[%c0_9, %c0_10] : memref<16x32xf32, #tpu.memory_space<vmem>>, vector<16x32xf32>
    tpu.vector_store %arg3[%c0_9, %c0_10], %24 {strides = array<i32>} : memref<16x32xf32, #tpu.memory_space<vmem>>, vector<16x32xf32>,
    return
  }
}

module attributes {stable_mosaic.version = 11 : i64} {
  func.func @_ff_kernel(%arg0: memref<16x32xf32, #tpu.memory_space<vmem>>, %arg1: memref<1x32xf32, #tpu.memory_space<vmem>>, %arg2: memref<1x32xf32, #tpu.memory_space<vmem>>, %arg3: memref<32x64xbf16, #tpu.memory_space<vmem>>, %arg4: memref<1x64xf32, #tpu.memory_space<vmem>>, %arg5: memref<64x32xbf16, #tpu.memory_space<vmem>>, %arg6: memref<1x32xf32, #tpu.memory_space<vmem>>, %arg7: memref<16x32xf32, #tpu.memory_space<vmem>>) attributes {dimension_semantics = [], scalar_prefetch = 0 : i64, scratch_operands = 0 : i64, tpu.core_type = #tpu.core_type<tc>} {
    %c0 = arith.constant 0 : index
    %c0_0 = arith.constant 0 : index
    %0 = vector.load %arg0[%c0, %c0_0] : memref<16x32xf32, #tpu.memory_space<vmem>>, vector<16x32xf32>
    %c0_1 = arith.constant 0 : index
    %c0_2 = arith.constant 0 : index
    %1 = vector.load %arg1[%c0_1, %c0_2] : memref<1x32xf32, #tpu.memory_space<vmem>>, vector<1x32xf32>
    %c0_3 = arith.constant 0 : index
    %c0_4 = arith.constant 0 : index
    %2 = vector.load %arg2[%c0_3, %c0_4] : memref<1x32xf32, #tpu.memory_space<vmem>>, vector<1x32xf32>
    %cst = arith.constant dense<0.000000e+00> : vector<16xf32>
    %3 = vector.multi_reduction <add>, %0, %cst [1] : vector<16x32xf32> to vector<16xf32>
    %4 = vector.shape_cast %3 : vector<16xf32> to vector<16x1xf32>
    %cst_5 = arith.constant 3.200000e+01 : f32
    %5 = vector.broadcast %cst_5 : f32 to vector<16x1xf32>
    %6 = arith.divf %4, %5 : vector<16x1xf32>
    %7 = vector.broadcast %6 : vector<16x1xf32> to vector<16x32xf32>
    %8 = arith.subf %0, %7 : vector<16x32xf32>
    %9 = arith.mulf %8, %8 : vector<16x32xf32>
    %cst_6 = arith.constant dense<0.000000e+00> : vector<16xf32>
    %10 = vector.multi_reduction <add>, %9, %cst_6 [1] : vector<16x32xf32> to vector<16xf32>
    %11 = vector.shape_cast %10 : vector<16xf32> to vector<16x1xf32>
    %cst_7 = arith.constant 3.200000e+01 : f32
    %12 = vector.broadcast %cst_7 : f32 to vector<16x1xf32>
    %13 = arith.divf %11, %12 : vector<16x1xf32>
    %14 = vector.broadcast %6 : vector<16x1xf32> to vector<16x32xf32>
    %15 = arith.subf %0, %14 : vector<16x32xf32>
    %cst_8 = arith.constant 9.99999974E-6 : f32
    %16 = vector.broadcast %cst_8 : f32 to vector<16x1xf32>
    %17 = arith.addf %13, %16 : vector<16x1xf32>
    %18 = math.rsqrt %17 : vector<16x1xf32>
    %19 = vector.broadcast %18 : vector<16x1xf32> to vector<16x32xf32>
    %20 = arith.mulf %15, %19 : vector<16x32xf32>
    %21 = vector.broadcast %1 : vector<1x32xf32> to vector<16x32xf32>
    %22 = arith.mulf %20, %21 : vector<16x32xf32>
    %23 = vector.broadcast %2 : vector<1x32xf32> to vector<16x32xf32>
    %24 = arith.addf %22, %23 : vector<16x32xf32>
    %25 = arith.truncf %24 : vector<16x32xf32> to vector<16x32xbf16>
    %c0_9 = arith.constant 0 : index
    %c0_10 = arith.constant 0 : index
    %26 = vector.load %arg3[%c0_9, %c0_10] : memref<32x64xbf16, #tpu.memory_space<vmem>>, vector<32x64xbf16>
    %cst_11 = arith.constant dense<0.000000e+00> : vector<16x64xf32>
    %27 = tpu.matmul %25, %26, %cst_11 {dimension_numbers = #tpu.dot_dimension_numbers<[1], [0], [0], [1], [0, 0, 1, 1], [], []>} : vector<16x32xbf16>, vector<32x64xbf16>, vector<16x64xf32> -> vector<16x64xf32>
    %c0_12 = arith.constant 0 : index
    %c0_13 = arith.constant 0 : index
    %28 = vector.load %arg4[%c0_12, %c0_13] : memref<1x64xf32, #tpu.memory_space<vmem>>, vector<1x64xf32>
    %29 = vector.broadcast %28 : vector<1x64xf32> to vector<16x64xf32>
    %30 = arith.addf %27, %29 : vector<16x64xf32>
    %cst_14 = arith.constant 5.000000e-01 : f32
    %31 = vector.broadcast %cst_14 : f32 to vector<16x64xf32>
    %32 = arith.mulf %31, %30 : vector<16x64xf32>
    %cst_15 = arith.constant 0.707106769 : f32
    %33 = vector.broadcast %cst_15 : f32 to vector<16x64xf32>
    %34 = arith.mulf %30, %33 : vector<16x64xf32>
    %cst_16 = arith.constant 0.000000e+00 : f32
    %35 = vector.broadcast %cst_16 : f32 to vector<16x64xf32>
    %36 = arith.cmpf oge, %34, %35 : vector<16x64xf32>
    %cst_17 = arith.constant 1.000000e+00 : f32
    %cst_18 = arith.constant -1.000000e+00 : f32
    %37 = vector.broadcast %cst_17 : f32 to vector<16x64xf32>
    %38 = vector.broadcast %cst_18 : f32 to vector<16x64xf32>
    %39 = arith.select %36, %37, %38 : vector<16x64xi1>, vector<16x64xf32>
    %40 = math.absf %34 : vector<16x64xf32>
    %cst_19 = arith.constant 0.327591091 : f32
    %41 = vector.broadcast %cst_19 : f32 to vector<16x64xf32>
    %42 = arith.mulf %41, %40 : vector<16x64xf32>
    %cst_20 = arith.constant 1.000000e+00 : f32
    %43 = vector.broadcast %cst_20 : f32 to vector<16x64xf32>
    %44 = arith.addf %43, %42 : vector<16x64xf32>
    %cst_21 = arith.constant 1.000000e+00 : f32
    %45 = vector.broadcast %cst_21 : f32 to vector<16x64xf32>
    %46 = arith.divf %45, %44 : vector<16x64xf32>
    %cst_22 = arith.constant 1.06140542 : f32
    %47 = vector.broadcast %cst_22 : f32 to vector<16x64xf32>
    %48 = arith.mulf %47, %46 : vector<16x64xf32>
    %cst_23 = arith.constant -1.45315206 : f32
    %49 = vector.broadcast %cst_23 : f32 to vector<16x64xf32>
    %50 = arith.addf %48, %49 : vector<16x64xf32>
    %51 = arith.mulf %50, %46 : vector<16x64xf32>
    %cst_24 = arith.constant 1.42141378 : f32
    %52 = vector.broadcast %cst_24 : f32 to vector<16x64xf32>
    %53 = arith.addf %51, %52 : vector<16x64xf32>
    %54 = arith.mulf %53, %46 : vector<16x64xf32>
    %cst_25 = arith.constant -0.284496725 : f32
    %55 = vector.broadcast %cst_25 : f32 to vector<16x64xf32>
    %56 = arith.addf %54, %55 : vector<16x64xf32>
    %57 = arith.mulf %56, %46 : vector<16x64xf32>
    %cst_26 = arith.constant 0.254829586 : f32
    %58 = vector.broadcast %cst_26 : f32 to vector<16x64xf32>
    %59 = arith.addf %57, %58 : vector<16x64xf32>
    %60 = arith.mulf %59, %46 : vector<16x64xf32>
    %cst_27 = arith.constant 0.000000e+00 : f32
    %61 = vector.broadcast %cst_27 : f32 to vector<16x64xf32>
    %62 = arith.subf %61, %40 : vector<16x64xf32>
    %63 = arith.mulf %62, %40 : vector<16x64xf32>
    %64 = math.exp %63 : vector<16x64xf32>
    %65 = arith.mulf %60, %64 : vector<16x64xf32>
    %cst_28 = arith.constant 1.000000e+00 : f32
    %66 = vector.broadcast %cst_28 : f32 to vector<16x64xf32>
    %67 = arith.subf %66, %65 : vector<16x64xf32>
    %68 = arith.mulf %39, %67 : vector<16x64xf32>
    %cst_29 = arith.constant 1.000000e+00 : f32
    %69 = vector.broadcast %cst_29 : f32 to vector<16x64xf32>
    %70 = arith.addf %69, %68 : vector<16x64xf32>
    %71 = arith.mulf %32, %70 : vector<16x64xf32>
    %72 = arith.truncf %71 : vector<16x64xf32> to vector<16x64xbf16>
    %c0_30 = arith.constant 0 : index
    %c0_31 = arith.constant 0 : index
    %73 = vector.load %arg5[%c0_30, %c0_31] : memref<64x32xbf16, #tpu.memory_space<vmem>>, vector<64x32xbf16>
    %cst_32 = arith.constant dense<0.000000e+00> : vector<16x32xf32>
    %74 = tpu.matmul %72, %73, %cst_32 {dimension_numbers = #tpu.dot_dimension_numbers<[1], [0], [0], [1], [0, 0, 1, 1], [], []>} : vector<16x64xbf16>, vector<64x32xbf16>, vector<16x32xf32> -> vector<16x32xf32>
    %c0_33 = arith.constant 0 : index
    %c0_34 = arith.constant 0 : index
    %75 = vector.load %arg6[%c0_33, %c0_34] : memref<1x32xf32, #tpu.memory_space<vmem>>, vector<1x32xf32>
    %76 = vector.broadcast %75 : vector<1x32xf32> to vector<16x32xf32>
    %77 = arith.addf %74, %76 : vector<16x32xf32>
    %78 = arith.addf %77, %0 : vector<16x32xf32>
    %c0_35 = arith.constant 0 : index
    %c0_36 = arith.constant 0 : index
    %79 = vector.load %arg7[%c0_35, %c0_36] : memref<16x32xf32, #tpu.memory_space<vmem>>, vector<16x32xf32>
    tpu.vector_store %arg7[%c0_35, %c0_36], %78 {strides = array<i32>} : memref<16x32xf32, #tpu.memory_space<vmem>>, vector<16x32xf32>,
    return
  }
}

</mosaic_0001>

<llo_original>
// kernel: _forward_impl.5
$region0: #{_forward_impl.5}
  #allocation0 [shape = 'u32[]', space=smem, size = 0x4, offset = 0x4, fixed_abs, tag = 'smem constant byte address 0x4 - core index']
  #allocation1 [shape = 'u32[144,128]{1,0:T(1,128)}', space=vmem, size = 0x12000, scoped, tag = 'internal scratch']
  %s0 = inlined_call_operand.vmem [shape: f32[2,16,32], index: 0, kind: input, shape index: {}]
  %s1 = inlined_call_operand.vmem [shape: f32[1,32], index: 1, kind: input, shape index: {}]
  %s2 = inlined_call_operand.vmem [shape: f32[1,32], index: 2, kind: input, shape index: {}]
  %s3 = inlined_call_operand.hbm [shape: bf16[32,96], index: 3, kind: input, shape index: {}]
  %s4 = inlined_call_operand.hbm [shape: bf16[4,8,32], index: 4, kind: input, shape index: {}]
  %s5 = inlined_call_operand.vmem [shape: f32[2,16,32], index: 5, kind: output, shape index: {0}]
  %s6 = inlined_call_operand.vmem [shape: f32[2,1,16], index: 6, kind: output, shape index: {1}]
  %7 = xla_tuple %s5, %s6
  %s8 = sld [smem:[#allocation0]]
  $region69: #{_forward_impl.5} parent=0
    _
  %s10 = ssub.s32 1, %s8
  %s11 = scalar_select 0, %s10, %s8
  $region1: #{_forward_impl.5} parent=0
    #allocation2 [shape = 'u8[8192]{0}', space=vmem, size = 0x2000, scoped, tag = 'input window, operand 3, single buffered']
    #allocation3 [shape = 's32[2]{0}', space=sflag, size = 0x8, scoped, tag = 'scoped memory for _forward_impl.5']
    #allocation4 [shape = 'u8[8192]{0}', space=vmem, size = 0x2000, scoped, tag = 'input window, operand 4, single buffered']
    #allocation5 [shape = 's32[1]{0}', space=sflag, size = 0x4, scoped, tag = 'scoped memory for _forward_impl.5']
    %12 = vsyncpa [#allocation3], 0
    %13 = vsyncpa [#allocation5], 0
    loop: start=0, step=1, limit=4
    $region2: #{_forward_impl.5} parent=1 // loop_pre_header
      _
    $region3: #{_forward_impl.5} parent=1 // loop_header
      %s15 = sphi 0, %s19
      %p16 = scmp.ge.s32.totalorder %s15, 4
      %s25 = sphi 0, %s27
      %s28 = sphi 0, %s25
      %s29 = sphi 0, %s28
      %s45 = sphi 0, %s29
      %s49 = sphi 0, %s49
      %s51 = sphi 0, %s49
      %s52 = sphi 0, %s51
      %s66 = sphi 0, %s52
      %s70 = sphi 0, %s70
      %s72 = sphi 0, %s70
      %s73 = sphi 0, %s72
      %s87 = sphi 0, %s73
      %s91 = sphi 0, %s91
      %s93 = sphi 0, %s91
      %s94 = sphi 0, %s93
      %s108 = sphi 0, %s94
      %s112 = sphi 0, %s112
      %s114 = sphi 0, %s112
      %s115 = sphi 0, %s114
      %s129 = sphi 0, %s115
      %s135 = sphi 0, %s137
      %s138 = sphi 0, %s135
      %s139 = sphi 0, %s138
      %s155 = sphi 0, %s139
      %s161 = sphi 0, %s163
      %s164 = sphi 0, %s161
      %s165 = sphi 0, %s164
      %s181 = sphi 0, %s165
    $region4: #{_forward_impl.5} parent=1 // loop_header_branch
      %18 = sbr.rel (%p16) target = $region8
    $region5: #{_forward_impl.5} parent=1 // loop_body
      %s20 = ssub.s32 %s15, 1
      %s21 = ssub.s32 %s15, 2
      %s22 = sadd.s32 %s15, 1
      %s23 = ssub.s32 %s15, %s22
      %p24 = scmp.eq.s32.totalorder %s23, 0
      %s26 = sadd.s32 %s25, 1
      %s27 = scalar_select %p24, %s25, %s26
      %p30 = pneg %p24
      %p31 = scmp.eq.s32.totalorder %s15, 1
      %p32 = por %p30, %p31
      %p33 = scmp.ne.s32.totalorder %s25, %s28
      %p34 = scmp.eq.s32.totalorder %s15, 0
      %p35 = por %p33, %p34
      %p36 = scmp.ne.s32.totalorder %s25, %s28
      %p37 = scmp.eq.s32.totalorder %s20, 1
      %p38 = por %p36, %p37
      %p39 = scmp.ne.s32.totalorder %s28, %s29
      %p40 = scmp.eq.s32.totalorder %s20, 0
      %p41 = por %p39, %p40
      %p42 = scmp.ne.s32.totalorder %s28, %s29
      %p43 = scmp.eq.s32.totalorder %s21, 1
      %p44 = por %p42, %p43
      %p46 = scmp.ne.s32.totalorder %s29, %s45
      %p47 = scmp.eq.s32.totalorder %s21, 0
      %p48 = por %p46, %p47
      %s50 = sadd.s32 %s49, 1
      %p53 = scmp.eq.s32.totalorder %s15, 1
      %p54 = scmp.ne.s32.totalorder %s49, %s51
      %p55 = scmp.eq.s32.totalorder %s15, 0
      %p56 = por %p54, %p55
      %p57 = scmp.ne.s32.totalorder %s49, %s51
      %p58 = scmp.eq.s32.totalorder %s20, 1
      %p59 = por %p57, %p58
      %p60 = scmp.ne.s32.totalorder %s51, %s52
      %p61 = scmp.eq.s32.totalorder %s20, 0
      %p62 = por %p60, %p61
      %p63 = scmp.ne.s32.totalorder %s51, %s52
      %p64 = scmp.eq.s32.totalorder %s21, 1
      %p65 = por %p63, %p64
      %p67 = scmp.ne.s32.totalorder %s52, %s66
      %p68 = scmp.eq.s32.totalorder %s21, 0
      %p69 = por %p67, %p68
      %s71 = sadd.s32 %s70, 1
      %p74 = scmp.eq.s32.totalorder %s15, 1
      %p75 = scmp.ne.s32.totalorder %s70, %s72
      %p76 = scmp.eq.s32.totalorder %s15, 0
      %p77 = por %p75, %p76
      %p78 = scmp.ne.s32.totalorder %s70, %s72
      %p79 = scmp.eq.s32.totalorder %s20, 1
      %p80 = por %p78, %p79
      %p81 = scmp.ne.s32.totalorder %s72, %s73
      %p82 = scmp.eq.s32.totalorder %s20, 0
      %p83 = por %p81, %p82
      %p84 = scmp.ne.s32.totalorder %s72, %s73
      %p85 = scmp.eq.s32.totalorder %s21, 1
      %p86 = por %p84, %p85
      %p88 = scmp.ne.s32.totalorder %s73, %s87
      %p89 = scmp.eq.s32.totalorder %s21, 0
      %p90 = por %p88, %p89
      %s92 = sadd.s32 %s91, 1
      %p95 = scmp.eq.s32.totalorder %s15, 1
      %p96 = scmp.ne.s32.totalorder %s91, %s93
      %p97 = scmp.eq.s32.totalorder %s15, 0
      %p98 = por %p96, %p97
      %p99 = scmp.ne.s32.totalorder %s91, %s93
      %p100 = scmp.eq.s32.totalorder %s20, 1
      %p101 = por %p99, %p100
      %p102 = scmp.ne.s32.totalorder %s93, %s94
      %p103 = scmp.eq.s32.totalorder %s20, 0
      %p104 = por %p102, %p103
      %p105 = scmp.ne.s32.totalorder %s93, %s94
      %p106 = scmp.eq.s32.totalorder %s21, 1
      %p107 = por %p105, %p106
      %p109 = scmp.ne.s32.totalorder %s94, %s108
      %p110 = scmp.eq.s32.totalorder %s21, 0
      %p111 = por %p109, %p110
      %s113 = sadd.s32 %s112, 1
      %p116 = scmp.eq.s32.totalorder %s15, 1
      %p117 = scmp.ne.s32.totalorder %s112, %s114
      %p118 = scmp.eq.s32.totalorder %s15, 0
      %p119 = por %p117, %p118
      %p120 = scmp.ne.s32.totalorder %s112, %s114
      %p121 = scmp.eq.s32.totalorder %s20, 1
      %p122 = por %p120, %p121
      %p123 = scmp.ne.s32.totalorder %s114, %s115
      %p124 = scmp.eq.s32.totalorder %s20, 0
      %p125 = por %p123, %p124
      %p126 = scmp.ne.s32.totalorder %s114, %s115
      %p127 = scmp.eq.s32.totalorder %s21, 1
      %p128 = por %p126, %p127
      %p130 = scmp.ne.s32.totalorder %s115, %s129
      %p131 = scmp.eq.s32.totalorder %s21, 0
      %p132 = por %p130, %p131
      %s133 = ssub.s32 %s15, %s22
      %p134 = scmp.eq.s32.totalorder %s133, 0
      %s136 = sadd.s32 %s135, 1
      %s137 = scalar_select %p134, %s135, %s136
      %p140 = pneg %p134
      %p141 = scmp.eq.s32.totalorder %s15, 1
      %p142 = por %p140, %p141
      %p143 = scmp.ne.s32.totalorder %s135, %s138
      %p144 = scmp.eq.s32.totalorder %s15, 0
      %p145 = por %p143, %p144
      %p146 = scmp.ne.s32.totalorder %s135, %s138
      %p147 = scmp.eq.s32.totalorder %s20, 1
      %p148 = por %p146, %p147
      %p149 = scmp.ne.s32.totalorder %s138, %s139
      %p150 = scmp.eq.s32.totalorder %s20, 0
      %p151 = por %p149, %p150
      %p152 = scmp.ne.s32.totalorder %s138, %s139
      %p153 = scmp.eq.s32.totalorder %s21, 1
      %p154 = por %p152, %p153
      %p156 = scmp.ne.s32.totalorder %s139, %s155
      %p157 = scmp.eq.s32.totalorder %s21, 0
      %p158 = por %p156, %p157
      %s159 = ssub.s32 %s15, %s22
      %p160 = scmp.eq.s32.totalorder %s159, 0
      %s162 = sadd.s32 %s161, 1
      %s163 = scalar_select %p160, %s161, %s162
      %p166 = pneg %p160
      %p167 = scmp.eq.s32.totalorder %s15, 1
      %p168 = por %p166, %p167
      %p169 = scmp.ne.s32.totalorder %s161, %s164
      %p170 = scmp.eq.s32.totalorder %s15, 0
      %p171 = por %p169, %p170
      %p172 = scmp.ne.s32.totalorder %s161, %s164
      %p173 = scmp.eq.s32.totalorder %s20, 1
      %p174 = por %p172, %p173
      %p175 = scmp.ne.s32.totalorder %s164, %s165
      %p176 = scmp.eq.s32.totalorder %s20, 0
      %p177 = por %p175, %p176
      %p178 = scmp.ne.s32.totalorder %s164, %s165
      %p179 = scmp.eq.s32.totalorder %s21, 1
      %p180 = por %p178, %p179
      %p182 = scmp.ne.s32.totalorder %s165, %s181
      %p183 = scmp.eq.s32.totalorder %s21, 0
      %p184 = por %p182, %p183
      %p185 = scmp.le.s32.totalorder 1, %s15
      %p186 = scmp.lt.s32.totalorder %s15, 3
      %p187 = pnand %p185, %p186
      %p188 = pneg %p187
      // Predicated region
      $region9: #{_forward_impl.5} parent=5 // pred_check
        _
      $region10: #{_forward_impl.5} parent=5 // pred_check_branch
        %190 = sbr.rel (%p187) target = $region12
      $region11: #{_forward_impl.5} parent=5 // pred_region
        %s191 = ssub.s32 %s15, 1
        // Predicated region
        $region13: #{_forward_impl.5} parent=11 // pred_check
          %p192 = pneg %p62
        $region14: #{_forward_impl.5} parent=11 // pred_check_branch
          %194 = sbr.rel (%p192) target = $region16
        $region15: #{_forward_impl.5} parent=11 // pred_region
          _
        $region16: #{_forward_impl.5} parent=11 // pred_fallthru
          _
        // Predicated region
        $region17: #{_forward_impl.5} parent=11 // pred_check
          %p195 = pneg %p83
        $region18: #{_forward_impl.5} parent=11 // pred_check_branch
          %197 = sbr.rel (%p195) target = $region20
        $region19: #{_forward_impl.5} parent=11 // pred_region
          _
        $region20: #{_forward_impl.5} parent=11 // pred_fallthru
          _
        // Predicated region
        $region21: #{_forward_impl.5} parent=11 // pred_check
          %p198 = pneg %p104
        $region22: #{_forward_impl.5} parent=11 // pred_check_branch
          %200 = sbr.rel (%p198) target = $region24
        $region23: #{_forward_impl.5} parent=11 // pred_region
          %s202 = ssub.s32 256, 256
          %203 = vsyncadd [#allocation3], %s202
          %s204 = sshll.u32 [#allocation2], 4
          %s205 = int_to_ptr.vmem [resolvable:$true] %s204
          %210 = dma.hbm_to_vmem [thread:$0]  %s3, 256, %s205, [#allocation3], 64, 64, 4
        $region24: #{_forward_impl.5} parent=11 // pred_fallthru
          _
        // Predicated region
        $region25: #{_forward_impl.5} parent=11 // pred_check
          %p211 = pneg %p125
        $region26: #{_forward_impl.5} parent=11 // pred_check_branch
          %213 = sbr.rel (%p211) target = $region28
        $region27: #{_forward_impl.5} parent=11 // pred_region
          %s215 = ssub.s32 256, 256
          %216 = vsyncadd [#allocation5], %s215
          %s217 = sshll.u32 [#allocation4], 4
          %s218 = int_to_ptr.vmem [resolvable:$true] %s217
          %223 = dma.hbm_to_vmem [thread:$0]  %s4, 256, %s218, [#allocation5], 64, 64, 4
        $region28: #{_forward_impl.5} parent=11 // pred_fallthru
          _
      $region12: #{_forward_impl.5} parent=5 // pred_fallthru
        _
      %p224 = scmp.lt.s32.totalorder %s15, 2
      // Predicated region
      $region29: #{_forward_impl.5} parent=5 // pred_check
        %p225 = pneg %p224
      $region30: #{_forward_impl.5} parent=5 // pred_check_branch
        %227 = sbr.rel (%p225) target = $region32
      $region31: #{_forward_impl.5} parent=5 // pred_region
        // Predicated region
        $region33: #{_forward_impl.5} parent=31 // pred_check
          %p228 = pneg %p35
        $region34: #{_forward_impl.5} parent=31 // pred_check_branch
          %230 = sbr.rel (%p228) target = $region36
        $region35: #{_forward_impl.5} parent=31 // pred_region
          %p231 = scmp.lt.s32.totalorder %s15, 1
          %s232 = scalar_select %p231, %s15, 1
          %s233 = smul.addr %s232, 2
          %s234 = smul.addr %s233, 8
          %s235 = scalar_lea.vmem %s0, %s234
        $region36: #{_forward_impl.5} parent=31 // pred_fallthru
          _
      $region32: #{_forward_impl.5} parent=5 // pred_fallthru
        _
      %p236 = scmp.le.s32.totalorder 1, %s15
      %p237 = scmp.lt.s32.totalorder %s15, 3
      %p238 = pnand %p236, %p237
      %p239 = pneg %p238
      // Predicated region
      $region37: #{_forward_impl.5} parent=5 // pred_check
        _
      $region38: #{_forward_impl.5} parent=5 // pred_check_branch
        %241 = sbr.rel (%p238) target = $region40
      $region39: #{_forward_impl.5} parent=5 // pred_region
        %s242 = ssub.s32 %s15, 1
        // Predicated region
        $region41: #{_forward_impl.5} parent=39 // pred_check
          %p243 = pneg %p104
        $region42: #{_forward_impl.5} parent=39 // pred_check_branch
          %245 = sbr.rel (%p243) target = $region44
        $region43: #{_forward_impl.5} parent=39 // pred_region
          %246 = dma.done [#allocation3], 256
        $region44: #{_forward_impl.5} parent=39 // pred_fallthru
          _
        // Predicated region
        $region45: #{_forward_impl.5} parent=39 // pred_check
          %p247 = pneg %p125
        $region46: #{_forward_impl.5} parent=39 // pred_check_branch
          %249 = sbr.rel (%p247) target = $region48
        $region47: #{_forward_impl.5} parent=39 // pred_region
          %250 = dma.done [#allocation5], 256
        $region48: #{_forward_impl.5} parent=39 // pred_fallthru
          _
        %p251 = scmp.lt.s32.totalorder %s20, 1
        %s252 = scalar_select %p251, %s20, 1
        %s253 = smul.addr %s252, 2
        %s254 = smul.addr %s253, 8
        %s255 = scalar_lea.vmem %s0, %s254
        %p256 = pneg %p41
        %p257 = pneg %p38
        %p258 = pneg %p62
        %p259 = pneg %p59
        %p260 = pneg %p83
        %p261 = pneg %p80
        %p262 = pneg %p104
        %p263 = pneg %p101
        %p264 = pneg %p125
        %p265 = pneg %p122
        %p266 = pneg %p151
        %p267 = pneg %p148
        %p268 = scmp.lt.s32.totalorder %s20, 1
        %s269 = scalar_select %p268, %s20, 1
        %s270 = smul.addr %s269, 2
        %s271 = smul.addr %s270, 8
        %s272 = scalar_lea.vmem %s5, %s271
        %p273 = pneg %p177
        %p274 = pneg %p174
        %p275 = scmp.lt.s32.totalorder %s20, 1
        %s276 = scalar_select %p275, %s20, 1
        %s277 = scalar_lea.vmem %s6, %s276
        %p278 = scmp.lt.s32.totalorder %s20, 1
        %s279 = scalar_select %p278, %s20, 1
        %s280 = smul.addr %s279, 2
        %s281 = smul.addr %s280, 8
        %s282 = scalar_lea.vmem %s0, %s281
        %p283 = scmp.lt.s32.totalorder %s20, 1
        %s284 = scalar_select %p283, %s20, 1
        %s285 = smul.addr %s284, 2
        %s286 = smul.addr %s285, 8
        %s287 = scalar_lea.vmem %s5, %s286
        %p288 = scmp.lt.s32.totalorder %s20, 1
        %s289 = scalar_select %p288, %s20, 1
        %s290 = scalar_lea.vmem %s6, %s289
        %v292 = vld [vmem:[%s282] sm:$0xff]
        %v293 = vld [vmem:[%s282 + $0x8] sm:$0xff]
        %v294 = vld [vmem:[%s1] sm:$0x1]
        %v295 = vld [vmem:[%s2] sm:$0x1]
        %vm296 = vcmask 261120
        %v297 = vsel %vm296, %v292, 0.0
        %298 = vadd.xlane.f32.xlu0 %v297
        %v299 = vpop.xlane.xlu0 %298
        %v300 = vsel %vm296, %v293, 0.0
        %301 = vadd.xlane.f32.xlu0 %v300
        %v302 = vpop.xlane.xlu0 %301
        %v303 = vrcp.pop 32.0
        %v304 = vmul.f32 %v299, %v303
        %v305 = vmul.f32 %v302, %v303
        %v306 = vsub.f32 %v292, %v304
        %v307 = vsub.f32 %v293, %v305
        %v308 = vmul.f32 %v306, %v306
        %v309 = vmul.f32 %v307, %v307
        %v310 = vsel %vm296, %v308, 0.0
        %311 = vadd.xlane.f32.xlu0 %v310
        %v312 = vpop.xlane.xlu0 %311
        %v313 = vsel %vm296, %v309, 0.0
        %314 = vadd.xlane.f32.xlu0 %v313
        %v315 = vpop.xlane.xlu0 %314
        %v316 = vmul.f32 %v312, %v303
        %v317 = vmul.f32 %v315, %v303
        %v318 = vadd.f32 %v316, 1e-05
        %v319 = vadd.f32 %v317, 1e-05
        %v320 = vrsqrt.pop %v318
        %v321 = vrsqrt.pop %v319
        %v322 = vmul.f32 %v306, %v320
        %v323 = vmul.f32 %v307, %v321
        %v325 = vlaneseq
        %v326 = vshrl.u32 %v325, 7
        %v327 = vsub.s32 0, %v326
        %v328 = vrot.slane %v294, %v327
        %v330 = vmul.f32 %v322, %v328
        %v331 = vmul.f32 %v323, %v328
        %v333 = vlaneseq
        %v334 = vshrl.u32 %v333, 7
        %v335 = vsub.s32 0, %v334
        %v336 = vrot.slane %v295, %v335
        %v338 = vadd.f32 %v330, %v336
        %v339 = vadd.f32 %v331, %v336
        %v340 = vpack.c.bf16 %v339, %v338
        %v341 = vld [vmem:[#allocation2] sm:$0xf]
        %v342 = vld [vmem:[#allocation2 + $0x4] sm:$0xf]
        %v343 = vld [vmem:[#allocation2 + $0x8] sm:$0xf]
        %v344 = vld [vmem:[#allocation2 + $0xc] sm:$0xf]
        %v349 = vunpack.c.l.b16 %v341
        %v350 = vunpack.c.l.b16 %v342
        %v351 = vunpack.c.l.b16 %v343
        %v352 = vunpack.c.l.b16 %v344
        %v353 = vpack.c.b16 %v350, %v349
        %v354 = vpack.c.b16 %v352, %v351
        %v358 = vsel %vm296, %v340, 0
        %360 = vmatprep.subr.bf16.mxu0 0
        %361 = vmatpush1.bf16.msra.mxu0 0
        %362 = vmatprep.subr.bf16.mxu0 0
        %363 = vmatpush1.bf16.msra.mxu0 0
        %364 = vmatprep.subr.bf16.mxu0 0
        %365 = vmatpush1.bf16.msra.mxu0 0
        %366 = vmatprep.subr.bf16.mxu0 0
        %367 = vmatpush1.bf16.msra.mxu0 0
        %368 = vmatprep.subr.bf16.mxu0 0
        %369 = vmatpush1.bf16.msra.mxu0 0
        %370 = vmatprep.subr.bf16.mxu0 0
        %371 = vmatpush1.bf16.msra.mxu0 0
        %372 = vmatprep.subr.bf16.mxu0 0
        %373 = vmatpush1.bf16.msra.mxu0 %v354
        %374 = vmatprep.subr.bf16.mxu0 0
        %375 = vmatpush1.bf16.msra.mxu0 %v353
        %376 = vmatprep.subr.bf16.mxu0 0
        %377 = vmatpush2.bf16.msra.mxu0 0
        %378 = vmatprep.subr.bf16.mxu0 0
        %379 = vmatpush2.bf16.msra.mxu0 0
        %380 = vmatprep.subr.bf16.mxu0 0
        %381 = vmatpush2.bf16.msra.mxu0 0
        %382 = vmatprep.subr.bf16.mxu0 0
        %383 = vmatpush2.bf16.msra.mxu0 0
        %384 = vmatprep.subr.bf16.mxu0 0
        %385 = vmatpush2.bf16.msra.mxu0 0
        %386 = vmatprep.subr.bf16.mxu0 0
        %387 = vmatpush2.bf16.msra.mxu0 0
        %388 = vmatprep.subr.bf16.mxu0 0
        %389 = vmatpush2.bf16.msra.mxu0 0
        %390 = vmatprep.subr.bf16.mxu0 0
        %391 = vmatpush2.bf16.msra.mxu0 0
        %392 = vmatprep.mubr.bf16.mxu0 0
        %393 = vmatmul.mubr.bf16.gmra.mxu0 %v358
        %v394 = vpop.f32.mrf.mxu0
        %v395 = vadd.f32 0.0, %v394
        %v396 = vpop.f32.mrf.mxu0
        %v397 = vpop.f32.mrf.mxu0
        %v398 = vadd.f32 0.0, %v397
        %v399 = vpop.f32.mrf.mxu0
        %400 = vdwg.mxu0
        %403 = vrot.lane.b32.xlu0 %v395, 120
        %v404 = vpop.permute.xlu0 %403
        %405 = vrot.lane.b32.xlu0 %v398, 120
        %v406 = vpop.permute.xlu0 %405
        %409 = vrot.lane.b32.xlu0 %v395, 112
        %v410 = vpop.permute.xlu0 %409
        %411 = vrot.lane.b32.xlu0 %v398, 112
        %v412 = vpop.permute.xlu0 %411
        %415 = vrot.lane.b32.xlu0 %v395, 104
        %v416 = vpop.permute.xlu0 %415
        %417 = vrot.lane.b32.xlu0 %v398, 104
        %v418 = vpop.permute.xlu0 %417
        %v421 = vpack.c.bf16 %v398, %v395
        %v422 = vpack.c.bf16 %v406, %v404
        %v423 = vpack.c.bf16 %v412, %v410
        %v424 = vpack.c.bf16 %v418, %v416
        %426 = vrot.lane.b32.xlu0 %v421, 96
        %v427 = vpop.permute.xlu0 %426
        %vm428 = vcmask 64512
        %v430 = vsel %vm428, %v421, 0
        %v433 = vsel %vm428, %v427, 0
        %435 = vmatprep.subr.bf16.mxu0 0
        %436 = vmatpush1.bf16.xpose.msra.mxu0 0
        %437 = vmatprep.subr.bf16.mxu0 0
        %438 = vmatpush1.bf16.xpose.msra.mxu0 0
        %439 = vmatprep.subr.bf16.mxu0 0
        %440 = vmatpush1.bf16.xpose.msra.mxu0 0
        %441 = vmatprep.subr.bf16.mxu0 0
        %442 = vmatpush1.bf16.xpose.msra.mxu0 0
        %443 = vmatprep.subr.bf16.mxu0 0
        %444 = vmatpush1.bf16.xpose.msra.mxu0 0
        %445 = vmatprep.subr.bf16.mxu0 0
        %446 = vmatpush1.bf16.xpose.msra.mxu0 0
        %447 = vmatprep.subr.bf16.mxu0 0
        %448 = vmatpush1.bf16.xpose.msra.mxu0 0
        %449 = vmatprep.subr.bf16.mxu0 0
        %450 = vmatpush1.bf16.xpose.msra.mxu0 %v433
        %451 = vmatprep.subr.bf16.mxu0 0
        %452 = vmatpush2.bf16.xpose.msra.mxu0 0
        %453 = vmatprep.subr.bf16.mxu0 0
        %454 = vmatpush2.bf16.xpose.msra.mxu0 0
        %455 = vmatprep.subr.bf16.mxu0 0
        %456 = vmatpush2.bf16.xpose.msra.mxu0 0
        %457 = vmatprep.subr.bf16.mxu0 0
        %458 = vmatpush2.bf16.xpose.msra.mxu0 0
        %459 = vmatprep.subr.bf16.mxu0 0
        %460 = vmatpush2.bf16.xpose.msra.mxu0 0
        %461 = vmatprep.subr.bf16.mxu0 0
        %462 = vmatpush2.bf16.xpose.msra.mxu0 0
        %463 = vmatprep.subr.bf16.mxu0 0
        %464 = vmatpush2.bf16.xpose.msra.mxu0 0
        %465 = vmatprep.subr.bf16.mxu0 0
        %466 = vmatpush2.bf16.xpose.msra.mxu0 0
        %467 = vmatprep.mubr.bf16.mxu0 0
        %468 = vmatmul.mubr.bf16.gmra.mxu0 %v430
        %v469 = vpop.f32.mrf.mxu0
        %v470 = vadd.f32 0.0, %v469
        %v471 = vpop.f32.mrf.mxu0
        %v472 = vpop.f32.mrf.mxu0
        %v473 = vadd.f32 0.0, %v472
        %v474 = vpop.f32.mrf.mxu0
        %475 = vdwg.mxu0
        %477 = vrot.lane.b32.xlu0 %v422, 96
        %v478 = vpop.permute.xlu0 %477
        %v480 = vsel %vm428, %v422, 0
        %v483 = vsel %vm428, %v478, 0
        %485 = vmatprep.subr.bf16.mxu0 0
        %486 = vmatpush1.bf16.xpose.msra.mxu0 0
        %487 = vmatprep.subr.bf16.mxu0 0
        %488 = vmatpush1.bf16.xpose.msra.mxu0 0
        %489 = vmatprep.subr.bf16.mxu0 0
        %490 = vmatpush1.bf16.xpose.msra.mxu0 0
        %491 = vmatprep.subr.bf16.mxu0 0
        %492 = vmatpush1.bf16.xpose.msra.mxu0 0
        %493 = vmatprep.subr.bf16.mxu0 0
        %494 = vmatpush1.bf16.xpose.msra.mxu0 0
        %495 = vmatprep.subr.bf16.mxu0 0
        %496 = vmatpush1.bf16.xpose.msra.mxu0 0
        %497 = vmatprep.subr.bf16.mxu0 0
        %498 = vmatpush1.bf16.xpose.msra.mxu0 0
        %499 = vmatprep.subr.bf16.mxu0 0
        %500 = vmatpush1.bf16.xpose.msra.mxu0 %v483
        %501 = vmatprep.subr.bf16.mxu0 0
        %502 = vmatpush2.bf16.xpose.msra.mxu0 0
        %503 = vmatprep.subr.bf16.mxu0 0
        %504 = vmatpush2.bf16.xpose.msra.mxu0 0
        %505 = vmatprep.subr.bf16.mxu0 0
        %506 = vmatpush2.bf16.xpose.msra.mxu0 0
        %507 = vmatprep.subr.bf16.mxu0 0
        %508 = vmatpush2.bf16.xpose.msra.mxu0 0
        %509 = vmatprep.subr.bf16.mxu0 0
        %510 = vmatpush2.bf16.xpose.msra.mxu0 0
        %511 = vmatprep.subr.bf16.mxu0 0
        %512 = vmatpush2.bf16.xpose.msra.mxu0 0
        %513 = vmatprep.subr.bf16.mxu0 0
        %514 = vmatpush2.bf16.xpose.msra.mxu0 0
        %515 = vmatprep.subr.bf16.mxu0 0
        %516 = vmatpush2.bf16.xpose.msra.mxu0 0
        %517 = vmatprep.mubr.bf16.mxu0 0
        %518 = vmatmul.mubr.bf16.gmra.mxu0 %v480
        %v519 = vpop.f32.mrf.mxu0
        %v520 = vadd.f32 0.0, %v519
        %v521 = vpop.f32.mrf.mxu0
        %v522 = vpop.f32.mrf.mxu0
        %v523 = vadd.f32 0.0, %v522
        %v524 = vpop.f32.mrf.mxu0
        %525 = vdwg.mxu0
        %527 = vrot.lane.b32.xlu0 %v423, 96
        %v528 = vpop.permute.xlu0 %527
        %v530 = vsel %vm428, %v423, 0
        %v533 = vsel %vm428, %v528, 0
        %535 = vmatprep.subr.bf16.mxu0 0
        %536 = vmatpush1.bf16.xpose.msra.mxu0 0
        %537 = vmatprep.subr.bf16.mxu0 0
        %538 = vmatpush1.bf16.xpose.msra.mxu0 0
        %539 = vmatprep.subr.bf16.mxu0 0
        %540 = vmatpush1.bf16.xpose.msra.mxu0 0
        %541 = vmatprep.subr.bf16.mxu0 0
        %542 = vmatpush1.bf16.xpose.msra.mxu0 0
        %543 = vmatprep.subr.bf16.mxu0 0
        %544 = vmatpush1.bf16.xpose.msra.mxu0 0
        %545 = vmatprep.subr.bf16.mxu0 0
        %546 = vmatpush1.bf16.xpose.msra.mxu0 0
        %547 = vmatprep.subr.bf16.mxu0 0
        %548 = vmatpush1.bf16.xpose.msra.mxu0 0
        %549 = vmatprep.subr.bf16.mxu0 0
        %550 = vmatpush1.bf16.xpose.msra.mxu0 %v533
        %551 = vmatprep.subr.bf16.mxu0 0
        %552 = vmatpush2.bf16.xpose.msra.mxu0 0
        %553 = vmatprep.subr.bf16.mxu0 0
        %554 = vmatpush2.bf16.xpose.msra.mxu0 0
        %555 = vmatprep.subr.bf16.mxu0 0
        %556 = vmatpush2.bf16.xpose.msra.mxu0 0
        %557 = vmatprep.subr.bf16.mxu0 0
        %558 = vmatpush2.bf16.xpose.msra.mxu0 0
        %559 = vmatprep.subr.bf16.mxu0 0
        %560 = vmatpush2.bf16.xpose.msra.mxu0 0
        %561 = vmatprep.subr.bf16.mxu0 0
        %562 = vmatpush2.bf16.xpose.msra.mxu0 0
        %563 = vmatprep.subr.bf16.mxu0 0
        %564 = vmatpush2.bf16.xpose.msra.mxu0 0
        %565 = vmatprep.subr.bf16.mxu0 0
        %566 = vmatpush2.bf16.xpose.msra.mxu0 0
        %567 = vmatprep.mubr.bf16.mxu0 0
        %568 = vmatmul.mubr.bf16.gmra.mxu0 %v530
        %v569 = vpop.f32.mrf.mxu0
        %v570 = vadd.f32 0.0, %v569
        %v571 = vpop.f32.mrf.mxu0
        %v572 = vpop.f32.mrf.mxu0
        %v573 = vadd.f32 0.0, %v572
        %v574 = vpop.f32.mrf.mxu0
        %575 = vdwg.mxu0
        %577 = vrot.lane.b32.xlu0 %v424, 96
        %v578 = vpop.permute.xlu0 %577
        %v580 = vsel %vm428, %v424, 0
        %v583 = vsel %vm428, %v578, 0
        %585 = vmatprep.subr.bf16.mxu0 0
        %586 = vmatpush1.bf16.xpose.msra.mxu0 0
        %587 = vmatprep.subr.bf16.mxu0 0
        %588 = vmatpush1.bf16.xpose.msra.mxu0 0
        %589 = vmatprep.subr.bf16.mxu0 0
        %590 = vmatpush1.bf16.xpose.msra.mxu0 0
        %591 = vmatprep.subr.bf16.mxu0 0
        %592 = vmatpush1.bf16.xpose.msra.mxu0 0
        %593 = vmatprep.subr.bf16.mxu0 0
        %594 = vmatpush1.bf16.xpose.msra.mxu0 0
        %595 = vmatprep.subr.bf16.mxu0 0
        %596 = vmatpush1.bf16.xpose.msra.mxu0 0
        %597 = vmatprep.subr.bf16.mxu0 0
        %598 = vmatpush1.bf16.xpose.msra.mxu0 0
        %599 = vmatprep.subr.bf16.mxu0 0
        %600 = vmatpush1.bf16.xpose.msra.mxu0 %v583
        %601 = vmatprep.subr.bf16.mxu0 0
        %602 = vmatpush2.bf16.xpose.msra.mxu0 0
        %603 = vmatprep.subr.bf16.mxu0 0
        %604 = vmatpush2.bf16.xpose.msra.mxu0 0
        %605 = vmatprep.subr.bf16.mxu0 0
        %606 = vmatpush2.bf16.xpose.msra.mxu0 0
        %607 = vmatprep.subr.bf16.mxu0 0
        %608 = vmatpush2.bf16.xpose.msra.mxu0 0
        %609 = vmatprep.subr.bf16.mxu0 0
        %610 = vmatpush2.bf16.xpose.msra.mxu0 0
        %611 = vmatprep.subr.bf16.mxu0 0
        %612 = vmatpush2.bf16.xpose.msra.mxu0 0
        %613 = vmatprep.subr.bf16.mxu0 0
        %614 = vmatpush2.bf16.xpose.msra.mxu0 0
        %615 = vmatprep.subr.bf16.mxu0 0
        %616 = vmatpush2.bf16.xpose.msra.mxu0 0
        %617 = vmatprep.mubr.bf16.mxu0 0
        %618 = vmatmul.mubr.bf16.gmra.mxu0 %v580
        %v619 = vpop.f32.mrf.mxu0
        %v620 = vadd.f32 0.0, %v619
        %v621 = vpop.f32.mrf.mxu0
        %v622 = vpop.f32.mrf.mxu0
        %v623 = vadd.f32 0.0, %v622
        %v624 = vpop.f32.mrf.mxu0
        %625 = vdwg.mxu0
        %v626 = vmul.f32 %v470, 0.35355338
        %v627 = vmul.f32 %v473, 0.35355338
        %v628 = vmul.f32 %v520, 0.35355338
        %v629 = vmul.f32 %v523, 0.35355338
        %v630 = vmul.f32 %v570, 0.35355338
        %v631 = vmul.f32 %v573, 0.35355338
        %v632 = vmul.f32 %v620, 0.35355338
        %v633 = vmul.f32 %v623, 0.35355338
        %vm634 = vcmask 130048
        %v635 = vsel %vm634, %v626, -inf
        %636 = vmax.xlane.f32.xlu0 %v635
        %v637 = vpop.xlane.xlu0 %636
        %v638 = vsel %vm634, %v627, -inf
        %639 = vmax.xlane.f32.xlu0 %v638
        %v640 = vpop.xlane.xlu0 %639
        %v641 = vsel %vm634, %v628, -inf
        %642 = vmax.xlane.f32.xlu0 %v641
        %v643 = vpop.xlane.xlu0 %642
        %v644 = vsel %vm634, %v629, -inf
        %645 = vmax.xlane.f32.xlu0 %v644
        %v646 = vpop.xlane.xlu0 %645
        %v647 = vsel %vm634, %v630, -inf
        %648 = vmax.xlane.f32.xlu0 %v647
        %v649 = vpop.xlane.xlu0 %648
        %v650 = vsel %vm634, %v631, -inf
        %651 = vmax.xlane.f32.xlu0 %v650
        %v652 = vpop.xlane.xlu0 %651
        %v653 = vsel %vm634, %v632, -inf
        %654 = vmax.xlane.f32.xlu0 %v653
        %v655 = vpop.xlane.xlu0 %654
        %v656 = vsel %vm634, %v633, -inf
        %657 = vmax.xlane.f32.xlu0 %v656
        %v658 = vpop.xlane.xlu0 %657
        %v659 = vsub.f32 %v626, %v637
        %v660 = vsub.f32 %v627, %v640
        %v661 = vsub.f32 %v628, %v643
        %v662 = vsub.f32 %v629, %v646
        %v663 = vsub.f32 %v630, %v649
        %v664 = vsub.f32 %v631, %v652
        %v665 = vsub.f32 %v632, %v655
        %v666 = vsub.f32 %v633, %v658
        %v667 = vmul.f32 %v659, 1.442695
        %v668 = vpow.pop %v667
        %v669 = vmul.f32 %v660, 1.442695
        %v670 = vpow.pop %v669
        %v671 = vmul.f32 %v661, 1.442695
        %v672 = vpow.pop %v671
        %v673 = vmul.f32 %v662, 1.442695
        %v674 = vpow.pop %v673
        %v675 = vmul.f32 %v663, 1.442695
        %v676 = vpow.pop %v675
        %v677 = vmul.f32 %v664, 1.442695
        %v678 = vpow.pop %v677
        %v679 = vmul.f32 %v665, 1.442695
        %v680 = vpow.pop %v679
        %v681 = vmul.f32 %v666, 1.442695
        %v682 = vpow.pop %v681
        %v683 = vsel %vm634, %v668, 0.0
        %684 = vadd.xlane.f32.xlu0 %v683
        %v685 = vpop.xlane.xlu0 %684
        %v686 = vsel %vm634, %v670, 0.0
        %687 = vadd.xlane.f32.xlu0 %v686
        %v688 = vpop.xlane.xlu0 %687
        %v689 = vsel %vm634, %v672, 0.0
        %690 = vadd.xlane.f32.xlu0 %v689
        %v691 = vpop.xlane.xlu0 %690
        %v692 = vsel %vm634, %v674, 0.0
        %693 = vadd.xlane.f32.xlu0 %v692
        %v694 = vpop.xlane.xlu0 %693
        %v695 = vsel %vm634, %v676, 0.0
        %696 = vadd.xlane.f32.xlu0 %v695
        %v697 = vpop.xlane.xlu0 %696
        %v698 = vsel %vm634, %v678, 0.0
        %699 = vadd.xlane.f32.xlu0 %v698
        %v700 = vpop.xlane.xlu0 %699
        %v701 = vsel %vm634, %v680, 0.0
        %702 = vadd.xlane.f32.xlu0 %v701
        %v703 = vpop.xlane.xlu0 %702
        %v704 = vsel %vm634, %v682, 0.0
        %705 = vadd.xlane.f32.xlu0 %v704
        %v706 = vpop.xlane.xlu0 %705
        %v707 = vrcp.pop %v685
        %v708 = vmul.f32 %v668, %v707
        %v709 = vrcp.pop %v688
        %v710 = vmul.f32 %v670, %v709
        %v711 = vrcp.pop %v691
        %v712 = vmul.f32 %v672, %v711
        %v713 = vrcp.pop %v694
        %v714 = vmul.f32 %v674, %v713
        %v715 = vrcp.pop %v697
        %v716 = vmul.f32 %v676, %v715
        %v717 = vrcp.pop %v700
        %v718 = vmul.f32 %v678, %v717
        %v719 = vrcp.pop %v703
        %v720 = vmul.f32 %v680, %v719
        %v721 = vrcp.pop %v706
        %v722 = vmul.f32 %v682, %v721
        %v723 = vpack.c.bf16 %v710, %v708
        %v724 = vpack.c.bf16 %v714, %v712
        %v725 = vpack.c.bf16 %v718, %v716
        %v726 = vpack.c.bf16 %v722, %v720
        %727 = vrot.lane.b32.xlu0 %v421, 64
        %v728 = vpop.permute.xlu0 %727
        %v731 = vsel %vm634, %v723, 0
        %733 = vmatprep.subr.bf16.mxu0 0
        %734 = vmatpush1.bf16.msra.mxu0 0
        %735 = vmatprep.subr.bf16.mxu0 0
        %736 = vmatpush1.bf16.msra.mxu0 0
        %737 = vmatprep.subr.bf16.mxu0 0
        %738 = vmatpush1.bf16.msra.mxu0 0
        %739 = vmatprep.subr.bf16.mxu0 0
        %740 = vmatpush1.bf16.msra.mxu0 0
        %741 = vmatprep.subr.bf16.mxu0 0
        %742 = vmatpush1.bf16.msra.mxu0 0
        %743 = vmatprep.subr.bf16.mxu0 0
        %744 = vmatpush1.bf16.msra.mxu0 0
        %745 = vmatprep.subr.bf16.mxu0 0
        %746 = vmatpush1.bf16.msra.mxu0 0
        %747 = vmatprep.subr.bf16.mxu0 0
        %748 = vmatpush1.bf16.msra.mxu0 %v728
        %749 = vmatprep.subr.bf16.mxu0 0
        %750 = vmatpush2.bf16.msra.mxu0 0
        %751 = vmatprep.subr.bf16.mxu0 0
        %752 = vmatpush2.bf16.msra.mxu0 0
        %753 = vmatprep.subr.bf16.mxu0 0
        %754 = vmatpush2.bf16.msra.mxu0 0
        %755 = vmatprep.subr.bf16.mxu0 0
        %756 = vmatpush2.bf16.msra.mxu0 0
        %757 = vmatprep.subr.bf16.mxu0 0
        %758 = vmatpush2.bf16.msra.mxu0 0
        %759 = vmatprep.subr.bf16.mxu0 0
        %760 = vmatpush2.bf16.msra.mxu0 0
        %761 = vmatprep.subr.bf16.mxu0 0
        %762 = vmatpush2.bf16.msra.mxu0 0
        %763 = vmatprep.subr.bf16.mxu0 0
        %764 = vmatpush2.bf16.msra.mxu0 0
        %765 = vmatprep.mubr.bf16.mxu0 0
        %766 = vmatmul.mubr.bf16.gmra.mxu0 %v731
        %v767 = vpop.f32.mrf.mxu0
        %v768 = vadd.f32 0.0, %v767
        %v769 = vpop.f32.mrf.mxu0
        %v770 = vpop.f32.mrf.mxu0
        %v771 = vadd.f32 0.0, %v770
        %v772 = vpop.f32.mrf.mxu0
        %773 = vdwg.mxu0
        %774 = vrot.lane.b32.xlu0 %v422, 64
        %v775 = vpop.permute.xlu0 %774
        %v778 = vsel %vm634, %v724, 0
        %780 = vmatprep.subr.bf16.mxu0 0
        %781 = vmatpush1.bf16.msra.mxu0 0
        %782 = vmatprep.subr.bf16.mxu0 0
        %783 = vmatpush1.bf16.msra.mxu0 0
        %784 = vmatprep.subr.bf16.mxu0 0
        %785 = vmatpush1.bf16.msra.mxu0 0
        %786 = vmatprep.subr.bf16.mxu0 0
        %787 = vmatpush1.bf16.msra.mxu0 0
        %788 = vmatprep.subr.bf16.mxu0 0
        %789 = vmatpush1.bf16.msra.mxu0 0
        %790 = vmatprep.subr.bf16.mxu0 0
        %791 = vmatpush1.bf16.msra.mxu0 0
        %792 = vmatprep.subr.bf16.mxu0 0
        %793 = vmatpush1.bf16.msra.mxu0 0
        %794 = vmatprep.subr.bf16.mxu0 0
        %795 = vmatpush1.bf16.msra.mxu0 %v775
        %796 = vmatprep.subr.bf16.mxu0 0
        %797 = vmatpush2.bf16.msra.mxu0 0
        %798 = vmatprep.subr.bf16.mxu0 0
        %799 = vmatpush2.bf16.msra.mxu0 0
        %800 = vmatprep.subr.bf16.mxu0 0
        %801 = vmatpush2.bf16.msra.mxu0 0
        %802 = vmatprep.subr.bf16.mxu0 0
        %803 = vmatpush2.bf16.msra.mxu0 0
        %804 = vmatprep.subr.bf16.mxu0 0
        %805 = vmatpush2.bf16.msra.mxu0 0
        %806 = vmatprep.subr.bf16.mxu0 0
        %807 = vmatpush2.bf16.msra.mxu0 0
        %808 = vmatprep.subr.bf16.mxu0 0
        %809 = vmatpush2.bf16.msra.mxu0 0
        %810 = vmatprep.subr.bf16.mxu0 0
        %811 = vmatpush2.bf16.msra.mxu0 0
        %812 = vmatprep.mubr.bf16.mxu0 0
        %813 = vmatmul.mubr.bf16.gmra.mxu0 %v778
        %v814 = vpop.f32.mrf.mxu0
        %v815 = vadd.f32 0.0, %v814
        %v816 = vpop.f32.mrf.mxu0
        %v817 = vpop.f32.mrf.mxu0
        %v818 = vadd.f32 0.0, %v817
        %v819 = vpop.f32.mrf.mxu0
        %820 = vdwg.mxu0
        %821 = vrot.lane.b32.xlu0 %v423, 64
        %v822 = vpop.permute.xlu0 %821
        %v825 = vsel %vm634, %v725, 0
        %827 = vmatprep.subr.bf16.mxu0 0
        %828 = vmatpush1.bf16.msra.mxu0 0
        %829 = vmatprep.subr.bf16.mxu0 0
        %830 = vmatpush1.bf16.msra.mxu0 0
        %831 = vmatprep.subr.bf16.mxu0 0
        %832 = vmatpush1.bf16.msra.mxu0 0
        %833 = vmatprep.subr.bf16.mxu0 0
        %834 = vmatpush1.bf16.msra.mxu0 0
        %835 = vmatprep.subr.bf16.mxu0 0
        %836 = vmatpush1.bf16.msra.mxu0 0
        %837 = vmatprep.subr.bf16.mxu0 0
        %838 = vmatpush1.bf16.msra.mxu0 0
        %839 = vmatprep.subr.bf16.mxu0 0
        %840 = vmatpush1.bf16.msra.mxu0 0
        %841 = vmatprep.subr.bf16.mxu0 0
        %842 = vmatpush1.bf16.msra.mxu0 %v822
        %843 = vmatprep.subr.bf16.mxu0 0
        %844 = vmatpush2.bf16.msra.mxu0 0
        %845 = vmatprep.subr.bf16.mxu0 0
        %846 = vmatpush2.bf16.msra.mxu0 0
        %847 = vmatprep.subr.bf16.mxu0 0
        %848 = vmatpush2.bf16.msra.mxu0 0
        %849 = vmatprep.subr.bf16.mxu0 0
        %850 = vmatpush2.bf16.msra.mxu0 0
        %851 = vmatprep.subr.bf16.mxu0 0
        %852 = vmatpush2.bf16.msra.mxu0 0
        %853 = vmatprep.subr.bf16.mxu0 0
        %854 = vmatpush2.bf16.msra.mxu0 0
        %855 = vmatprep.subr.bf16.mxu0 0
        %856 = vmatpush2.bf16.msra.mxu0 0
        %857 = vmatprep.subr.bf16.mxu0 0
        %858 = vmatpush2.bf16.msra.mxu0 0
        %859 = vmatprep.mubr.bf16.mxu0 0
        %860 = vmatmul.mubr.bf16.gmra.mxu0 %v825
        %v861 = vpop.f32.mrf.mxu0
        %v862 = vadd.f32 0.0, %v861
        %v863 = vpop.f32.mrf.mxu0
        %v864 = vpop.f32.mrf.mxu0
        %v865 = vadd.f32 0.0, %v864
        %v866 = vpop.f32.mrf.mxu0
        %867 = vdwg.mxu0
        %868 = vrot.lane.b32.xlu0 %v424, 64
        %v869 = vpop.permute.xlu0 %868
        %v872 = vsel %vm634, %v726, 0
        %874 = vmatprep.subr.bf16.mxu0 0
        %875 = vmatpush1.bf16.msra.mxu0 0
        %876 = vmatprep.subr.bf16.mxu0 0
        %877 = vmatpush1.bf16.msra.mxu0 0
        %878 = vmatprep.subr.bf16.mxu0 0
        %879 = vmatpush1.bf16.msra.mxu0 0
        %880 = vmatprep.subr.bf16.mxu0 0
        %881 = vmatpush1.bf16.msra.mxu0 0
        %882 = vmatprep.subr.bf16.mxu0 0
        %883 = vmatpush1.bf16.msra.mxu0 0
        %884 = vmatprep.subr.bf16.mxu0 0
        %885 = vmatpush1.bf16.msra.mxu0 0
        %886 = vmatprep.subr.bf16.mxu0 0
        %887 = vmatpush1.bf16.msra.mxu0 0
        %888 = vmatprep.subr.bf16.mxu0 0
        %889 = vmatpush1.bf16.msra.mxu0 %v869
        %890 = vmatprep.subr.bf16.mxu0 0
        %891 = vmatpush2.bf16.msra.mxu0 0
        %892 = vmatprep.subr.bf16.mxu0 0
        %893 = vmatpush2.bf16.msra.mxu0 0
        %894 = vmatprep.subr.bf16.mxu0 0
        %895 = vmatpush2.bf16.msra.mxu0 0
        %896 = vmatprep.subr.bf16.mxu0 0
        %897 = vmatpush2.bf16.msra.mxu0 0
        %898 = vmatprep.subr.bf16.mxu0 0
        %899 = vmatpush2.bf16.msra.mxu0 0
        %900 = vmatprep.subr.bf16.mxu0 0
        %901 = vmatpush2.bf16.msra.mxu0 0
        %902 = vmatprep.subr.bf16.mxu0 0
        %903 = vmatpush2.bf16.msra.mxu0 0
        %904 = vmatprep.subr.bf16.mxu0 0
        %905 = vmatpush2.bf16.msra.mxu0 0
        %906 = vmatprep.mubr.bf16.mxu0 0
        %907 = vmatmul.mubr.bf16.gmra.mxu0 %v872
        %v908 = vpop.f32.mrf.mxu0
        %v909 = vadd.f32 0.0, %v908
        %v910 = vpop.f32.mrf.mxu0
        %v911 = vpop.f32.mrf.mxu0
        %v912 = vadd.f32 0.0, %v911
        %v913 = vpop.f32.mrf.mxu0
        %914 = vdwg.mxu0
        %v915 = vpack.c.bf16 %v771, %v768
        %v916 = vpack.c.bf16 %v818, %v815
        %v917 = vpack.c.bf16 %v865, %v862
        %v918 = vpack.c.bf16 %v912, %v909
        %v919 = vld [vmem:[#allocation4] sm:$0xf]
        %v920 = vld [vmem:[#allocation4 + $0x4] sm:$0xf]
        %v921 = vld [vmem:[#allocation4 + $0x8] sm:$0xf]
        %v922 = vld [vmem:[#allocation4 + $0xc] sm:$0xf]
        %v924 = vsel %vm428, %v915, 0
        %vm926 = vcmask 1043456
        %v928 = vsel %vm926, %v919, 0
        %930 = vmatprep.subr.bf16.mxu0 0
        %931 = vmatpush1.bf16.msra.mxu0 0
        %932 = vmatprep.subr.bf16.mxu0 0
        %933 = vmatpush1.bf16.msra.mxu0 0
        %934 = vmatprep.subr.bf16.mxu0 0
        %935 = vmatpush1.bf16.msra.mxu0 0
        %936 = vmatprep.subr.bf16.mxu0 0
        %937 = vmatpush1.bf16.msra.mxu0 0
        %938 = vmatprep.subr.bf16.mxu0 0
        %939 = vmatpush1.bf16.msra.mxu0 0
        %940 = vmatprep.subr.bf16.mxu0 0
        %941 = vmatpush1.bf16.msra.mxu0 0
        %942 = vmatprep.subr.bf16.mxu0 0
        %943 = vmatpush1.bf16.msra.mxu0 0
        %944 = vmatprep.subr.bf16.mxu0 0
        %945 = vmatpush1.bf16.msra.mxu0 %v928
        %946 = vmatprep.subr.bf16.mxu0 0
        %947 = vmatpush2.bf16.msra.mxu0 0
        %948 = vmatprep.subr.bf16.mxu0 0
        %949 = vmatpush2.bf16.msra.mxu0 0
        %950 = vmatprep.subr.bf16.mxu0 0
        %951 = vmatpush2.bf16.msra.mxu0 0
        %952 = vmatprep.subr.bf16.mxu0 0
        %953 = vmatpush2.bf16.msra.mxu0 0
        %954 = vmatprep.subr.bf16.mxu0 0
        %955 = vmatpush2.bf16.msra.mxu0 0
        %956 = vmatprep.subr.bf16.mxu0 0
        %957 = vmatpush2.bf16.msra.mxu0 0
        %958 = vmatprep.subr.bf16.mxu0 0
        %959 = vmatpush2.bf16.msra.mxu0 0
        %960 = vmatprep.subr.bf16.mxu0 0
        %961 = vmatpush2.bf16.msra.mxu0 0
        %962 = vmatprep.mubr.bf16.mxu0 0
        %963 = vmatmul.mubr.bf16.gmra.mxu0 %v924
        %v964 = vpop.f32.mrf.mxu0
        %v965 = vadd.f32 0.0, %v964
        %v966 = vpop.f32.mrf.mxu0
        %v967 = vpop.f32.mrf.mxu0
        %v968 = vadd.f32 0.0, %v967
        %v969 = vpop.f32.mrf.mxu0
        %970 = vdwg.mxu0
        %v972 = vsel %vm428, %v916, 0
        %v975 = vsel %vm926, %v920, 0
        %977 = vmatprep.subr.bf16.mxu0 0
        %978 = vmatpush1.bf16.msra.mxu0 0
        %979 = vmatprep.subr.bf16.mxu0 0
        %980 = vmatpush1.bf16.msra.mxu0 0
        %981 = vmatprep.subr.bf16.mxu0 0
        %982 = vmatpush1.bf16.msra.mxu0 0
        %983 = vmatprep.subr.bf16.mxu0 0
        %984 = vmatpush1.bf16.msra.mxu0 0
        %985 = vmatprep.subr.bf16.mxu0 0
        %986 = vmatpush1.bf16.msra.mxu0 0
        %987 = vmatprep.subr.bf16.mxu0 0
        %988 = vmatpush1.bf16.msra.mxu0 0
        %989 = vmatprep.subr.bf16.mxu0 0
        %990 = vmatpush1.bf16.msra.mxu0 0
        %991 = vmatprep.subr.bf16.mxu0 0
        %992 = vmatpush1.bf16.msra.mxu0 %v975
        %993 = vmatprep.subr.bf16.mxu0 0
        %994 = vmatpush2.bf16.msra.mxu0 0
        %995 = vmatprep.subr.bf16.mxu0 0
        %996 = vmatpush2.bf16.msra.mxu0 0
        %997 = vmatprep.subr.bf16.mxu0 0
        %998 = vmatpush2.bf16.msra.mxu0 0
        %999 = vmatprep.subr.bf16.mxu0 0
        %1000 = vmatpush2.bf16.msra.mxu0 0
        %1001 = vmatprep.subr.bf16.mxu0 0
        %1002 = vmatpush2.bf16.msra.mxu0 0
        %1003 = vmatprep.subr.bf16.mxu0 0
        %1004 = vmatpush2.bf16.msra.mxu0 0
        %1005 = vmatprep.subr.bf16.mxu0 0
        %1006 = vmatpush2.bf16.msra.mxu0 0
        %1007 = vmatprep.subr.bf16.mxu0 0
        %1008 = vmatpush2.bf16.msra.mxu0 0
        %1009 = vmatprep.mubr.bf16.mxu0 0
        %1010 = vmatmul.mubr.bf16.gmra.mxu0 %v972
        %v1011 = vpop.f32.mrf.mxu0
        %v1012 = vadd.f32 0.0, %v1011
        %v1013 = vpop.f32.mrf.mxu0
        %v1014 = vpop.f32.mrf.mxu0
        %v1015 = vadd.f32 0.0, %v1014
        %v1016 = vpop.f32.mrf.mxu0
        %1017 = vdwg.mxu0
        %v1019 = vsel %vm428, %v917, 0
        %v1022 = vsel %vm926, %v921, 0
        %1024 = vmatprep.subr.bf16.mxu0 0
        %1025 = vmatpush1.bf16.msra.mxu0 0
        %1026 = vmatprep.subr.bf16.mxu0 0
        %1027 = vmatpush1.bf16.msra.mxu0 0
        %1028 = vmatprep.subr.bf16.mxu0 0
        %1029 = vmatpush1.bf16.msra.mxu0 0
        %1030 = vmatprep.subr.bf16.mxu0 0
        %1031 = vmatpush1.bf16.msra.mxu0 0
        %1032 = vmatprep.subr.bf16.mxu0 0
        %1033 = vmatpush1.bf16.msra.mxu0 0
        %1034 = vmatprep.subr.bf16.mxu0 0
        %1035 = vmatpush1.bf16.msra.mxu0 0
        %1036 = vmatprep.subr.bf16.mxu0 0
        %1037 = vmatpush1.bf16.msra.mxu0 0
        %1038 = vmatprep.subr.bf16.mxu0 0
        %1039 = vmatpush1.bf16.msra.mxu0 %v1022
        %1040 = vmatprep.subr.bf16.mxu0 0
        %1041 = vmatpush2.bf16.msra.mxu0 0
        %1042 = vmatprep.subr.bf16.mxu0 0
        %1043 = vmatpush2.bf16.msra.mxu0 0
        %1044 = vmatprep.subr.bf16.mxu0 0
        %1045 = vmatpush2.bf16.msra.mxu0 0
        %1046 = vmatprep.subr.bf16.mxu0 0
        %1047 = vmatpush2.bf16.msra.mxu0 0
        %1048 = vmatprep.subr.bf16.mxu0 0
        %1049 = vmatpush2.bf16.msra.mxu0 0
        %1050 = vmatprep.subr.bf16.mxu0 0
        %1051 = vmatpush2.bf16.msra.mxu0 0
        %1052 = vmatprep.subr.bf16.mxu0 0
        %1053 = vmatpush2.bf16.msra.mxu0 0
        %1054 = vmatprep.subr.bf16.mxu0 0
        %1055 = vmatpush2.bf16.msra.mxu0 0
        %1056 = vmatprep.mubr.bf16.mxu0 0
        %1057 = vmatmul.mubr.bf16.gmra.mxu0 %v1019
        %v1058 = vpop.f32.mrf.mxu0
        %v1059 = vadd.f32 0.0, %v1058
        %v1060 = vpop.f32.mrf.mxu0
        %v1061 = vpop.f32.mrf.mxu0
        %v1062 = vadd.f32 0.0, %v1061
        %v1063 = vpop.f32.mrf.mxu0
        %1064 = vdwg.mxu0
        %v1066 = vsel %vm428, %v918, 0
        %v1069 = vsel %vm926, %v922, 0
        %1071 = vmatprep.subr.bf16.mxu0 0
        %1072 = vmatpush1.bf16.msra.mxu0 0
        %1073 = vmatprep.subr.bf16.mxu0 0
        %1074 = vmatpush1.bf16.msra.mxu0 0
        %1075 = vmatprep.subr.bf16.mxu0 0
        %1076 = vmatpush1.bf16.msra.mxu0 0
        %1077 = vmatprep.subr.bf16.mxu0 0
        %1078 = vmatpush1.bf16.msra.mxu0 0
        %1079 = vmatprep.subr.bf16.mxu0 0
        %1080 = vmatpush1.bf16.msra.mxu0 0
        %1081 = vmatprep.subr.bf16.mxu0 0
        %1082 = vmatpush1.bf16.msra.mxu0 0
        %1083 = vmatprep.subr.bf16.mxu0 0
        %1084 = vmatpush1.bf16.msra.mxu0 0
        %1085 = vmatprep.subr.bf16.mxu0 0
        %1086 = vmatpush1.bf16.msra.mxu0 %v1069
        %1087 = vmatprep.subr.bf16.mxu0 0
        %1088 = vmatpush2.bf16.msra.mxu0 0
        %1089 = vmatprep.subr.bf16.mxu0 0
        %1090 = vmatpush2.bf16.msra.mxu0 0
        %1091 = vmatprep.subr.bf16.mxu0 0
        %1092 = vmatpush2.bf16.msra.mxu0 0
        %1093 = vmatprep.subr.bf16.mxu0 0
        %1094 = vmatpush2.bf16.msra.mxu0 0
        %1095 = vmatprep.subr.bf16.mxu0 0
        %1096 = vmatpush2.bf16.msra.mxu0 0
        %1097 = vmatprep.subr.bf16.mxu0 0
        %1098 = vmatpush2.bf16.msra.mxu0 0
        %1099 = vmatprep.subr.bf16.mxu0 0
        %1100 = vmatpush2.bf16.msra.mxu0 0
        %1101 = vmatprep.subr.bf16.mxu0 0
        %1102 = vmatpush2.bf16.msra.mxu0 0
        %1103 = vmatprep.mubr.bf16.mxu0 0
        %1104 = vmatmul.mubr.bf16.gmra.mxu0 %v1066
        %v1105 = vpop.f32.mrf.mxu0
        %v1106 = vadd.f32 0.0, %v1105
        %v1107 = vpop.f32.mrf.mxu0
        %v1108 = vpop.f32.mrf.mxu0
        %v1109 = vadd.f32 0.0, %v1108
        %v1110 = vpop.f32.mrf.mxu0
        %1111 = vdwg.mxu0
        %v1112 = vsel %vm296, %v965, 0.0
        %v1113 = vsel %vm296, %v1012, 0.0
        %v1114 = vadd.f32 %v1112, %v1113
        %v1115 = vsel %vm296, %v1059, 0.0
        %v1116 = vadd.f32 %v1114, %v1115
        %v1117 = vsel %vm296, %v1106, 0.0
        %v1118 = vadd.f32 %v1116, %v1117
        %v1119 = vsel %vm296, %v968, 0.0
        %v1120 = vsel %vm296, %v1015, 0.0
        %v1121 = vadd.f32 %v1119, %v1120
        %v1122 = vsel %vm296, %v1062, 0.0
        %v1123 = vadd.f32 %v1121, %v1122
        %v1124 = vsel %vm296, %v1109, 0.0
        %v1125 = vadd.f32 %v1123, %v1124
        %1126 = vst.msk [vmem:[%s287] sm:$0xff] %vm296, %v1118
        %1127 = vst.msk [vmem:[%s287 + $0x8] sm:$0xff] %vm296, %v1125
        %v1128 = vsel %vm634, %v708, -inf
        %v1129 = vsel %vm634, %v712, -inf
        %v1130 = vsel %vm634, %v716, -inf
        %v1131 = vmax.f32 %v1128, %v1130
        %v1132 = vsel %vm634, %v720, -inf
        %v1133 = vmax.f32 %v1129, %v1132
        %v1134 = vmax.f32 %v1131, %v1133
        %v1135 = vsel %vm634, %v710, -inf
        %v1136 = vsel %vm634, %v714, -inf
        %v1137 = vsel %vm634, %v718, -inf
        %v1138 = vmax.f32 %v1135, %v1137
        %v1139 = vsel %vm634, %v722, -inf
        %v1140 = vmax.f32 %v1136, %v1139
        %v1141 = vmax.f32 %v1138, %v1140
        %v1142 = vsel %vm634, %v1134, 0.0
        %v1143 = vsel %vm634, %v1141, 0.0
        %v1144 = vadd.f32 %v1142, %v1143
        %v1145 = vrot.slane %v1144, 4
        %v1146 = vadd.f32 %v1144, %v1145
        %v1147 = vrot.slane %v1146, 2
        %v1148 = vadd.f32 %v1146, %v1147
        %v1149 = vrot.slane %v1148, 1
        %v1150 = vadd.f32 %v1148, %v1149
        %v1152 = vsel %vm634, %v1150, 0
        %1154 = vmatprep.subr.mxu0 0.0
        %1155 = vmatpush1.msra.mxu0 0.0
        %1156 = vmatprep.subr.mxu0 0.0
        %1157 = vmatpush1.msra.mxu0 0.0
        %1158 = vmatprep.subr.mxu0 0.0
        %1159 = vmatpush1.msra.mxu0 0.0
        %1160 = vmatprep.subr.mxu0 0.0
        %1161 = vmatpush1.msra.mxu0 0.0
        %1162 = vmatprep.subr.mxu0 0.0
        %1163 = vmatpush1.msra.mxu0 0.0
        %1164 = vmatprep.subr.mxu0 0.0
        %1165 = vmatpush1.msra.mxu0 0.0
        %1166 = vmatprep.subr.mxu0 0.0
        %1167 = vmatpush1.msra.mxu0 0.0
        %1168 = vmatprep.subr.mxu0 0.0
        %1169 = vmatpush1.msra.mxu0 0.0
        %1170 = vmatprep.subr.mxu0 0.0
        %1171 = vmatpush1.msra.mxu0 0.0
        %1172 = vmatprep.subr.mxu0 0.0
        %1173 = vmatpush1.msra.mxu0 0.0
        %1174 = vmatprep.subr.mxu0 0.0
        %1175 = vmatpush1.msra.mxu0 0.0
        %1176 = vmatprep.subr.mxu0 0.0
        %1177 = vmatpush1.msra.mxu0 0.0
        %1178 = vmatprep.subr.mxu0 0.0
        %1179 = vmatpush1.msra.mxu0 0.0
        %1180 = vmatprep.subr.mxu0 0.0
        %1181 = vmatpush1.msra.mxu0 0.0
        %1182 = vmatprep.subr.mxu0 0.0
        %1183 = vmatpush1.msra.mxu0 %v1141
        %1184 = vmatprep.subr.mxu0 0.0
        %1185 = vmatpush1.msra.mxu0 %v1134
        %1186 = vmatprep.subr.mxu0 0.0
        %1187 = vmatpush2.msra.mxu0 0.0
        %1188 = vmatprep.subr.mxu0 0.0
        %1189 = vmatpush2.msra.mxu0 0.0
        %1190 = vmatprep.subr.mxu0 0.0
        %1191 = vmatpush2.msra.mxu0 0.0
        %1192 = vmatprep.subr.mxu0 0.0
        %1193 = vmatpush2.msra.mxu0 0.0
        %1194 = vmatprep.subr.mxu0 0.0
        %1195 = vmatpush2.msra.mxu0 0.0
        %1196 = vmatprep.subr.mxu0 0.0
        %1197 = vmatpush2.msra.mxu0 0.0
        %1198 = vmatprep.subr.mxu0 0.0
        %1199 = vmatpush2.msra.mxu0 0.0
        %1200 = vmatprep.subr.mxu0 0.0
        %1201 = vmatpush2.msra.mxu0 0.0
        %1202 = vmatprep.subr.mxu0 0.0
        %1203 = vmatpush2.msra.mxu0 0.0
        %1204 = vmatprep.subr.mxu0 0.0
        %1205 = vmatpush2.msra.mxu0 0.0
        %1206 = vmatprep.subr.mxu0 0.0
        %1207 = vmatpush2.msra.mxu0 0.0
        %1208 = vmatprep.subr.mxu0 0.0
        %1209 = vmatpush2.msra.mxu0 0.0
        %1210 = vmatprep.subr.mxu0 0.0
        %1211 = vmatpush2.msra.mxu0 0.0
        %1212 = vmatprep.subr.mxu0 0.0
        %1213 = vmatpush2.msra.mxu0 0.0
        %1214 = vmatprep.subr.mxu0 0.0
        %1215 = vmatpush2.msra.mxu0 0.0
        %1216 = vmatprep.subr.mxu0 0.0
        %1217 = vmatpush2.msra.mxu0 0.0
        %1218 = vmatprep.mubr.f32.mxu0 0.0
        %1219 = vmatmul.mubr.f32.gmra.mxu0 %v1152
        %v1220 = vpop.f32.mrf.mxu0
        %v1221 = vadd.f32 0.0, %v1220
        %v1222 = vpop.f32.mrf.mxu0
        %1223 = vdwg.mxu0
        %vm1224 = vcmask 122880
        %1225 = vst.msk [vmem:[%s290] sm:$0x1] %vm1224, %v1221
        %p1226 = scmp.lt.s32.totalorder %s20, 1
        %s1227 = scalar_select %p1226, %s20, 1
        %s1228 = smul.addr %s1227, 2
        %s1229 = smul.addr %s1228, 8
        %s1230 = scalar_lea.vmem %s5, %s1229
        %p1231 = scmp.lt.s32.totalorder %s20, 1
        %s1232 = scalar_select %p1231, %s20, 1
        %s1233 = scalar_lea.vmem %s6, %s1232
        // Predicated region
        $region49: #{_forward_impl.5} parent=39 // pred_check
          %p1234 = pneg %p148
        $region50: #{_forward_impl.5} parent=39 // pred_check_branch
          %1236 = sbr.rel (%p1234) target = $region52
        $region51: #{_forward_impl.5} parent=39 // pred_region
          _
        $region52: #{_forward_impl.5} parent=39 // pred_fallthru
          _
        // Predicated region
        $region53: #{_forward_impl.5} parent=39 // pred_check
          %p1237 = pneg %p174
        $region54: #{_forward_impl.5} parent=39 // pred_check_branch
          %1239 = sbr.rel (%p1237) target = $region56
        $region55: #{_forward_impl.5} parent=39 // pred_region
          _
        $region56: #{_forward_impl.5} parent=39 // pred_fallthru
          _
      $region40: #{_forward_impl.5} parent=5 // pred_fallthru
        _
      %p1240 = scmp.le.s32.totalorder 2, %s15
      // Predicated region
      $region57: #{_forward_impl.5} parent=5 // pred_check
        %p1241 = pneg %p1240
      $region58: #{_forward_impl.5} parent=5 // pred_check_branch
        %1243 = sbr.rel (%p1241) target = $region60
      $region59: #{_forward_impl.5} parent=5 // pred_region
        %s1244 = ssub.s32 %s15, 2
        // Predicated region
        $region61: #{_forward_impl.5} parent=59 // pred_check
          %p1245 = pneg %p154
        $region62: #{_forward_impl.5} parent=59 // pred_check_branch
          %1247 = sbr.rel (%p1245) target = $region64
        $region63: #{_forward_impl.5} parent=59 // pred_region
          %p1248 = scmp.lt.s32.totalorder %s21, 1
          %s1249 = scalar_select %p1248, %s21, 1
          %s1250 = smul.addr %s1249, 2
          %s1251 = smul.addr %s1250, 8
          %s1252 = scalar_lea.vmem %s5, %s1251
        $region64: #{_forward_impl.5} parent=59 // pred_fallthru
          _
        // Predicated region
        $region65: #{_forward_impl.5} parent=59 // pred_check
          %p1253 = pneg %p180
        $region66: #{_forward_impl.5} parent=59 // pred_check_branch
          %1255 = sbr.rel (%p1253) target = $region68
        $region67: #{_forward_impl.5} parent=59 // pred_region
          %p1256 = scmp.lt.s32.totalorder %s21, 1
          %s1257 = scalar_select %p1256, %s21, 1
          %s1258 = scalar_lea.vmem %s6, %s1257
        $region68: #{_forward_impl.5} parent=59 // pred_fallthru
          _
      $region60: #{_forward_impl.5} parent=5 // pred_fallthru
        _
    $region6: #{_forward_impl.5} parent=1 // loop_footer
      %s19 = sadd.s32 1, %s15
    $region7: #{_forward_impl.5} parent=1 // loop_footer_branch
      %14 = sbr.rel target = $region3
    $region8: #{_forward_impl.5} parent=1 // loop_exit
      _
    %1259 = vsyncpa [#allocation3], 1
    %s1260 = scalar_lea.sflag [#allocation3], 1
    %1261 = vsyncpa %s1260, 1
    %1262 = vsyncpa [#allocation5], 1

// kernel: _forward_impl.6
$region0: #{_forward_impl.6}
  #allocation0 [shape = 'u32[]', space=smem, size = 0x4, offset = 0x4, fixed_abs, tag = 'smem constant byte address 0x4 - core index']
  #allocation1 [shape = 'u32[144,128]{1,0:T(1,128)}', space=vmem, size = 0x12000, scoped, tag = 'internal scratch']
  %s0 = inlined_call_operand.vmem [shape: f32[24,32], index: 0, kind: input, shape index: {}]
  %s1 = inlined_call_operand.vmem [shape: f32[1,32], index: 1, kind: input, shape index: {}]
  %s2 = inlined_call_operand.vmem [shape: f32[1,32], index: 2, kind: input, shape index: {}]
  %s3 = inlined_call_operand.vmem [shape: bf16[32,64], index: 3, kind: input, shape index: {}]
  %s4 = inlined_call_operand.vmem [shape: f32[1,64], index: 4, kind: input, shape index: {}]
  %s5 = inlined_call_operand.vmem [shape: bf16[64,32], index: 5, kind: input, shape index: {}]
  %s6 = inlined_call_operand.vmem [shape: f32[1,32], index: 6, kind: input, shape index: {}]
  %s7 = inlined_call_operand.vmem [shape: f32[24,32], index: 7, kind: output, shape index: {}]
  %s8 = sld [smem:[#allocation0]]
  $region38: #{_forward_impl.6} parent=0
    _
  %s10 = ssub.s32 1, %s8
  %s11 = scalar_select 0, %s10, %s8
  // Predicated region
  $region2: #{_forward_impl.6} parent=0 // pred_check
    _
  $region3: #{_forward_impl.6} parent=0 // pred_check_branch
    %13 = sbr.rel (0) target = $region5
  $region4: #{_forward_impl.6} parent=0 // pred_region
    _
  $region5: #{_forward_impl.6} parent=0 // pred_fallthru
    _
  // Predicated region
  $region6: #{_forward_impl.6} parent=0 // pred_check
    _
  $region7: #{_forward_impl.6} parent=0 // pred_check_branch
    %15 = sbr.rel (0) target = $region9
  $region8: #{_forward_impl.6} parent=0 // pred_region
    _
  $region9: #{_forward_impl.6} parent=0 // pred_fallthru
    _
  // Predicated region
  $region10: #{_forward_impl.6} parent=0 // pred_check
    _
  $region11: #{_forward_impl.6} parent=0 // pred_check_branch
    %17 = sbr.rel (0) target = $region13
  $region12: #{_forward_impl.6} parent=0 // pred_region
    _
  $region13: #{_forward_impl.6} parent=0 // pred_fallthru
    _
  // Predicated region
  $region14: #{_forward_impl.6} parent=0 // pred_check
    _
  $region15: #{_forward_impl.6} parent=0 // pred_check_branch
    %19 = sbr.rel (0) target = $region17
  $region16: #{_forward_impl.6} parent=0 // pred_region
    _
  $region17: #{_forward_impl.6} parent=0 // pred_fallthru
    _
  // Predicated region
  $region18: #{_forward_impl.6} parent=0 // pred_check
    _
  $region19: #{_forward_impl.6} parent=0 // pred_check_branch
    %21 = sbr.rel (0) target = $region21
  $region20: #{_forward_impl.6} parent=0 // pred_region
    _
  $region21: #{_forward_impl.6} parent=0 // pred_fallthru
    _
  // Predicated region
  $region22: #{_forward_impl.6} parent=0 // pred_check
    _
  $region23: #{_forward_impl.6} parent=0 // pred_check_branch
    %23 = sbr.rel (0) target = $region25
  $region24: #{_forward_impl.6} parent=0 // pred_region
    _
  $region25: #{_forward_impl.6} parent=0 // pred_fallthru
    _
  // Predicated region
  $region26: #{_forward_impl.6} parent=0 // pred_check
    _
  $region27: #{_forward_impl.6} parent=0 // pred_check_branch
    %25 = sbr.rel (0) target = $region29
  $region28: #{_forward_impl.6} parent=0 // pred_region
    _
  $region29: #{_forward_impl.6} parent=0 // pred_fallthru
    _
  %v27 = vld [vmem:[%s0] sm:$0xff]
  %v28 = vld [vmem:[%s0 + $0x8] sm:$0xff]
  %v29 = vld [vmem:[%s0 + $0x10] sm:$0xff]
  %v30 = vld [vmem:[%s1] sm:$0x1]
  %v31 = vld [vmem:[%s2] sm:$0x1]
  %vm32 = vcmask 261120
  %v33 = vsel %vm32, %v27, 0.0
  %34 = vadd.xlane.f32.xlu0 %v33
  %v35 = vpop.xlane.xlu0 %34
  %v36 = vsel %vm32, %v28, 0.0
  %37 = vadd.xlane.f32.xlu0 %v36
  %v38 = vpop.xlane.xlu0 %37
  %v39 = vsel %vm32, %v29, 0.0
  %40 = vadd.xlane.f32.xlu0 %v39
  %v41 = vpop.xlane.xlu0 %40
  %v42 = vrcp.pop 32.0
  %v43 = vmul.f32 %v35, %v42
  %v44 = vmul.f32 %v38, %v42
  %v45 = vmul.f32 %v41, %v42
  %v46 = vsub.f32 %v27, %v43
  %v47 = vsub.f32 %v28, %v44
  %v48 = vsub.f32 %v29, %v45
  %v49 = vmul.f32 %v46, %v46
  %v50 = vmul.f32 %v47, %v47
  %v51 = vmul.f32 %v48, %v48
  %v52 = vsel %vm32, %v49, 0.0
  %53 = vadd.xlane.f32.xlu0 %v52
  %v54 = vpop.xlane.xlu0 %53
  %v55 = vsel %vm32, %v50, 0.0
  %56 = vadd.xlane.f32.xlu0 %v55
  %v57 = vpop.xlane.xlu0 %56
  %v58 = vsel %vm32, %v51, 0.0
  %59 = vadd.xlane.f32.xlu0 %v58
  %v60 = vpop.xlane.xlu0 %59
  %v61 = vmul.f32 %v54, %v42
  %v62 = vmul.f32 %v57, %v42
  %v63 = vmul.f32 %v60, %v42
  %v64 = vadd.f32 %v61, 1e-05
  %v65 = vadd.f32 %v62, 1e-05
  %v66 = vadd.f32 %v63, 1e-05
  %v67 = vrsqrt.pop %v64
  %v68 = vrsqrt.pop %v65
  %v69 = vrsqrt.pop %v66
  %v70 = vmul.f32 %v46, %v67
  %v71 = vmul.f32 %v47, %v68
  %v72 = vmul.f32 %v48, %v69
  %v74 = vlaneseq
  %v75 = vshrl.u32 %v74, 7
  %v76 = vsub.s32 0, %v75
  %v77 = vrot.slane %v30, %v76
  %v79 = vmul.f32 %v70, %v77
  %v80 = vmul.f32 %v71, %v77
  %v81 = vmul.f32 %v72, %v77
  %v83 = vlaneseq
  %v84 = vshrl.u32 %v83, 7
  %v85 = vsub.s32 0, %v84
  %v86 = vrot.slane %v31, %v85
  %v88 = vadd.f32 %v79, %v86
  %v89 = vadd.f32 %v80, %v86
  %v90 = vadd.f32 %v81, %v86
  %v91 = vpack.c.bf16 %v89, %v88
  %v92 = vpack.c.bf16 %v90, %v90
  %v93 = vld [vmem:[%s3] sm:$0xf]
  %v94 = vld [vmem:[%s3 + $0x4] sm:$0xf]
  %v95 = vld [vmem:[%s3 + $0x8] sm:$0xf]
  %v96 = vld [vmem:[%s3 + $0xc] sm:$0xf]
  %v97 = vld [vmem:[%s4] sm:$0x1]
  %v99 = vlaneseq
  %v100 = vshrl.u32 %v99, 7
  %v101 = vsub.s32 0, %v100
  %v102 = vrot.slane %v97, %v101
  %v108 = vunpack.c.l.b16 %v93
  %v109 = vunpack.c.l.b16 %v94
  %v110 = vunpack.c.l.b16 %v95
  %v111 = vunpack.c.l.b16 %v96
  %v112 = vpack.c.b16 %v109, %v108
  %v113 = vpack.c.b16 %v111, %v110
  %v117 = vsel %vm32, %v91, 0
  %v120 = vsel %vm32, %v92, 0
  %122 = vmatprep.subr.bf16.mxu0 0
  %123 = vmatpush1.bf16.msra.mxu0 0
  %124 = vmatprep.subr.bf16.mxu0 0
  %125 = vmatpush1.bf16.msra.mxu0 0
  %126 = vmatprep.subr.bf16.mxu0 0
  %127 = vmatpush1.bf16.msra.mxu0 0
  %128 = vmatprep.subr.bf16.mxu0 0
  %129 = vmatpush1.bf16.msra.mxu0 0
  %130 = vmatprep.subr.bf16.mxu0 0
  %131 = vmatpush1.bf16.msra.mxu0 0
  %132 = vmatprep.subr.bf16.mxu0 0
  %133 = vmatpush1.bf16.msra.mxu0 0
  %134 = vmatprep.subr.bf16.mxu0 0
  %135 = vmatpush1.bf16.msra.mxu0 %v113
  %136 = vmatprep.subr.bf16.mxu0 0
  %137 = vmatpush1.bf16.msra.mxu0 %v112
  %138 = vmatprep.subr.bf16.mxu0 0
  %139 = vmatpush2.bf16.msra.mxu0 0
  %140 = vmatprep.subr.bf16.mxu0 0
  %141 = vmatpush2.bf16.msra.mxu0 0
  %142 = vmatprep.subr.bf16.mxu0 0
  %143 = vmatpush2.bf16.msra.mxu0 0
  %144 = vmatprep.subr.bf16.mxu0 0
  %145 = vmatpush2.bf16.msra.mxu0 0
  %146 = vmatprep.subr.bf16.mxu0 0
  %147 = vmatpush2.bf16.msra.mxu0 0
  %148 = vmatprep.subr.bf16.mxu0 0
  %149 = vmatpush2.bf16.msra.mxu0 0
  %150 = vmatprep.subr.bf16.mxu0 0
  %151 = vmatpush2.bf16.msra.mxu0 0
  %152 = vmatprep.subr.bf16.mxu0 0
  %153 = vmatpush2.bf16.msra.mxu0 0
  %154 = vmatprep.mubr.bf16.mxu0 0
  %155 = vmatmul.mubr.bf16.gmra.mxu0 %v117
  %v156 = vpop.f32.mrf.mxu0
  %v157 = vadd.f32 %v102, %v156
  %v158 = vpop.f32.mrf.mxu0
  %v159 = vpop.f32.mrf.mxu0
  %v160 = vadd.f32 %v102, %v159
  %v161 = vpop.f32.mrf.mxu0
  %162 = vmatprep.mubr.bf16.mxu0 0
  %163 = vmatmul.mubr.bf16.gmra.mxu0 %v120
  %v164 = vpop.f32.mrf.mxu0
  %v165 = vadd.f32 %v102, %v164
  %v166 = vpop.f32.mrf.mxu0
  %v167 = vpop.f32.mrf.mxu0
  %v168 = vpop.f32.mrf.mxu0
  %169 = vdwg.mxu0
  %v170 = vmul.f32 %v157, 0.5
  %v171 = vmul.f32 %v160, 0.5
  %v172 = vmul.f32 %v165, 0.5
  %v173 = vmul.f32 %v157, 0.70710677
  %v174 = vmul.f32 %v160, 0.70710677
  %v175 = vmul.f32 %v165, 0.70710677
  %vm176 = vcmp.ge.f32.partialorder %v173, 0.0
  %vm177 = vcmp.ge.f32.partialorder %v174, 0.0
  %vm178 = vcmp.ge.f32.partialorder %v175, 0.0
  %v179 = vsel %vm176, 1.0, -1.0
  %v180 = vsel %vm177, 1.0, -1.0
  %v181 = vsel %vm178, 1.0, -1.0
  %v182 = vand.u32 2147483647, %v173
  %v183 = vand.u32 2147483647, %v174
  %v184 = vand.u32 2147483647, %v175
  %v185 = vmul.f32 %v182, 0.3275911
  %v186 = vmul.f32 %v183, 0.3275911
  %v187 = vmul.f32 %v184, 0.3275911
  %v188 = vadd.f32 %v185, 1.0
  %v189 = vadd.f32 %v186, 1.0
  %v190 = vadd.f32 %v187, 1.0
  %v191 = vrcp.pop %v188
  %v192 = vmul.f32 1.0, %v191
  %v193 = vrcp.pop %v189
  %v194 = vmul.f32 1.0, %v193
  %v195 = vrcp.pop %v190
  %v196 = vmul.f32 1.0, %v195
  %v197 = vmul.f32 %v192, 1.0614054
  %v198 = vmul.f32 %v194, 1.0614054
  %v199 = vmul.f32 %v196, 1.0614054
  %v200 = vadd.f32 %v197, -1.4531521
  %v201 = vadd.f32 %v198, -1.4531521
  %v202 = vadd.f32 %v199, -1.4531521
  %v203 = vmul.f32 %v200, %v192
  %v204 = vmul.f32 %v201, %v194
  %v205 = vmul.f32 %v202, %v196
  %v206 = vadd.f32 %v203, 1.4214138
  %v207 = vadd.f32 %v204, 1.4214138
  %v208 = vadd.f32 %v205, 1.4214138
  %v209 = vmul.f32 %v206, %v192
  %v210 = vmul.f32 %v207, %v194
  %v211 = vmul.f32 %v208, %v196
  %v212 = vadd.f32 %v209, -0.28449672
  %v213 = vadd.f32 %v210, -0.28449672
  %v214 = vadd.f32 %v211, -0.28449672
  %v215 = vmul.f32 %v212, %v192
  %v216 = vmul.f32 %v213, %v194
  %v217 = vmul.f32 %v214, %v196
  %v218 = vadd.f32 %v215, 0.2548296
  %v219 = vadd.f32 %v216, 0.2548296
  %v220 = vadd.f32 %v217, 0.2548296
  %v221 = vmul.f32 %v218, %v192
  %v222 = vmul.f32 %v219, %v194
  %v223 = vmul.f32 %v220, %v196
  %v224 = vsub.f32 0.0, %v182
  %v225 = vsub.f32 0.0, %v183
  %v226 = vsub.f32 0.0, %v184
  %v227 = vmul.f32 %v224, %v182
  %v228 = vmul.f32 %v225, %v183
  %v229 = vmul.f32 %v226, %v184
  %v230 = vmul.f32 %v227, 1.442695
  %v231 = vpow.pop %v230
  %v232 = vmul.f32 %v228, 1.442695
  %v233 = vpow.pop %v232
  %v234 = vmul.f32 %v229, 1.442695
  %v235 = vpow.pop %v234
  %v236 = vmul.f32 %v221, %v231
  %v237 = vmul.f32 %v222, %v233
  %v238 = vmul.f32 %v223, %v235
  %v239 = vsub.f32 1.0, %v236
  %v240 = vsub.f32 1.0, %v237
  %v241 = vsub.f32 1.0, %v238
  %v242 = vmul.f32 %v179, %v239
  %v243 = vmul.f32 %v180, %v240
  %v244 = vmul.f32 %v181, %v241
  %v245 = vadd.f32 %v242, 1.0
  %v246 = vadd.f32 %v243, 1.0
  %v247 = vadd.f32 %v244, 1.0
  %v248 = vmul.f32 %v170, %v245
  %v249 = vmul.f32 %v171, %v246
  %v250 = vmul.f32 %v172, %v247
  %v251 = vpack.c.bf16 %v249, %v248
  %v252 = vpack.c.bf16 %v250, %v250
  %v253 = vld [vmem:[%s5] sm:$0xf]
  %v254 = vld [vmem:[%s5 + $0x4] sm:$0xf]
  %v255 = vld [vmem:[%s5 + $0x8] sm:$0xf]
  %v256 = vld [vmem:[%s5 + $0xc] sm:$0xf]
  %v257 = vld [vmem:[%s5 + $0x10] sm:$0xf]
  %v258 = vld [vmem:[%s5 + $0x14] sm:$0xf]
  %v259 = vld [vmem:[%s5 + $0x18] sm:$0xf]
  %v260 = vld [vmem:[%s5 + $0x1c] sm:$0xf]
  %v261 = vld [vmem:[%s6] sm:$0x1]
  %v263 = vlaneseq
  %v264 = vshrl.u32 %v263, 7
  %v265 = vsub.s32 0, %v264
  %v266 = vrot.slane %v261, %v265
  %v276 = vunpack.c.l.b16 %v253
  %v277 = vunpack.c.l.b16 %v254
  %v278 = vunpack.c.l.b16 %v255
  %v279 = vunpack.c.l.b16 %v256
  %v280 = vunpack.c.l.b16 %v257
  %v281 = vunpack.c.l.b16 %v258
  %v282 = vunpack.c.l.b16 %v259
  %v283 = vunpack.c.l.b16 %v260
  %v284 = vpack.c.b16 %v277, %v276
  %v285 = vpack.c.b16 %v279, %v278
  %v286 = vpack.c.b16 %v281, %v280
  %v287 = vpack.c.b16 %v283, %v282
  %vm292 = vcmask 523264
  %v294 = vsel %vm292, %v251, 0
  %v297 = vsel %vm292, %v252, 0
  %299 = vmatprep.subr.bf16.mxu0 0
  %300 = vmatpush1.bf16.msra.mxu0 0
  %301 = vmatprep.subr.bf16.mxu0 0
  %302 = vmatpush1.bf16.msra.mxu0 0
  %303 = vmatprep.subr.bf16.mxu0 0
  %304 = vmatpush1.bf16.msra.mxu0 0
  %305 = vmatprep.subr.bf16.mxu0 0
  %306 = vmatpush1.bf16.msra.mxu0 0
  %307 = vmatprep.subr.bf16.mxu0 0
  %308 = vmatpush1.bf16.msra.mxu0 %v287
  %309 = vmatprep.subr.bf16.mxu0 0
  %310 = vmatpush1.bf16.msra.mxu0 %v286
  %311 = vmatprep.subr.bf16.mxu0 0
  %312 = vmatpush1.bf16.msra.mxu0 %v285
  %313 = vmatprep.subr.bf16.mxu0 0
  %314 = vmatpush1.bf16.msra.mxu0 %v284
  %315 = vmatprep.subr.bf16.mxu0 0
  %316 = vmatpush2.bf16.msra.mxu0 0
  %317 = vmatprep.subr.bf16.mxu0 0
  %318 = vmatpush2.bf16.msra.mxu0 0
  %319 = vmatprep.subr.bf16.mxu0 0
  %320 = vmatpush2.bf16.msra.mxu0 0
  %321 = vmatprep.subr.bf16.mxu0 0
  %322 = vmatpush2.bf16.msra.mxu0 0
  %323 = vmatprep.subr.bf16.mxu0 0
  %324 = vmatpush2.bf16.msra.mxu0 0
  %325 = vmatprep.subr.bf16.mxu0 0
  %326 = vmatpush2.bf16.msra.mxu0 0
  %327 = vmatprep.subr.bf16.mxu0 0
  %328 = vmatpush2.bf16.msra.mxu0 0
  %329 = vmatprep.subr.bf16.mxu0 0
  %330 = vmatpush2.bf16.msra.mxu0 0
  %331 = vmatprep.mubr.bf16.mxu0 0
  %332 = vmatmul.mubr.bf16.gmra.mxu0 %v294
  %v333 = vpop.f32.mrf.mxu0
  %v334 = vadd.f32 %v266, %v333
  %v335 = vpop.f32.mrf.mxu0
  %v336 = vpop.f32.mrf.mxu0
  %v337 = vadd.f32 %v266, %v336
  %v338 = vpop.f32.mrf.mxu0
  %339 = vmatprep.mubr.bf16.mxu0 0
  %340 = vmatmul.mubr.bf16.gmra.mxu0 %v297
  %v341 = vpop.f32.mrf.mxu0
  %v342 = vadd.f32 %v266, %v341
  %v343 = vpop.f32.mrf.mxu0
  %v344 = vpop.f32.mrf.mxu0
  %v345 = vpop.f32.mrf.mxu0
  %346 = vdwg.mxu0
  %v347 = vadd.f32 %v334, %v27
  %v348 = vadd.f32 %v337, %v28
  %v349 = vadd.f32 %v342, %v29
  %350 = vst.msk [vmem:[%s7] sm:$0xff] %vm32, %v347
  %351 = vst.msk [vmem:[%s7 + $0x8] sm:$0xff] %vm32, %v348
  %352 = vst.msk [vmem:[%s7 + $0x10] sm:$0xff] %vm32, %v349
  // Predicated region
  $region30: #{_forward_impl.6} parent=0 // pred_check
    _
  $region31: #{_forward_impl.6} parent=0 // pred_check_branch
    %354 = sbr.rel (0) target = $region33
  $region32: #{_forward_impl.6} parent=0 // pred_region
    _
  $region33: #{_forward_impl.6} parent=0 // pred_fallthru
    _
  // Predicated region
  $region34: #{_forward_impl.6} parent=0 // pred_check
    _
  $region35: #{_forward_impl.6} parent=0 // pred_check_branch
    %356 = sbr.rel (0) target = $region37
  $region36: #{_forward_impl.6} parent=0 // pred_region
    _
  $region37: #{_forward_impl.6} parent=0 // pred_fallthru
    _

// kernel: _forward_impl.7
$region0: #{_forward_impl.7}
  #allocation0 [shape = 'u32[]', space=smem, size = 0x4, offset = 0x4, fixed_abs, tag = 'smem constant byte address 0x4 - core index']
  #allocation1 [shape = 'u32[144,128]{1,0:T(1,128)}', space=vmem, size = 0x12000, scoped, tag = 'internal scratch']
  %s0 = inlined_call_operand.vmem [shape: f32[2,12,32], index: 0, kind: input, shape index: {}]
  %s1 = inlined_call_operand.vmem [shape: f32[1,32], index: 1, kind: input, shape index: {}]
  %s2 = inlined_call_operand.vmem [shape: f32[1,32], index: 2, kind: input, shape index: {}]
  %s3 = inlined_call_operand.vmem [shape: bf16[32,96], index: 3, kind: input, shape index: {}]
  %s4 = inlined_call_operand.vmem [shape: bf16[4,8,32], index: 4, kind: input, shape index: {}]
  %s5 = inlined_call_operand.vmem [shape: f32[2,12,32], index: 5, kind: output, shape index: {0}]
  %s6 = inlined_call_operand.vmem [shape: f32[2,1,12], index: 6, kind: output, shape index: {1}]
  %7 = xla_tuple %s5, %s6
  %s8 = sld [smem:[#allocation0]]
  $region61: #{_forward_impl.7} parent=0
    _
  %s10 = ssub.s32 1, %s8
  %s11 = scalar_select 0, %s10, %s8
  loop: start=0, step=1, limit=4
  $region2: #{_forward_impl.7} parent=0 // loop_pre_header
    _
  $region3: #{_forward_impl.7} parent=0 // loop_header
    %s13 = sphi 0, %s17
    %p14 = scmp.ge.s32.totalorder %s13, 4
    %s23 = sphi 0, %s25
    %s26 = sphi 0, %s23
    %s27 = sphi 0, %s26
    %s43 = sphi 0, %s27
    %s47 = sphi 0, %s47
    %s49 = sphi 0, %s47
    %s50 = sphi 0, %s49
    %s64 = sphi 0, %s50
    %s68 = sphi 0, %s68
    %s70 = sphi 0, %s68
    %s71 = sphi 0, %s70
    %s85 = sphi 0, %s71
    %s89 = sphi 0, %s89
    %s91 = sphi 0, %s89
    %s92 = sphi 0, %s91
    %s106 = sphi 0, %s92
    %s110 = sphi 0, %s110
    %s112 = sphi 0, %s110
    %s113 = sphi 0, %s112
    %s127 = sphi 0, %s113
    %s133 = sphi 0, %s135
    %s136 = sphi 0, %s133
    %s137 = sphi 0, %s136
    %s153 = sphi 0, %s137
    %s159 = sphi 0, %s161
    %s162 = sphi 0, %s159
    %s163 = sphi 0, %s162
    %s179 = sphi 0, %s163
  $region4: #{_forward_impl.7} parent=0 // loop_header_branch
    %16 = sbr.rel (%p14) target = $region8
  $region5: #{_forward_impl.7} parent=0 // loop_body
    %s18 = ssub.s32 %s13, 1
    %s19 = ssub.s32 %s13, 2
    %s20 = sadd.s32 %s13, 1
    %s21 = ssub.s32 %s13, %s20
    %p22 = scmp.eq.s32.totalorder %s21, 0
    %s24 = sadd.s32 %s23, 1
    %s25 = scalar_select %p22, %s23, %s24
    %p28 = pneg %p22
    %p29 = scmp.eq.s32.totalorder %s13, 1
    %p30 = por %p28, %p29
    %p31 = scmp.ne.s32.totalorder %s23, %s26
    %p32 = scmp.eq.s32.totalorder %s13, 0
    %p33 = por %p31, %p32
    %p34 = scmp.ne.s32.totalorder %s23, %s26
    %p35 = scmp.eq.s32.totalorder %s18, 1
    %p36 = por %p34, %p35
    %p37 = scmp.ne.s32.totalorder %s26, %s27
    %p38 = scmp.eq.s32.totalorder %s18, 0
    %p39 = por %p37, %p38
    %p40 = scmp.ne.s32.totalorder %s26, %s27
    %p41 = scmp.eq.s32.totalorder %s19, 1
    %p42 = por %p40, %p41
    %p44 = scmp.ne.s32.totalorder %s27, %s43
    %p45 = scmp.eq.s32.totalorder %s19, 0
    %p46 = por %p44, %p45
    %s48 = sadd.s32 %s47, 1
    %p51 = scmp.eq.s32.totalorder %s13, 1
    %p52 = scmp.ne.s32.totalorder %s47, %s49
    %p53 = scmp.eq.s32.totalorder %s13, 0
    %p54 = por %p52, %p53
    %p55 = scmp.ne.s32.totalorder %s47, %s49
    %p56 = scmp.eq.s32.totalorder %s18, 1
    %p57 = por %p55, %p56
    %p58 = scmp.ne.s32.totalorder %s49, %s50
    %p59 = scmp.eq.s32.totalorder %s18, 0
    %p60 = por %p58, %p59
    %p61 = scmp.ne.s32.totalorder %s49, %s50
    %p62 = scmp.eq.s32.totalorder %s19, 1
    %p63 = por %p61, %p62
    %p65 = scmp.ne.s32.totalorder %s50, %s64
    %p66 = scmp.eq.s32.totalorder %s19, 0
    %p67 = por %p65, %p66
    %s69 = sadd.s32 %s68, 1
    %p72 = scmp.eq.s32.totalorder %s13, 1
    %p73 = scmp.ne.s32.totalorder %s68, %s70
    %p74 = scmp.eq.s32.totalorder %s13, 0
    %p75 = por %p73, %p74
    %p76 = scmp.ne.s32.totalorder %s68, %s70
    %p77 = scmp.eq.s32.totalorder %s18, 1
    %p78 = por %p76, %p77
    %p79 = scmp.ne.s32.totalorder %s70, %s71
    %p80 = scmp.eq.s32.totalorder %s18, 0
    %p81 = por %p79, %p80
    %p82 = scmp.ne.s32.totalorder %s70, %s71
    %p83 = scmp.eq.s32.totalorder %s19, 1
    %p84 = por %p82, %p83
    %p86 = scmp.ne.s32.totalorder %s71, %s85
    %p87 = scmp.eq.s32.totalorder %s19, 0
    %p88 = por %p86, %p87
    %s90 = sadd.s32 %s89, 1
    %p93 = scmp.eq.s32.totalorder %s13, 1
    %p94 = scmp.ne.s32.totalorder %s89, %s91
    %p95 = scmp.eq.s32.totalorder %s13, 0
    %p96 = por %p94, %p95
    %p97 = scmp.ne.s32.totalorder %s89, %s91
    %p98 = scmp.eq.s32.totalorder %s18, 1
    %p99 = por %p97, %p98
    %p100 = scmp.ne.s32.totalorder %s91, %s92
    %p101 = scmp.eq.s32.totalorder %s18, 0
    %p102 = por %p100, %p101
    %p103 = scmp.ne.s32.totalorder %s91, %s92
    %p104 = scmp.eq.s32.totalorder %s19, 1
    %p105 = por %p103, %p104
    %p107 = scmp.ne.s32.totalorder %s92, %s106
    %p108 = scmp.eq.s32.totalorder %s19, 0
    %p109 = por %p107, %p108
    %s111 = sadd.s32 %s110, 1
    %p114 = scmp.eq.s32.totalorder %s13, 1
    %p115 = scmp.ne.s32.totalorder %s110, %s112
    %p116 = scmp.eq.s32.totalorder %s13, 0
    %p117 = por %p115, %p116
    %p118 = scmp.ne.s32.totalorder %s110, %s112
    %p119 = scmp.eq.s32.totalorder %s18, 1
    %p120 = por %p118, %p119
    %p121 = scmp.ne.s32.totalorder %s112, %s113
    %p122 = scmp.eq.s32.totalorder %s18, 0
    %p123 = por %p121, %p122
    %p124 = scmp.ne.s32.totalorder %s112, %s113
    %p125 = scmp.eq.s32.totalorder %s19, 1
    %p126 = por %p124, %p125
    %p128 = scmp.ne.s32.totalorder %s113, %s127
    %p129 = scmp.eq.s32.totalorder %s19, 0
    %p130 = por %p128, %p129
    %s131 = ssub.s32 %s13, %s20
    %p132 = scmp.eq.s32.totalorder %s131, 0
    %s134 = sadd.s32 %s133, 1
    %s135 = scalar_select %p132, %s133, %s134
    %p138 = pneg %p132
    %p139 = scmp.eq.s32.totalorder %s13, 1
    %p140 = por %p138, %p139
    %p141 = scmp.ne.s32.totalorder %s133, %s136
    %p142 = scmp.eq.s32.totalorder %s13, 0
    %p143 = por %p141, %p142
    %p144 = scmp.ne.s32.totalorder %s133, %s136
    %p145 = scmp.eq.s32.totalorder %s18, 1
    %p146 = por %p144, %p145
    %p147 = scmp.ne.s32.totalorder %s136, %s137
    %p148 = scmp.eq.s32.totalorder %s18, 0
    %p149 = por %p147, %p148
    %p150 = scmp.ne.s32.totalorder %s136, %s137
    %p151 = scmp.eq.s32.totalorder %s19, 1
    %p152 = por %p150, %p151
    %p154 = scmp.ne.s32.totalorder %s137, %s153
    %p155 = scmp.eq.s32.totalorder %s19, 0
    %p156 = por %p154, %p155
    %s157 = ssub.s32 %s13, %s20
    %p158 = scmp.eq.s32.totalorder %s157, 0
    %s160 = sadd.s32 %s159, 1
    %s161 = scalar_select %p158, %s159, %s160
    %p164 = pneg %p158
    %p165 = scmp.eq.s32.totalorder %s13, 1
    %p166 = por %p164, %p165
    %p167 = scmp.ne.s32.totalorder %s159, %s162
    %p168 = scmp.eq.s32.totalorder %s13, 0
    %p169 = por %p167, %p168
    %p170 = scmp.ne.s32.totalorder %s159, %s162
    %p171 = scmp.eq.s32.totalorder %s18, 1
    %p172 = por %p170, %p171
    %p173 = scmp.ne.s32.totalorder %s162, %s163
    %p174 = scmp.eq.s32.totalorder %s18, 0
    %p175 = por %p173, %p174
    %p176 = scmp.ne.s32.totalorder %s162, %s163
    %p177 = scmp.eq.s32.totalorder %s19, 1
    %p178 = por %p176, %p177
    %p180 = scmp.ne.s32.totalorder %s163, %s179
    %p181 = scmp.eq.s32.totalorder %s19, 0
    %p182 = por %p180, %p181
    %p183 = scmp.le.s32.totalorder 1, %s13
    %p184 = scmp.lt.s32.totalorder %s13, 3
    %p185 = pnand %p183, %p184
    %p186 = pneg %p185
    // Predicated region
    $region9: #{_forward_impl.7} parent=5 // pred_check
      _
    $region10: #{_forward_impl.7} parent=5 // pred_check_branch
      %188 = sbr.rel (%p185) target = $region12
    $region11: #{_forward_impl.7} parent=5 // pred_region
      %s189 = ssub.s32 %s13, 1
      // Predicated region
      $region13: #{_forward_impl.7} parent=11 // pred_check
        %p190 = pneg %p60
      $region14: #{_forward_impl.7} parent=11 // pred_check_branch
        %192 = sbr.rel (%p190) target = $region16
      $region15: #{_forward_impl.7} parent=11 // pred_region
        _
      $region16: #{_forward_impl.7} parent=11 // pred_fallthru
        _
      // Predicated region
      $region17: #{_forward_impl.7} parent=11 // pred_check
        %p193 = pneg %p81
      $region18: #{_forward_impl.7} parent=11 // pred_check_branch
        %195 = sbr.rel (%p193) target = $region20
      $region19: #{_forward_impl.7} parent=11 // pred_region
        _
      $region20: #{_forward_impl.7} parent=11 // pred_fallthru
        _
      // Predicated region
      $region21: #{_forward_impl.7} parent=11 // pred_check
        %p196 = pneg %p102
      $region22: #{_forward_impl.7} parent=11 // pred_check_branch
        %198 = sbr.rel (%p196) target = $region24
      $region23: #{_forward_impl.7} parent=11 // pred_region
        _
      $region24: #{_forward_impl.7} parent=11 // pred_fallthru
        _
      // Predicated region
      $region25: #{_forward_impl.7} parent=11 // pred_check
        %p199 = pneg %p123
      $region26: #{_forward_impl.7} parent=11 // pred_check_branch
        %201 = sbr.rel (%p199) target = $region28
      $region27: #{_forward_impl.7} parent=11 // pred_region
        _
      $region28: #{_forward_impl.7} parent=11 // pred_fallthru
        _
    $region12: #{_forward_impl.7} parent=5 // pred_fallthru
      _
    %p202 = scmp.lt.s32.totalorder %s13, 2
    // Predicated region
    $region29: #{_forward_impl.7} parent=5 // pred_check
      %p203 = pneg %p202
    $region30: #{_forward_impl.7} parent=5 // pred_check_branch
      %205 = sbr.rel (%p203) target = $region32
    $region31: #{_forward_impl.7} parent=5 // pred_region
      // Predicated region
      $region33: #{_forward_impl.7} parent=31 // pred_check
        %p206 = pneg %p33
      $region34: #{_forward_impl.7} parent=31 // pred_check_branch
        %208 = sbr.rel (%p206) target = $region36
      $region35: #{_forward_impl.7} parent=31 // pred_region
        %p209 = scmp.lt.s32.totalorder %s13, 1
        %s210 = scalar_select %p209, %s13, 1
        %s211 = smul.addr %s210, 2
        %s212 = smul.addr %s211, 8
        %s213 = scalar_lea.vmem %s0, %s212
      $region36: #{_forward_impl.7} parent=31 // pred_fallthru
        _
    $region32: #{_forward_impl.7} parent=5 // pred_fallthru
      _
    %p214 = scmp.le.s32.totalorder 1, %s13
    %p215 = scmp.lt.s32.totalorder %s13, 3
    %p216 = pnand %p214, %p215
    %p217 = pneg %p216
    // Predicated region
    $region37: #{_forward_impl.7} parent=5 // pred_check
      _
    $region38: #{_forward_impl.7} parent=5 // pred_check_branch
      %219 = sbr.rel (%p216) target = $region40
    $region39: #{_forward_impl.7} parent=5 // pred_region
      %s220 = ssub.s32 %s13, 1
      %p221 = scmp.lt.s32.totalorder %s18, 1
      %s222 = scalar_select %p221, %s18, 1
      %s223 = smul.addr %s222, 2
      %s224 = smul.addr %s223, 8
      %s225 = scalar_lea.vmem %s0, %s224
      %p226 = pneg %p39
      %p227 = pneg %p36
      %p228 = pneg %p60
      %p229 = pneg %p57
      %p230 = pneg %p81
      %p231 = pneg %p78
      %p232 = pneg %p102
      %p233 = pneg %p99
      %p234 = pneg %p123
      %p235 = pneg %p120
      %p236 = pneg %p149
      %p237 = pneg %p146
      %p238 = scmp.lt.s32.totalorder %s18, 1
      %s239 = scalar_select %p238, %s18, 1
      %s240 = smul.addr %s239, 2
      %s241 = smul.addr %s240, 8
      %s242 = scalar_lea.vmem %s5, %s241
      %p243 = pneg %p175
      %p244 = pneg %p172
      %p245 = scmp.lt.s32.totalorder %s18, 1
      %s246 = scalar_select %p245, %s18, 1
      %s247 = scalar_lea.vmem %s6, %s246
      %p248 = scmp.lt.s32.totalorder %s18, 1
      %s249 = scalar_select %p248, %s18, 1
      %s250 = smul.addr %s249, 2
      %s251 = smul.addr %s250, 8
      %s252 = scalar_lea.vmem %s0, %s251
      %p253 = scmp.lt.s32.totalorder %s18, 1
      %s254 = scalar_select %p253, %s18, 1
      %s255 = smul.addr %s254, 2
      %s256 = smul.addr %s255, 8
      %s257 = scalar_lea.vmem %s5, %s256
      %p258 = scmp.lt.s32.totalorder %s18, 1
      %s259 = scalar_select %p258, %s18, 1
      %s260 = scalar_lea.vmem %s6, %s259
      %v262 = vld [vmem:[%s252] sm:$0xff]
      %v263 = vld [vmem:[%s252 + $0x8] sm:$0xf]
      %v264 = vld [vmem:[%s1] sm:$0x1]
      %v265 = vld [vmem:[%s2] sm:$0x1]
      %vm266 = vcmask 261120
      %v267 = vsel %vm266, %v262, 0.0
      %268 = vadd.xlane.f32.xlu0 %v267
      %v269 = vpop.xlane.xlu0 %268
      %vm270 = vcmask 257024
      %v271 = vsel %vm270, %v263, 0.0
      %272 = vadd.xlane.f32.xlu0 %v271
      %v273 = vpop.xlane.xlu0 %272
      %v274 = vrcp.pop 32.0
      %v275 = vmul.f32 %v269, %v274
      %v276 = vmul.f32 %v273, %v274
      %v277 = vsub.f32 %v262, %v275
      %v278 = vsub.f32 %v263, %v276
      %v279 = vmul.f32 %v277, %v277
      %v280 = vmul.f32 %v278, %v278
      %v281 = vsel %vm266, %v279, 0.0
      %282 = vadd.xlane.f32.xlu0 %v281
      %v283 = vpop.xlane.xlu0 %282
      %v284 = vsel %vm270, %v280, 0.0
      %285 = vadd.xlane.f32.xlu0 %v284
      %v286 = vpop.xlane.xlu0 %285
      %v287 = vmul.f32 %v283, %v274
      %v288 = vmul.f32 %v286, %v274
      %v289 = vadd.f32 %v287, 1e-05
      %v290 = vadd.f32 %v288, 1e-05
      %v291 = vrsqrt.pop %v289
      %v292 = vrsqrt.pop %v290
      %v293 = vmul.f32 %v277, %v291
      %v294 = vmul.f32 %v278, %v292
      %v296 = vlaneseq
      %v297 = vshrl.u32 %v296, 7
      %v298 = vsub.s32 0, %v297
      %v299 = vrot.slane %v264, %v298
      %v301 = vmul.f32 %v293, %v299
      %v302 = vmul.f32 %v294, %v299
      %v304 = vlaneseq
      %v305 = vshrl.u32 %v304, 7
      %v306 = vsub.s32 0, %v305
      %v307 = vrot.slane %v265, %v306
      %v309 = vadd.f32 %v301, %v307
      %v310 = vadd.f32 %v302, %v307
      %v311 = vpack.c.bf16 %v310, %v309
      %v312 = vld [vmem:[%s3] sm:$0xf]
      %v313 = vld [vmem:[%s3 + $0x4] sm:$0xf]
      %v314 = vld [vmem:[%s3 + $0x8] sm:$0xf]
      %v315 = vld [vmem:[%s3 + $0xc] sm:$0xf]
      %v320 = vunpack.c.l.b16 %v312
      %v321 = vunpack.c.l.b16 %v313
      %v322 = vunpack.c.l.b16 %v314
      %v323 = vunpack.c.l.b16 %v315
      %v324 = vpack.c.b16 %v321, %v320
      %v325 = vpack.c.b16 %v323, %v322
      %v329 = vsel %vm266, %v311, 0
      %331 = vmatprep.subr.bf16.mxu0 0
      %332 = vmatpush1.bf16.msra.mxu0 0
      %333 = vmatprep.subr.bf16.mxu0 0
      %334 = vmatpush1.bf16.msra.mxu0 0
      %335 = vmatprep.subr.bf16.mxu0 0
      %336 = vmatpush1.bf16.msra.mxu0 0
      %337 = vmatprep.subr.bf16.mxu0 0
      %338 = vmatpush1.bf16.msra.mxu0 0
      %339 = vmatprep.subr.bf16.mxu0 0
      %340 = vmatpush1.bf16.msra.mxu0 0
      %341 = vmatprep.subr.bf16.mxu0 0
      %342 = vmatpush1.bf16.msra.mxu0 0
      %343 = vmatprep.subr.bf16.mxu0 0
      %344 = vmatpush1.bf16.msra.mxu0 %v325
      %345 = vmatprep.subr.bf16.mxu0 0
      %346 = vmatpush1.bf16.msra.mxu0 %v324
      %347 = vmatprep.subr.bf16.mxu0 0
      %348 = vmatpush2.bf16.msra.mxu0 0
      %349 = vmatprep.subr.bf16.mxu0 0
      %350 = vmatpush2.bf16.msra.mxu0 0
      %351 = vmatprep.subr.bf16.mxu0 0
      %352 = vmatpush2.bf16.msra.mxu0 0
      %353 = vmatprep.subr.bf16.mxu0 0
      %354 = vmatpush2.bf16.msra.mxu0 0
      %355 = vmatprep.subr.bf16.mxu0 0
      %356 = vmatpush2.bf16.msra.mxu0 0
      %357 = vmatprep.subr.bf16.mxu0 0
      %358 = vmatpush2.bf16.msra.mxu0 0
      %359 = vmatprep.subr.bf16.mxu0 0
      %360 = vmatpush2.bf16.msra.mxu0 0
      %361 = vmatprep.subr.bf16.mxu0 0
      %362 = vmatpush2.bf16.msra.mxu0 0
      %363 = vmatprep.mubr.bf16.mxu0 0
      %364 = vmatmul.mubr.bf16.gmra.mxu0 %v329
      %v365 = vpop.f32.mrf.mxu0
      %v366 = vadd.f32 0.0, %v365
      %v367 = vpop.f32.mrf.mxu0
      %v368 = vpop.f32.mrf.mxu0
      %v369 = vadd.f32 0.0, %v368
      %v370 = vpop.f32.mrf.mxu0
      %371 = vdwg.mxu0
      %374 = vrot.lane.b32.xlu0 %v366, 120
      %v375 = vpop.permute.xlu0 %374
      %376 = vrot.lane.b32.xlu0 %v369, 120
      %v377 = vpop.permute.xlu0 %376
      %380 = vrot.lane.b32.xlu0 %v366, 112
      %v381 = vpop.permute.xlu0 %380
      %382 = vrot.lane.b32.xlu0 %v369, 112
      %v383 = vpop.permute.xlu0 %382
      %386 = vrot.lane.b32.xlu0 %v366, 104
      %v387 = vpop.permute.xlu0 %386
      %388 = vrot.lane.b32.xlu0 %v369, 104
      %v389 = vpop.permute.xlu0 %388
      %v392 = vpack.c.bf16 %v369, %v366
      %v393 = vpack.c.bf16 %v377, %v375
      %v394 = vpack.c.bf16 %v383, %v381
      %v395 = vpack.c.bf16 %v389, %v387
      %397 = vrot.lane.b32.xlu0 %v392, 96
      %v398 = vpop.permute.xlu0 %397
      %vm399 = vcmask 64512
      %v401 = vsel %vm399, %v392, 0
      %v404 = vsel %vm399, %v398, 0
      %406 = vmatprep.subr.bf16.mxu0 0
      %407 = vmatpush1.bf16.xpose.msra.mxu0 0
      %408 = vmatprep.subr.bf16.mxu0 0
      %409 = vmatpush1.bf16.xpose.msra.mxu0 0
      %410 = vmatprep.subr.bf16.mxu0 0
      %411 = vmatpush1.bf16.xpose.msra.mxu0 0
      %412 = vmatprep.subr.bf16.mxu0 0
      %413 = vmatpush1.bf16.xpose.msra.mxu0 0
      %414 = vmatprep.subr.bf16.mxu0 0
      %415 = vmatpush1.bf16.xpose.msra.mxu0 0
      %416 = vmatprep.subr.bf16.mxu0 0
      %417 = vmatpush1.bf16.xpose.msra.mxu0 0
      %418 = vmatprep.subr.bf16.mxu0 0
      %419 = vmatpush1.bf16.xpose.msra.mxu0 0
      %420 = vmatprep.subr.bf16.mxu0 0
      %421 = vmatpush1.bf16.xpose.msra.mxu0 %v404
      %422 = vmatprep.subr.bf16.mxu0 0
      %423 = vmatpush2.bf16.xpose.msra.mxu0 0
      %424 = vmatprep.subr.bf16.mxu0 0
      %425 = vmatpush2.bf16.xpose.msra.mxu0 0
      %426 = vmatprep.subr.bf16.mxu0 0
      %427 = vmatpush2.bf16.xpose.msra.mxu0 0
      %428 = vmatprep.subr.bf16.mxu0 0
      %429 = vmatpush2.bf16.xpose.msra.mxu0 0
      %430 = vmatprep.subr.bf16.mxu0 0
      %431 = vmatpush2.bf16.xpose.msra.mxu0 0
      %432 = vmatprep.subr.bf16.mxu0 0
      %433 = vmatpush2.bf16.xpose.msra.mxu0 0
      %434 = vmatprep.subr.bf16.mxu0 0
      %435 = vmatpush2.bf16.xpose.msra.mxu0 0
      %436 = vmatprep.subr.bf16.mxu0 0
      %437 = vmatpush2.bf16.xpose.msra.mxu0 0
      %438 = vmatprep.mubr.bf16.mxu0 0
      %439 = vmatmul.mubr.bf16.gmra.mxu0 %v401
      %v440 = vpop.f32.mrf.mxu0
      %v441 = vadd.f32 0.0, %v440
      %v442 = vpop.f32.mrf.mxu0
      %v443 = vpop.f32.mrf.mxu0
      %v444 = vadd.f32 0.0, %v443
      %v445 = vpop.f32.mrf.mxu0
      %446 = vdwg.mxu0
      %448 = vrot.lane.b32.xlu0 %v393, 96
      %v449 = vpop.permute.xlu0 %448
      %v451 = vsel %vm399, %v393, 0
      %v454 = vsel %vm399, %v449, 0
      %456 = vmatprep.subr.bf16.mxu0 0
      %457 = vmatpush1.bf16.xpose.msra.mxu0 0
      %458 = vmatprep.subr.bf16.mxu0 0
      %459 = vmatpush1.bf16.xpose.msra.mxu0 0
      %460 = vmatprep.subr.bf16.mxu0 0
      %461 = vmatpush1.bf16.xpose.msra.mxu0 0
      %462 = vmatprep.subr.bf16.mxu0 0
      %463 = vmatpush1.bf16.xpose.msra.mxu0 0
      %464 = vmatprep.subr.bf16.mxu0 0
      %465 = vmatpush1.bf16.xpose.msra.mxu0 0
      %466 = vmatprep.subr.bf16.mxu0 0
      %467 = vmatpush1.bf16.xpose.msra.mxu0 0
      %468 = vmatprep.subr.bf16.mxu0 0
      %469 = vmatpush1.bf16.xpose.msra.mxu0 0
      %470 = vmatprep.subr.bf16.mxu0 0
      %471 = vmatpush1.bf16.xpose.msra.mxu0 %v454
      %472 = vmatprep.subr.bf16.mxu0 0
      %473 = vmatpush2.bf16.xpose.msra.mxu0 0
      %474 = vmatprep.subr.bf16.mxu0 0
      %475 = vmatpush2.bf16.xpose.msra.mxu0 0
      %476 = vmatprep.subr.bf16.mxu0 0
      %477 = vmatpush2.bf16.xpose.msra.mxu0 0
      %478 = vmatprep.subr.bf16.mxu0 0
      %479 = vmatpush2.bf16.xpose.msra.mxu0 0
      %480 = vmatprep.subr.bf16.mxu0 0
      %481 = vmatpush2.bf16.xpose.msra.mxu0 0
      %482 = vmatprep.subr.bf16.mxu0 0
      %483 = vmatpush2.bf16.xpose.msra.mxu0 0
      %484 = vmatprep.subr.bf16.mxu0 0
      %485 = vmatpush2.bf16.xpose.msra.mxu0 0
      %486 = vmatprep.subr.bf16.mxu0 0
      %487 = vmatpush2.bf16.xpose.msra.mxu0 0
      %488 = vmatprep.mubr.bf16.mxu0 0
      %489 = vmatmul.mubr.bf16.gmra.mxu0 %v451
      %v490 = vpop.f32.mrf.mxu0
      %v491 = vadd.f32 0.0, %v490
      %v492 = vpop.f32.mrf.mxu0
      %v493 = vpop.f32.mrf.mxu0
      %v494 = vadd.f32 0.0, %v493
      %v495 = vpop.f32.mrf.mxu0
      %496 = vdwg.mxu0
      %498 = vrot.lane.b32.xlu0 %v394, 96
      %v499 = vpop.permute.xlu0 %498
      %v501 = vsel %vm399, %v394, 0
      %v504 = vsel %vm399, %v499, 0
      %506 = vmatprep.subr.bf16.mxu0 0
      %507 = vmatpush1.bf16.xpose.msra.mxu0 0
      %508 = vmatprep.subr.bf16.mxu0 0
      %509 = vmatpush1.bf16.xpose.msra.mxu0 0
      %510 = vmatprep.subr.bf16.mxu0 0
      %511 = vmatpush1.bf16.xpose.msra.mxu0 0
      %512 = vmatprep.subr.bf16.mxu0 0
      %513 = vmatpush1.bf16.xpose.msra.mxu0 0
      %514 = vmatprep.subr.bf16.mxu0 0
      %515 = vmatpush1.bf16.xpose.msra.mxu0 0
      %516 = vmatprep.subr.bf16.mxu0 0
      %517 = vmatpush1.bf16.xpose.msra.mxu0 0
      %518 = vmatprep.subr.bf16.mxu0 0
      %519 = vmatpush1.bf16.xpose.msra.mxu0 0
      %520 = vmatprep.subr.bf16.mxu0 0
      %521 = vmatpush1.bf16.xpose.msra.mxu0 %v504
      %522 = vmatprep.subr.bf16.mxu0 0
      %523 = vmatpush2.bf16.xpose.msra.mxu0 0
      %524 = vmatprep.subr.bf16.mxu0 0
      %525 = vmatpush2.bf16.xpose.msra.mxu0 0
      %526 = vmatprep.subr.bf16.mxu0 0
      %527 = vmatpush2.bf16.xpose.msra.mxu0 0
      %528 = vmatprep.subr.bf16.mxu0 0
      %529 = vmatpush2.bf16.xpose.msra.mxu0 0
      %530 = vmatprep.subr.bf16.mxu0 0
      %531 = vmatpush2.bf16.xpose.msra.mxu0 0
      %532 = vmatprep.subr.bf16.mxu0 0
      %533 = vmatpush2.bf16.xpose.msra.mxu0 0
      %534 = vmatprep.subr.bf16.mxu0 0
      %535 = vmatpush2.bf16.xpose.msra.mxu0 0
      %536 = vmatprep.subr.bf16.mxu0 0
      %537 = vmatpush2.bf16.xpose.msra.mxu0 0
      %538 = vmatprep.mubr.bf16.mxu0 0
      %539 = vmatmul.mubr.bf16.gmra.mxu0 %v501
      %v540 = vpop.f32.mrf.mxu0
      %v541 = vadd.f32 0.0, %v540
      %v542 = vpop.f32.mrf.mxu0
      %v543 = vpop.f32.mrf.mxu0
      %v544 = vadd.f32 0.0, %v543
      %v545 = vpop.f32.mrf.mxu0
      %546 = vdwg.mxu0
      %548 = vrot.lane.b32.xlu0 %v395, 96
      %v549 = vpop.permute.xlu0 %548
      %v551 = vsel %vm399, %v395, 0
      %v554 = vsel %vm399, %v549, 0
      %556 = vmatprep.subr.bf16.mxu0 0
      %557 = vmatpush1.bf16.xpose.msra.mxu0 0
      %558 = vmatprep.subr.bf16.mxu0 0
      %559 = vmatpush1.bf16.xpose.msra.mxu0 0
      %560 = vmatprep.subr.bf16.mxu0 0
      %561 = vmatpush1.bf16.xpose.msra.mxu0 0
      %562 = vmatprep.subr.bf16.mxu0 0
      %563 = vmatpush1.bf16.xpose.msra.mxu0 0
      %564 = vmatprep.subr.bf16.mxu0 0
      %565 = vmatpush1.bf16.xpose.msra.mxu0 0
      %566 = vmatprep.subr.bf16.mxu0 0
      %567 = vmatpush1.bf16.xpose.msra.mxu0 0
      %568 = vmatprep.subr.bf16.mxu0 0
      %569 = vmatpush1.bf16.xpose.msra.mxu0 0
      %570 = vmatprep.subr.bf16.mxu0 0
      %571 = vmatpush1.bf16.xpose.msra.mxu0 %v554
      %572 = vmatprep.subr.bf16.mxu0 0
      %573 = vmatpush2.bf16.xpose.msra.mxu0 0
      %574 = vmatprep.subr.bf16.mxu0 0
      %575 = vmatpush2.bf16.xpose.msra.mxu0 0
      %576 = vmatprep.subr.bf16.mxu0 0
      %577 = vmatpush2.bf16.xpose.msra.mxu0 0
      %578 = vmatprep.subr.bf16.mxu0 0
      %579 = vmatpush2.bf16.xpose.msra.mxu0 0
      %580 = vmatprep.subr.bf16.mxu0 0
      %581 = vmatpush2.bf16.xpose.msra.mxu0 0
      %582 = vmatprep.subr.bf16.mxu0 0
      %583 = vmatpush2.bf16.xpose.msra.mxu0 0
      %584 = vmatprep.subr.bf16.mxu0 0
      %585 = vmatpush2.bf16.xpose.msra.mxu0 0
      %586 = vmatprep.subr.bf16.mxu0 0
      %587 = vmatpush2.bf16.xpose.msra.mxu0 0
      %588 = vmatprep.mubr.bf16.mxu0 0
      %589 = vmatmul.mubr.bf16.gmra.mxu0 %v551
      %v590 = vpop.f32.mrf.mxu0
      %v591 = vadd.f32 0.0, %v590
      %v592 = vpop.f32.mrf.mxu0
      %v593 = vpop.f32.mrf.mxu0
      %v594 = vadd.f32 0.0, %v593
      %v595 = vpop.f32.mrf.mxu0
      %596 = vdwg.mxu0
      %v597 = vmul.f32 %v441, 0.35355338
      %v598 = vmul.f32 %v444, 0.35355338
      %v599 = vmul.f32 %v491, 0.35355338
      %v600 = vmul.f32 %v494, 0.35355338
      %v601 = vmul.f32 %v541, 0.35355338
      %v602 = vmul.f32 %v544, 0.35355338
      %v603 = vmul.f32 %v591, 0.35355338
      %v604 = vmul.f32 %v594, 0.35355338
      %vm605 = vcmask 97280
      %v606 = vsel %vm605, %v597, -inf
      %607 = vmax.xlane.f32.xlu0 %v606
      %v608 = vpop.xlane.xlu0 %607
      %vm609 = vcmask 93184
      %v610 = vsel %vm609, %v598, -inf
      %611 = vmax.xlane.f32.xlu0 %v610
      %v612 = vpop.xlane.xlu0 %611
      %v613 = vsel %vm605, %v599, -inf
      %614 = vmax.xlane.f32.xlu0 %v613
      %v615 = vpop.xlane.xlu0 %614
      %v616 = vsel %vm609, %v600, -inf
      %617 = vmax.xlane.f32.xlu0 %v616
      %v618 = vpop.xlane.xlu0 %617
      %v619 = vsel %vm605, %v601, -inf
      %620 = vmax.xlane.f32.xlu0 %v619
      %v621 = vpop.xlane.xlu0 %620
      %v622 = vsel %vm609, %v602, -inf
      %623 = vmax.xlane.f32.xlu0 %v622
      %v624 = vpop.xlane.xlu0 %623
      %v625 = vsel %vm605, %v603, -inf
      %626 = vmax.xlane.f32.xlu0 %v625
      %v627 = vpop.xlane.xlu0 %626
      %v628 = vsel %vm609, %v604, -inf
      %629 = vmax.xlane.f32.xlu0 %v628
      %v630 = vpop.xlane.xlu0 %629
      %v631 = vsub.f32 %v597, %v608
      %v632 = vsub.f32 %v598, %v612
      %v633 = vsub.f32 %v599, %v615
      %v634 = vsub.f32 %v600, %v618
      %v635 = vsub.f32 %v601, %v621
      %v636 = vsub.f32 %v602, %v624
      %v637 = vsub.f32 %v603, %v627
      %v638 = vsub.f32 %v604, %v630
      %v639 = vmul.f32 %v631, 1.442695
      %v640 = vpow.pop %v639
      %v641 = vmul.f32 %v632, 1.442695
      %v642 = vpow.pop %v641
      %v643 = vmul.f32 %v633, 1.442695
      %v644 = vpow.pop %v643
      %v645 = vmul.f32 %v634, 1.442695
      %v646 = vpow.pop %v645
      %v647 = vmul.f32 %v635, 1.442695
      %v648 = vpow.pop %v647
      %v649 = vmul.f32 %v636, 1.442695
      %v650 = vpow.pop %v649
      %v651 = vmul.f32 %v637, 1.442695
      %v652 = vpow.pop %v651
      %v653 = vmul.f32 %v638, 1.442695
      %v654 = vpow.pop %v653
      %v655 = vsel %vm605, %v640, 0.0
      %656 = vadd.xlane.f32.xlu0 %v655
      %v657 = vpop.xlane.xlu0 %656
      %v658 = vsel %vm609, %v642, 0.0
      %659 = vadd.xlane.f32.xlu0 %v658
      %v660 = vpop.xlane.xlu0 %659
      %v661 = vsel %vm605, %v644, 0.0
      %662 = vadd.xlane.f32.xlu0 %v661
      %v663 = vpop.xlane.xlu0 %662
      %v664 = vsel %vm609, %v646, 0.0
      %665 = vadd.xlane.f32.xlu0 %v664
      %v666 = vpop.xlane.xlu0 %665
      %v667 = vsel %vm605, %v648, 0.0
      %668 = vadd.xlane.f32.xlu0 %v667
      %v669 = vpop.xlane.xlu0 %668
      %v670 = vsel %vm609, %v650, 0.0
      %671 = vadd.xlane.f32.xlu0 %v670
      %v672 = vpop.xlane.xlu0 %671
      %v673 = vsel %vm605, %v652, 0.0
      %674 = vadd.xlane.f32.xlu0 %v673
      %v675 = vpop.xlane.xlu0 %674
      %v676 = vsel %vm609, %v654, 0.0
      %677 = vadd.xlane.f32.xlu0 %v676
      %v678 = vpop.xlane.xlu0 %677
      %v679 = vrcp.pop %v657
      %v680 = vmul.f32 %v640, %v679
      %v681 = vrcp.pop %v660
      %v682 = vmul.f32 %v642, %v681
      %v683 = vrcp.pop %v663
      %v684 = vmul.f32 %v644, %v683
      %v685 = vrcp.pop %v666
      %v686 = vmul.f32 %v646, %v685
      %v687 = vrcp.pop %v669
      %v688 = vmul.f32 %v648, %v687
      %v689 = vrcp.pop %v672
      %v690 = vmul.f32 %v650, %v689
      %v691 = vrcp.pop %v675
      %v692 = vmul.f32 %v652, %v691
      %v693 = vrcp.pop %v678
      %v694 = vmul.f32 %v654, %v693
      %v695 = vpack.c.bf16 %v682, %v680
      %v696 = vpack.c.bf16 %v686, %v684
      %v697 = vpack.c.bf16 %v690, %v688
      %v698 = vpack.c.bf16 %v694, %v692
      %699 = vrot.lane.b32.xlu0 %v392, 64
      %v700 = vpop.permute.xlu0 %699
      %v702 = vsel %vm605, %v695, 0
      %vm704 = vcmask 1045504
      %v706 = vsel %vm704, %v700, 0
      %708 = vmatprep.subr.bf16.mxu0 0
      %709 = vmatpush1.bf16.msra.mxu0 0
      %710 = vmatprep.subr.bf16.mxu0 0
      %711 = vmatpush1.bf16.msra.mxu0 0
      %712 = vmatprep.subr.bf16.mxu0 0
      %713 = vmatpush1.bf16.msra.mxu0 0
      %714 = vmatprep.subr.bf16.mxu0 0
      %715 = vmatpush1.bf16.msra.mxu0 0
      %716 = vmatprep.subr.bf16.mxu0 0
      %717 = vmatpush1.bf16.msra.mxu0 0
      %718 = vmatprep.subr.bf16.mxu0 0
      %719 = vmatpush1.bf16.msra.mxu0 0
      %720 = vmatprep.subr.bf16.mxu0 0
      %721 = vmatpush1.bf16.msra.mxu0 0
      %722 = vmatprep.subr.bf16.mxu0 0
      %723 = vmatpush1.bf16.msra.mxu0 %v706
      %724 = vmatprep.subr.bf16.mxu0 0
      %725 = vmatpush2.bf16.msra.mxu0 0
      %726 = vmatprep.subr.bf16.mxu0 0
      %727 = vmatpush2.bf16.msra.mxu0 0
      %728 = vmatprep.subr.bf16.mxu0 0
      %729 = vmatpush2.bf16.msra.mxu0 0
      %730 = vmatprep.subr.bf16.mxu0 0
      %731 = vmatpush2.bf16.msra.mxu0 0
      %732 = vmatprep.subr.bf16.mxu0 0
      %733 = vmatpush2.bf16.msra.mxu0 0
      %734 = vmatprep.subr.bf16.mxu0 0
      %735 = vmatpush2.bf16.msra.mxu0 0
      %736 = vmatprep.subr.bf16.mxu0 0
      %737 = vmatpush2.bf16.msra.mxu0 0
      %738 = vmatprep.subr.bf16.mxu0 0
      %739 = vmatpush2.bf16.msra.mxu0 0
      %740 = vmatprep.mubr.bf16.mxu0 0
      %741 = vmatmul.mubr.bf16.gmra.mxu0 %v702
      %v742 = vpop.f32.mrf.mxu0
      %v743 = vadd.f32 0.0, %v742
      %v744 = vpop.f32.mrf.mxu0
      %v745 = vpop.f32.mrf.mxu0
      %v746 = vadd.f32 0.0, %v745
      %v747 = vpop.f32.mrf.mxu0
      %748 = vdwg.mxu0
      %749 = vrot.lane.b32.xlu0 %v393, 64
      %v750 = vpop.permute.xlu0 %749
      %v752 = vsel %vm605, %v696, 0
      %v755 = vsel %vm704, %v750, 0
      %757 = vmatprep.subr.bf16.mxu0 0
      %758 = vmatpush1.bf16.msra.mxu0 0
      %759 = vmatprep.subr.bf16.mxu0 0
      %760 = vmatpush1.bf16.msra.mxu0 0
      %761 = vmatprep.subr.bf16.mxu0 0
      %762 = vmatpush1.bf16.msra.mxu0 0
      %763 = vmatprep.subr.bf16.mxu0 0
      %764 = vmatpush1.bf16.msra.mxu0 0
      %765 = vmatprep.subr.bf16.mxu0 0
      %766 = vmatpush1.bf16.msra.mxu0 0
      %767 = vmatprep.subr.bf16.mxu0 0
      %768 = vmatpush1.bf16.msra.mxu0 0
      %769 = vmatprep.subr.bf16.mxu0 0
      %770 = vmatpush1.bf16.msra.mxu0 0
      %771 = vmatprep.subr.bf16.mxu0 0
      %772 = vmatpush1.bf16.msra.mxu0 %v755
      %773 = vmatprep.subr.bf16.mxu0 0
      %774 = vmatpush2.bf16.msra.mxu0 0
      %775 = vmatprep.subr.bf16.mxu0 0
      %776 = vmatpush2.bf16.msra.mxu0 0
      %777 = vmatprep.subr.bf16.mxu0 0
      %778 = vmatpush2.bf16.msra.mxu0 0
      %779 = vmatprep.subr.bf16.mxu0 0
      %780 = vmatpush2.bf16.msra.mxu0 0
      %781 = vmatprep.subr.bf16.mxu0 0
      %782 = vmatpush2.bf16.msra.mxu0 0
      %783 = vmatprep.subr.bf16.mxu0 0
      %784 = vmatpush2.bf16.msra.mxu0 0
      %785 = vmatprep.subr.bf16.mxu0 0
      %786 = vmatpush2.bf16.msra.mxu0 0
      %787 = vmatprep.subr.bf16.mxu0 0
      %788 = vmatpush2.bf16.msra.mxu0 0
      %789 = vmatprep.mubr.bf16.mxu0 0
      %790 = vmatmul.mubr.bf16.gmra.mxu0 %v752
      %v791 = vpop.f32.mrf.mxu0
      %v792 = vadd.f32 0.0, %v791
      %v793 = vpop.f32.mrf.mxu0
      %v794 = vpop.f32.mrf.mxu0
      %v795 = vadd.f32 0.0, %v794
      %v796 = vpop.f32.mrf.mxu0
      %797 = vdwg.mxu0
      %798 = vrot.lane.b32.xlu0 %v394, 64
      %v799 = vpop.permute.xlu0 %798
      %v801 = vsel %vm605, %v697, 0
      %v804 = vsel %vm704, %v799, 0
      %806 = vmatprep.subr.bf16.mxu0 0
      %807 = vmatpush1.bf16.msra.mxu0 0
      %808 = vmatprep.subr.bf16.mxu0 0
      %809 = vmatpush1.bf16.msra.mxu0 0
      %810 = vmatprep.subr.bf16.mxu0 0
      %811 = vmatpush1.bf16.msra.mxu0 0
      %812 = vmatprep.subr.bf16.mxu0 0
      %813 = vmatpush1.bf16.msra.mxu0 0
      %814 = vmatprep.subr.bf16.mxu0 0
      %815 = vmatpush1.bf16.msra.mxu0 0
      %816 = vmatprep.subr.bf16.mxu0 0
      %817 = vmatpush1.bf16.msra.mxu0 0
      %818 = vmatprep.subr.bf16.mxu0 0
      %819 = vmatpush1.bf16.msra.mxu0 0
      %820 = vmatprep.subr.bf16.mxu0 0
      %821 = vmatpush1.bf16.msra.mxu0 %v804
      %822 = vmatprep.subr.bf16.mxu0 0
      %823 = vmatpush2.bf16.msra.mxu0 0
      %824 = vmatprep.subr.bf16.mxu0 0
      %825 = vmatpush2.bf16.msra.mxu0 0
      %826 = vmatprep.subr.bf16.mxu0 0
      %827 = vmatpush2.bf16.msra.mxu0 0
      %828 = vmatprep.subr.bf16.mxu0 0
      %829 = vmatpush2.bf16.msra.mxu0 0
      %830 = vmatprep.subr.bf16.mxu0 0
      %831 = vmatpush2.bf16.msra.mxu0 0
      %832 = vmatprep.subr.bf16.mxu0 0
      %833 = vmatpush2.bf16.msra.mxu0 0
      %834 = vmatprep.subr.bf16.mxu0 0
      %835 = vmatpush2.bf16.msra.mxu0 0
      %836 = vmatprep.subr.bf16.mxu0 0
      %837 = vmatpush2.bf16.msra.mxu0 0
      %838 = vmatprep.mubr.bf16.mxu0 0
      %839 = vmatmul.mubr.bf16.gmra.mxu0 %v801
      %v840 = vpop.f32.mrf.mxu0
      %v841 = vadd.f32 0.0, %v840
      %v842 = vpop.f32.mrf.mxu0
      %v843 = vpop.f32.mrf.mxu0
      %v844 = vadd.f32 0.0, %v843
      %v845 = vpop.f32.mrf.mxu0
      %846 = vdwg.mxu0
      %847 = vrot.lane.b32.xlu0 %v395, 64
      %v848 = vpop.permute.xlu0 %847
      %v850 = vsel %vm605, %v698, 0
      %v853 = vsel %vm704, %v848, 0
      %855 = vmatprep.subr.bf16.mxu0 0
      %856 = vmatpush1.bf16.msra.mxu0 0
      %857 = vmatprep.subr.bf16.mxu0 0
      %858 = vmatpush1.bf16.msra.mxu0 0
      %859 = vmatprep.subr.bf16.mxu0 0
      %860 = vmatpush1.bf16.msra.mxu0 0
      %861 = vmatprep.subr.bf16.mxu0 0
      %862 = vmatpush1.bf16.msra.mxu0 0
      %863 = vmatprep.subr.bf16.mxu0 0
      %864 = vmatpush1.bf16.msra.mxu0 0
      %865 = vmatprep.subr.bf16.mxu0 0
      %866 = vmatpush1.bf16.msra.mxu0 0
      %867 = vmatprep.subr.bf16.mxu0 0
      %868 = vmatpush1.bf16.msra.mxu0 0
      %869 = vmatprep.subr.bf16.mxu0 0
      %870 = vmatpush1.bf16.msra.mxu0 %v853
      %871 = vmatprep.subr.bf16.mxu0 0
      %872 = vmatpush2.bf16.msra.mxu0 0
      %873 = vmatprep.subr.bf16.mxu0 0
      %874 = vmatpush2.bf16.msra.mxu0 0
      %875 = vmatprep.subr.bf16.mxu0 0
      %876 = vmatpush2.bf16.msra.mxu0 0
      %877 = vmatprep.subr.bf16.mxu0 0
      %878 = vmatpush2.bf16.msra.mxu0 0
      %879 = vmatprep.subr.bf16.mxu0 0
      %880 = vmatpush2.bf16.msra.mxu0 0
      %881 = vmatprep.subr.bf16.mxu0 0
      %882 = vmatpush2.bf16.msra.mxu0 0
      %883 = vmatprep.subr.bf16.mxu0 0
      %884 = vmatpush2.bf16.msra.mxu0 0
      %885 = vmatprep.subr.bf16.mxu0 0
      %886 = vmatpush2.bf16.msra.mxu0 0
      %887 = vmatprep.mubr.bf16.mxu0 0
      %888 = vmatmul.mubr.bf16.gmra.mxu0 %v850
      %v889 = vpop.f32.mrf.mxu0
      %v890 = vadd.f32 0.0, %v889
      %v891 = vpop.f32.mrf.mxu0
      %v892 = vpop.f32.mrf.mxu0
      %v893 = vadd.f32 0.0, %v892
      %v894 = vpop.f32.mrf.mxu0
      %895 = vdwg.mxu0
      %v896 = vpack.c.bf16 %v746, %v743
      %v897 = vpack.c.bf16 %v795, %v792
      %v898 = vpack.c.bf16 %v844, %v841
      %v899 = vpack.c.bf16 %v893, %v890
      %v900 = vld [vmem:[%s4] sm:$0xf]
      %v901 = vld [vmem:[%s4 + $0x4] sm:$0xf]
      %v902 = vld [vmem:[%s4 + $0x8] sm:$0xf]
      %v903 = vld [vmem:[%s4 + $0xc] sm:$0xf]
      %v905 = vsel %vm399, %v896, 0
      %vm907 = vcmask 1043456
      %v909 = vsel %vm907, %v900, 0
      %911 = vmatprep.subr.bf16.mxu0 0
      %912 = vmatpush1.bf16.msra.mxu0 0
      %913 = vmatprep.subr.bf16.mxu0 0
      %914 = vmatpush1.bf16.msra.mxu0 0
      %915 = vmatprep.subr.bf16.mxu0 0
      %916 = vmatpush1.bf16.msra.mxu0 0
      %917 = vmatprep.subr.bf16.mxu0 0
      %918 = vmatpush1.bf16.msra.mxu0 0
      %919 = vmatprep.subr.bf16.mxu0 0
      %920 = vmatpush1.bf16.msra.mxu0 0
      %921 = vmatprep.subr.bf16.mxu0 0
      %922 = vmatpush1.bf16.msra.mxu0 0
      %923 = vmatprep.subr.bf16.mxu0 0
      %924 = vmatpush1.bf16.msra.mxu0 0
      %925 = vmatprep.subr.bf16.mxu0 0
      %926 = vmatpush1.bf16.msra.mxu0 %v909
      %927 = vmatprep.subr.bf16.mxu0 0
      %928 = vmatpush2.bf16.msra.mxu0 0
      %929 = vmatprep.subr.bf16.mxu0 0
      %930 = vmatpush2.bf16.msra.mxu0 0
      %931 = vmatprep.subr.bf16.mxu0 0
      %932 = vmatpush2.bf16.msra.mxu0 0
      %933 = vmatprep.subr.bf16.mxu0 0
      %934 = vmatpush2.bf16.msra.mxu0 0
      %935 = vmatprep.subr.bf16.mxu0 0
      %936 = vmatpush2.bf16.msra.mxu0 0
      %937 = vmatprep.subr.bf16.mxu0 0
      %938 = vmatpush2.bf16.msra.mxu0 0
      %939 = vmatprep.subr.bf16.mxu0 0
      %940 = vmatpush2.bf16.msra.mxu0 0
      %941 = vmatprep.subr.bf16.mxu0 0
      %942 = vmatpush2.bf16.msra.mxu0 0
      %943 = vmatprep.mubr.bf16.mxu0 0
      %944 = vmatmul.mubr.bf16.gmra.mxu0 %v905
      %v945 = vpop.f32.mrf.mxu0
      %v946 = vadd.f32 0.0, %v945
      %v947 = vpop.f32.mrf.mxu0
      %v948 = vpop.f32.mrf.mxu0
      %v949 = vadd.f32 0.0, %v948
      %v950 = vpop.f32.mrf.mxu0
      %951 = vdwg.mxu0
      %v953 = vsel %vm399, %v897, 0
      %v956 = vsel %vm907, %v901, 0
      %958 = vmatprep.subr.bf16.mxu0 0
      %959 = vmatpush1.bf16.msra.mxu0 0
      %960 = vmatprep.subr.bf16.mxu0 0
      %961 = vmatpush1.bf16.msra.mxu0 0
      %962 = vmatprep.subr.bf16.mxu0 0
      %963 = vmatpush1.bf16.msra.mxu0 0
      %964 = vmatprep.subr.bf16.mxu0 0
      %965 = vmatpush1.bf16.msra.mxu0 0
      %966 = vmatprep.subr.bf16.mxu0 0
      %967 = vmatpush1.bf16.msra.mxu0 0
      %968 = vmatprep.subr.bf16.mxu0 0
      %969 = vmatpush1.bf16.msra.mxu0 0
      %970 = vmatprep.subr.bf16.mxu0 0
      %971 = vmatpush1.bf16.msra.mxu0 0
      %972 = vmatprep.subr.bf16.mxu0 0
      %973 = vmatpush1.bf16.msra.mxu0 %v956
      %974 = vmatprep.subr.bf16.mxu0 0
      %975 = vmatpush2.bf16.msra.mxu0 0
      %976 = vmatprep.subr.bf16.mxu0 0
      %977 = vmatpush2.bf16.msra.mxu0 0
      %978 = vmatprep.subr.bf16.mxu0 0
      %979 = vmatpush2.bf16.msra.mxu0 0
      %980 = vmatprep.subr.bf16.mxu0 0
      %981 = vmatpush2.bf16.msra.mxu0 0
      %982 = vmatprep.subr.bf16.mxu0 0
      %983 = vmatpush2.bf16.msra.mxu0 0
      %984 = vmatprep.subr.bf16.mxu0 0
      %985 = vmatpush2.bf16.msra.mxu0 0
      %986 = vmatprep.subr.bf16.mxu0 0
      %987 = vmatpush2.bf16.msra.mxu0 0
      %988 = vmatprep.subr.bf16.mxu0 0
      %989 = vmatpush2.bf16.msra.mxu0 0
      %990 = vmatprep.mubr.bf16.mxu0 0
      %991 = vmatmul.mubr.bf16.gmra.mxu0 %v953
      %v992 = vpop.f32.mrf.mxu0
      %v993 = vadd.f32 0.0, %v992
      %v994 = vpop.f32.mrf.mxu0
      %v995 = vpop.f32.mrf.mxu0
      %v996 = vadd.f32 0.0, %v995
      %v997 = vpop.f32.mrf.mxu0
      %998 = vdwg.mxu0
      %v1000 = vsel %vm399, %v898, 0
      %v1003 = vsel %vm907, %v902, 0
      %1005 = vmatprep.subr.bf16.mxu0 0
      %1006 = vmatpush1.bf16.msra.mxu0 0
      %1007 = vmatprep.subr.bf16.mxu0 0
      %1008 = vmatpush1.bf16.msra.mxu0 0
      %1009 = vmatprep.subr.bf16.mxu0 0
      %1010 = vmatpush1.bf16.msra.mxu0 0
      %1011 = vmatprep.subr.bf16.mxu0 0
      %1012 = vmatpush1.bf16.msra.mxu0 0
      %1013 = vmatprep.subr.bf16.mxu0 0
      %1014 = vmatpush1.bf16.msra.mxu0 0
      %1015 = vmatprep.subr.bf16.mxu0 0
      %1016 = vmatpush1.bf16.msra.mxu0 0
      %1017 = vmatprep.subr.bf16.mxu0 0
      %1018 = vmatpush1.bf16.msra.mxu0 0
      %1019 = vmatprep.subr.bf16.mxu0 0
      %1020 = vmatpush1.bf16.msra.mxu0 %v1003
      %1021 = vmatprep.subr.bf16.mxu0 0
      %1022 = vmatpush2.bf16.msra.mxu0 0
      %1023 = vmatprep.subr.bf16.mxu0 0
      %1024 = vmatpush2.bf16.msra.mxu0 0
      %1025 = vmatprep.subr.bf16.mxu0 0
      %1026 = vmatpush2.bf16.msra.mxu0 0
      %1027 = vmatprep.subr.bf16.mxu0 0
      %1028 = vmatpush2.bf16.msra.mxu0 0
      %1029 = vmatprep.subr.bf16.mxu0 0
      %1030 = vmatpush2.bf16.msra.mxu0 0
      %1031 = vmatprep.subr.bf16.mxu0 0
      %1032 = vmatpush2.bf16.msra.mxu0 0
      %1033 = vmatprep.subr.bf16.mxu0 0
      %1034 = vmatpush2.bf16.msra.mxu0 0
      %1035 = vmatprep.subr.bf16.mxu0 0
      %1036 = vmatpush2.bf16.msra.mxu0 0
      %1037 = vmatprep.mubr.bf16.mxu0 0
      %1038 = vmatmul.mubr.bf16.gmra.mxu0 %v1000
      %v1039 = vpop.f32.mrf.mxu0
      %v1040 = vadd.f32 0.0, %v1039
      %v1041 = vpop.f32.mrf.mxu0
      %v1042 = vpop.f32.mrf.mxu0
      %v1043 = vadd.f32 0.0, %v1042
      %v1044 = vpop.f32.mrf.mxu0
      %1045 = vdwg.mxu0
      %v1047 = vsel %vm399, %v899, 0
      %v1050 = vsel %vm907, %v903, 0
      %1052 = vmatprep.subr.bf16.mxu0 0
      %1053 = vmatpush1.bf16.msra.mxu0 0
      %1054 = vmatprep.subr.bf16.mxu0 0
      %1055 = vmatpush1.bf16.msra.mxu0 0
      %1056 = vmatprep.subr.bf16.mxu0 0
      %1057 = vmatpush1.bf16.msra.mxu0 0
      %1058 = vmatprep.subr.bf16.mxu0 0
      %1059 = vmatpush1.bf16.msra.mxu0 0
      %1060 = vmatprep.subr.bf16.mxu0 0
      %1061 = vmatpush1.bf16.msra.mxu0 0
      %1062 = vmatprep.subr.bf16.mxu0 0
      %1063 = vmatpush1.bf16.msra.mxu0 0
      %1064 = vmatprep.subr.bf16.mxu0 0
      %1065 = vmatpush1.bf16.msra.mxu0 0
      %1066 = vmatprep.subr.bf16.mxu0 0
      %1067 = vmatpush1.bf16.msra.mxu0 %v1050
      %1068 = vmatprep.subr.bf16.mxu0 0
      %1069 = vmatpush2.bf16.msra.mxu0 0
      %1070 = vmatprep.subr.bf16.mxu0 0
      %1071 = vmatpush2.bf16.msra.mxu0 0
      %1072 = vmatprep.subr.bf16.mxu0 0
      %1073 = vmatpush2.bf16.msra.mxu0 0
      %1074 = vmatprep.subr.bf16.mxu0 0
      %1075 = vmatpush2.bf16.msra.mxu0 0
      %1076 = vmatprep.subr.bf16.mxu0 0
      %1077 = vmatpush2.bf16.msra.mxu0 0
      %1078 = vmatprep.subr.bf16.mxu0 0
      %1079 = vmatpush2.bf16.msra.mxu0 0
      %1080 = vmatprep.subr.bf16.mxu0 0
      %1081 = vmatpush2.bf16.msra.mxu0 0
      %1082 = vmatprep.subr.bf16.mxu0 0
      %1083 = vmatpush2.bf16.msra.mxu0 0
      %1084 = vmatprep.mubr.bf16.mxu0 0
      %1085 = vmatmul.mubr.bf16.gmra.mxu0 %v1047
      %v1086 = vpop.f32.mrf.mxu0
      %v1087 = vadd.f32 0.0, %v1086
      %v1088 = vpop.f32.mrf.mxu0
      %v1089 = vpop.f32.mrf.mxu0
      %v1090 = vadd.f32 0.0, %v1089
      %v1091 = vpop.f32.mrf.mxu0
      %1092 = vdwg.mxu0
      %v1093 = vsel %vm266, %v946, 0.0
      %v1094 = vsel %vm266, %v993, 0.0
      %v1095 = vadd.f32 %v1093, %v1094
      %v1096 = vsel %vm266, %v1040, 0.0
      %v1097 = vadd.f32 %v1095, %v1096
      %v1098 = vsel %vm266, %v1087, 0.0
      %v1099 = vadd.f32 %v1097, %v1098
      %v1100 = vsel %vm270, %v949, 0.0
      %v1101 = vsel %vm270, %v996, 0.0
      %v1102 = vadd.f32 %v1100, %v1101
      %v1103 = vsel %vm270, %v1043, 0.0
      %v1104 = vadd.f32 %v1102, %v1103
      %v1105 = vsel %vm270, %v1090, 0.0
      %v1106 = vadd.f32 %v1104, %v1105
      %1107 = vst.msk [vmem:[%s257] sm:$0xff] %vm266, %v1099
      %1108 = vst.msk [vmem:[%s257 + $0x8] sm:$0xf] %vm270, %v1106
      %v1109 = vsel %vm605, %v680, -inf
      %v1110 = vsel %vm605, %v684, -inf
      %v1111 = vsel %vm605, %v688, -inf
      %v1112 = vmax.f32 %v1109, %v1111
      %v1113 = vsel %vm605, %v692, -inf
      %v1114 = vmax.f32 %v1110, %v1113
      %v1115 = vmax.f32 %v1112, %v1114
      %v1116 = vsel %vm609, %v682, -inf
      %v1117 = vsel %vm609, %v686, -inf
      %v1118 = vsel %vm609, %v690, -inf
      %v1119 = vmax.f32 %v1116, %v1118
      %v1120 = vsel %vm609, %v694, -inf
      %v1121 = vmax.f32 %v1117, %v1120
      %v1122 = vmax.f32 %v1119, %v1121
      %v1123 = vsel %vm605, %v1115, 0.0
      %v1124 = vsel %vm609, %v1122, 0.0
      %v1125 = vadd.f32 %v1123, %v1124
      %v1126 = vrot.slane %v1125, 4
      %v1127 = vadd.f32 %v1125, %v1126
      %v1128 = vrot.slane %v1127, 2
      %v1129 = vadd.f32 %v1127, %v1128
      %v1130 = vrot.slane %v1129, 1
      %v1131 = vadd.f32 %v1129, %v1130
      %v1133 = vsel %vm605, %v1131, 0
      %v1136 = vsel %vm907, %v1122, 0
      %1138 = vmatprep.subr.mxu0 0.0
      %1139 = vmatpush1.msra.mxu0 0.0
      %1140 = vmatprep.subr.mxu0 0.0
      %1141 = vmatpush1.msra.mxu0 0.0
      %1142 = vmatprep.subr.mxu0 0.0
      %1143 = vmatpush1.msra.mxu0 0.0
      %1144 = vmatprep.subr.mxu0 0.0
      %1145 = vmatpush1.msra.mxu0 0.0
      %1146 = vmatprep.subr.mxu0 0.0
      %1147 = vmatpush1.msra.mxu0 0.0
      %1148 = vmatprep.subr.mxu0 0.0
      %1149 = vmatpush1.msra.mxu0 0.0
      %1150 = vmatprep.subr.mxu0 0.0
      %1151 = vmatpush1.msra.mxu0 0.0
      %1152 = vmatprep.subr.mxu0 0.0
      %1153 = vmatpush1.msra.mxu0 0.0
      %1154 = vmatprep.subr.mxu0 0.0
      %1155 = vmatpush1.msra.mxu0 0.0
      %1156 = vmatprep.subr.mxu0 0.0
      %1157 = vmatpush1.msra.mxu0 0.0
      %1158 = vmatprep.subr.mxu0 0.0
      %1159 = vmatpush1.msra.mxu0 0.0
      %1160 = vmatprep.subr.mxu0 0.0
      %1161 = vmatpush1.msra.mxu0 0.0
      %1162 = vmatprep.subr.mxu0 0.0
      %1163 = vmatpush1.msra.mxu0 0.0
      %1164 = vmatprep.subr.mxu0 0.0
      %1165 = vmatpush1.msra.mxu0 0.0
      %1166 = vmatprep.subr.mxu0 0.0
      %1167 = vmatpush1.msra.mxu0 %v1136
      %1168 = vmatprep.subr.mxu0 0.0
      %1169 = vmatpush1.msra.mxu0 %v1115
      %1170 = vmatprep.subr.mxu0 0.0
      %1171 = vmatpush2.msra.mxu0 0.0
      %1172 = vmatprep.subr.mxu0 0.0
      %1173 = vmatpush2.msra.mxu0 0.0
      %1174 = vmatprep.subr.mxu0 0.0
      %1175 = vmatpush2.msra.mxu0 0.0
      %1176 = vmatprep.subr.mxu0 0.0
      %1177 = vmatpush2.msra.mxu0 0.0
      %1178 = vmatprep.subr.mxu0 0.0
      %1179 = vmatpush2.msra.mxu0 0.0
      %1180 = vmatprep.subr.mxu0 0.0
      %1181 = vmatpush2.msra.mxu0 0.0
      %1182 = vmatprep.subr.mxu0 0.0
      %1183 = vmatpush2.msra.mxu0 0.0
      %1184 = vmatprep.subr.mxu0 0.0
      %1185 = vmatpush2.msra.mxu0 0.0
      %1186 = vmatprep.subr.mxu0 0.0
      %1187 = vmatpush2.msra.mxu0 0.0
      %1188 = vmatprep.subr.mxu0 0.0
      %1189 = vmatpush2.msra.mxu0 0.0
      %1190 = vmatprep.subr.mxu0 0.0
      %1191 = vmatpush2.msra.mxu0 0.0
      %1192 = vmatprep.subr.mxu0 0.0
      %1193 = vmatpush2.msra.mxu0 0.0
      %1194 = vmatprep.subr.mxu0 0.0
      %1195 = vmatpush2.msra.mxu0 0.0
      %1196 = vmatprep.subr.mxu0 0.0
      %1197 = vmatpush2.msra.mxu0 0.0
      %1198 = vmatprep.subr.mxu0 0.0
      %1199 = vmatpush2.msra.mxu0 0.0
      %1200 = vmatprep.subr.mxu0 0.0
      %1201 = vmatpush2.msra.mxu0 0.0
      %1202 = vmatprep.mubr.f32.mxu0 0.0
      %1203 = vmatmul.mubr.f32.gmra.mxu0 %v1133
      %v1204 = vpop.f32.mrf.mxu0
      %v1205 = vadd.f32 0.0, %v1204
      %v1206 = vpop.f32.mrf.mxu0
      %1207 = vdwg.mxu0
      %vm1208 = vcmask 90112
      %1209 = vst.msk [vmem:[%s260] sm:$0x1] %vm1208, %v1205
      %p1210 = scmp.lt.s32.totalorder %s18, 1
      %s1211 = scalar_select %p1210, %s18, 1
      %s1212 = smul.addr %s1211, 2
      %s1213 = smul.addr %s1212, 8
      %s1214 = scalar_lea.vmem %s5, %s1213
      %p1215 = scmp.lt.s32.totalorder %s18, 1
      %s1216 = scalar_select %p1215, %s18, 1
      %s1217 = scalar_lea.vmem %s6, %s1216
      // Predicated region
      $region41: #{_forward_impl.7} parent=39 // pred_check
        %p1218 = pneg %p146
      $region42: #{_forward_impl.7} parent=39 // pred_check_branch
        %1220 = sbr.rel (%p1218) target = $region44
      $region43: #{_forward_impl.7} parent=39 // pred_region
        _
      $region44: #{_forward_impl.7} parent=39 // pred_fallthru
        _
      // Predicated region
      $region45: #{_forward_impl.7} parent=39 // pred_check
        %p1221 = pneg %p172
      $region46: #{_forward_impl.7} parent=39 // pred_check_branch
        %1223 = sbr.rel (%p1221) target = $region48
      $region47: #{_forward_impl.7} parent=39 // pred_region
        _
      $region48: #{_forward_impl.7} parent=39 // pred_fallthru
        _
    $region40: #{_forward_impl.7} parent=5 // pred_fallthru
      _
    %p1224 = scmp.le.s32.totalorder 2, %s13
    // Predicated region
    $region49: #{_forward_impl.7} parent=5 // pred_check
      %p1225 = pneg %p1224
    $region50: #{_forward_impl.7} parent=5 // pred_check_branch
      %1227 = sbr.rel (%p1225) target = $region52
    $region51: #{_forward_impl.7} parent=5 // pred_region
      %s1228 = ssub.s32 %s13, 2
      // Predicated region
      $region53: #{_forward_impl.7} parent=51 // pred_check
        %p1229 = pneg %p152
      $region54: #{_forward_impl.7} parent=51 // pred_check_branch
        %1231 = sbr.rel (%p1229) target = $region56
      $region55: #{_forward_impl.7} parent=51 // pred_region
        %p1232 = scmp.lt.s32.totalorder %s19, 1
        %s1233 = scalar_select %p1232, %s19, 1
        %s1234 = smul.addr %s1233, 2
        %s1235 = smul.addr %s1234, 8
        %s1236 = scalar_lea.vmem %s5, %s1235
      $region56: #{_forward_impl.7} parent=51 // pred_fallthru
        _
      // Predicated region
      $region57: #{_forward_impl.7} parent=51 // pred_check
        %p1237 = pneg %p178
      $region58: #{_forward_impl.7} parent=51 // pred_check_branch
        %1239 = sbr.rel (%p1237) target = $region60
      $region59: #{_forward_impl.7} parent=51 // pred_region
        %p1240 = scmp.lt.s32.totalorder %s19, 1
        %s1241 = scalar_select %p1240, %s19, 1
        %s1242 = scalar_lea.vmem %s6, %s1241
      $region60: #{_forward_impl.7} parent=51 // pred_fallthru
        _
    $region52: #{_forward_impl.7} parent=5 // pred_fallthru
      _
  $region6: #{_forward_impl.7} parent=0 // loop_footer
    %s17 = sadd.s32 1, %s13
  $region7: #{_forward_impl.7} parent=0 // loop_footer_branch
    %12 = sbr.rel target = $region3
  $region8: #{_forward_impl.7} parent=0 // loop_exit
    _

// kernel: _forward_impl.9
$region0: #{_forward_impl.9}
  #allocation0 [shape = 'u32[]', space=smem, size = 0x4, offset = 0x4, fixed_abs, tag = 'smem constant byte address 0x4 - core index']
  #allocation1 [shape = 'u32[144,128]{1,0:T(1,128)}', space=vmem, size = 0x12000, scoped, tag = 'internal scratch']
  %s0 = inlined_call_operand.vmem [shape: f32[16,32], index: 0, kind: input, shape index: {}]
  %s1 = inlined_call_operand.vmem [shape: f32[1,32], index: 1, kind: input, shape index: {}]
  %s2 = inlined_call_operand.vmem [shape: f32[1,32], index: 2, kind: input, shape index: {}]
  %s3 = inlined_call_operand.hbm [shape: f32[16,32], index: 3, kind: output, shape index: {}]
  %s4 = sld [smem:[#allocation0]]
  $region22: #{_forward_impl.9} parent=0
    _
  %s6 = ssub.s32 1, %s4
  %s7 = scalar_select 0, %s6, %s4
  $region1: #{_forward_impl.9} parent=0
    #allocation2 [shape = 'u8[8192]{0}', space=vmem, size = 0x2000, scoped, tag = 'output window, operand 0, single buffered']
    #allocation3 [shape = 's32[1]{0}', space=sflag, size = 0x4, scoped, tag = 'scoped memory for _forward_impl.9']
    %8 = vsyncpa [#allocation3], 0
    // Predicated region
    $region2: #{_forward_impl.9} parent=1 // pred_check
      _
    $region3: #{_forward_impl.9} parent=1 // pred_check_branch
      %10 = sbr.rel (0) target = $region5
    $region4: #{_forward_impl.9} parent=1 // pred_region
      _
    $region5: #{_forward_impl.9} parent=1 // pred_fallthru
      _
    // Predicated region
    $region6: #{_forward_impl.9} parent=1 // pred_check
      _
    $region7: #{_forward_impl.9} parent=1 // pred_check_branch
      %12 = sbr.rel (0) target = $region9
    $region8: #{_forward_impl.9} parent=1 // pred_region
      _
    $region9: #{_forward_impl.9} parent=1 // pred_fallthru
      _
    // Predicated region
    $region10: #{_forward_impl.9} parent=1 // pred_check
      _
    $region11: #{_forward_impl.9} parent=1 // pred_check_branch
      %14 = sbr.rel (0) target = $region13
    $region12: #{_forward_impl.9} parent=1 // pred_region
      _
    $region13: #{_forward_impl.9} parent=1 // pred_fallthru
      _
    %v15 = vld [vmem:[%s0] sm:$0xff]
    %v16 = vld [vmem:[%s0 + $0x8] sm:$0xff]
    %v17 = vld [vmem:[%s1] sm:$0x1]
    %v18 = vld [vmem:[%s2] sm:$0x1]
    %vm19 = vcmask 261120
    %v20 = vsel %vm19, %v15, 0.0
    %21 = vadd.xlane.f32.xlu0 %v20
    %v22 = vpop.xlane.xlu0 %21
    %v23 = vsel %vm19, %v16, 0.0
    %24 = vadd.xlane.f32.xlu0 %v23
    %v25 = vpop.xlane.xlu0 %24
    %v26 = vrcp.pop 32.0
    %v27 = vmul.f32 %v22, %v26
    %v28 = vmul.f32 %v25, %v26
    %v29 = vsub.f32 %v15, %v27
    %v30 = vsub.f32 %v16, %v28
    %v31 = vmul.f32 %v29, %v29
    %v32 = vmul.f32 %v30, %v30
    %v33 = vsel %vm19, %v31, 0.0
    %34 = vadd.xlane.f32.xlu0 %v33
    %v35 = vpop.xlane.xlu0 %34
    %v36 = vsel %vm19, %v32, 0.0
    %37 = vadd.xlane.f32.xlu0 %v36
    %v38 = vpop.xlane.xlu0 %37
    %v39 = vmul.f32 %v35, %v26
    %v40 = vmul.f32 %v38, %v26
    %v41 = vadd.f32 %v39, 1e-05
    %v42 = vadd.f32 %v40, 1e-05
    %v43 = vrsqrt.pop %v41
    %v44 = vrsqrt.pop %v42
    %v45 = vmul.f32 %v29, %v43
    %v46 = vmul.f32 %v30, %v44
    %v48 = vlaneseq
    %v49 = vshrl.u32 %v48, 7
    %v50 = vsub.s32 0, %v49
    %v51 = vrot.slane %v17, %v50
    %v53 = vmul.f32 %v45, %v51
    %v54 = vmul.f32 %v46, %v51
    %v56 = vlaneseq
    %v57 = vshrl.u32 %v56, 7
    %v58 = vsub.s32 0, %v57
    %v59 = vrot.slane %v18, %v58
    %v61 = vadd.f32 %v53, %v59
    %v62 = vadd.f32 %v54, %v59
    %63 = vst.msk [vmem:[#allocation2] sm:$0xff] %vm19, %v61
    %64 = vst.msk [vmem:[#allocation2 + $0x8] sm:$0xff] %vm19, %v62
    // Predicated region
    $region14: #{_forward_impl.9} parent=1 // pred_check
      _
    $region15: #{_forward_impl.9} parent=1 // pred_check_branch
      %66 = sbr.rel (0) target = $region17
    $region16: #{_forward_impl.9} parent=1 // pred_region
      %s68 = ssub.s32 256, 256
      %69 = vsyncadd [#allocation3], %s68
      %s70 = sshll.u32 [#allocation2], 4
      %s71 = int_to_ptr.vmem [resolvable:$true] %s70
      %76 = dma.vmem_to_hbm [thread:$0]  %s71, 256, %s3, [#allocation3], 128, 128, 8
    $region17: #{_forward_impl.9} parent=1 // pred_fallthru
      _
    // Predicated region
    $region18: #{_forward_impl.9} parent=1 // pred_check
      _
    $region19: #{_forward_impl.9} parent=1 // pred_check_branch
      %78 = sbr.rel (0) target = $region21
    $region20: #{_forward_impl.9} parent=1 // pred_region
      %79 = dma.done [#allocation3], 256
    $region21: #{_forward_impl.9} parent=1 // pred_fallthru
      _
    %80 = vsyncpa [#allocation3], 1

// kernel: _forward_impl.8
$region0: #{_forward_impl.8}
  #allocation0 [shape = 'u32[]', space=smem, size = 0x4, offset = 0x4, fixed_abs, tag = 'smem constant byte address 0x4 - core index']
  #allocation1 [shape = 'u32[144,128]{1,0:T(1,128)}', space=vmem, size = 0x12000, scoped, tag = 'internal scratch']
  %s0 = inlined_call_operand.vmem [shape: f32[16,32], index: 0, kind: input, shape index: {}]
  %s1 = inlined_call_operand.vmem [shape: f32[1,32], index: 1, kind: input, shape index: {}]
  %s2 = inlined_call_operand.vmem [shape: f32[1,32], index: 2, kind: input, shape index: {}]
  %s3 = inlined_call_operand.vmem [shape: bf16[32,64], index: 3, kind: input, shape index: {}]
  %s4 = inlined_call_operand.vmem [shape: f32[1,64], index: 4, kind: input, shape index: {}]
  %s5 = inlined_call_operand.vmem [shape: bf16[64,32], index: 5, kind: input, shape index: {}]
  %s6 = inlined_call_operand.vmem [shape: f32[1,32], index: 6, kind: input, shape index: {}]
  %s7 = inlined_call_operand.vmem [shape: f32[16,32], index: 7, kind: output, shape index: {}]
  %s8 = sld [smem:[#allocation0]]
  $region38: #{_forward_impl.8} parent=0
    _
  %s10 = ssub.s32 1, %s8
  %s11 = scalar_select 0, %s10, %s8
  // Predicated region
  $region2: #{_forward_impl.8} parent=0 // pred_check
    _
  $region3: #{_forward_impl.8} parent=0 // pred_check_branch
    %13 = sbr.rel (0) target = $region5
  $region4: #{_forward_impl.8} parent=0 // pred_region
    _
  $region5: #{_forward_impl.8} parent=0 // pred_fallthru
    _
  // Predicated region
  $region6: #{_forward_impl.8} parent=0 // pred_check
    _
  $region7: #{_forward_impl.8} parent=0 // pred_check_branch
    %15 = sbr.rel (0) target = $region9
  $region8: #{_forward_impl.8} parent=0 // pred_region
    _
  $region9: #{_forward_impl.8} parent=0 // pred_fallthru
    _
  // Predicated region
  $region10: #{_forward_impl.8} parent=0 // pred_check
    _
  $region11: #{_forward_impl.8} parent=0 // pred_check_branch
    %17 = sbr.rel (0) target = $region13
  $region12: #{_forward_impl.8} parent=0 // pred_region
    _
  $region13: #{_forward_impl.8} parent=0 // pred_fallthru
    _
  // Predicated region
  $region14: #{_forward_impl.8} parent=0 // pred_check
    _
  $region15: #{_forward_impl.8} parent=0 // pred_check_branch
    %19 = sbr.rel (0) target = $region17
  $region16: #{_forward_impl.8} parent=0 // pred_region
    _
  $region17: #{_forward_impl.8} parent=0 // pred_fallthru
    _
  // Predicated region
  $region18: #{_forward_impl.8} parent=0 // pred_check
    _
  $region19: #{_forward_impl.8} parent=0 // pred_check_branch
    %21 = sbr.rel (0) target = $region21
  $region20: #{_forward_impl.8} parent=0 // pred_region
    _
  $region21: #{_forward_impl.8} parent=0 // pred_fallthru
    _
  // Predicated region
  $region22: #{_forward_impl.8} parent=0 // pred_check
    _
  $region23: #{_forward_impl.8} parent=0 // pred_check_branch
    %23 = sbr.rel (0) target = $region25
  $region24: #{_forward_impl.8} parent=0 // pred_region
    _
  $region25: #{_forward_impl.8} parent=0 // pred_fallthru
    _
  // Predicated region
  $region26: #{_forward_impl.8} parent=0 // pred_check
    _
  $region27: #{_forward_impl.8} parent=0 // pred_check_branch
    %25 = sbr.rel (0) target = $region29
  $region28: #{_forward_impl.8} parent=0 // pred_region
    _
  $region29: #{_forward_impl.8} parent=0 // pred_fallthru
    _
  %v27 = vld [vmem:[%s0] sm:$0xff]
  %v28 = vld [vmem:[%s0 + $0x8] sm:$0xff]
  %v29 = vld [vmem:[%s1] sm:$0x1]
  %v30 = vld [vmem:[%s2] sm:$0x1]
  %vm31 = vcmask 261120
  %v32 = vsel %vm31, %v27, 0.0
  %33 = vadd.xlane.f32.xlu0 %v32
  %v34 = vpop.xlane.xlu0 %33
  %v35 = vsel %vm31, %v28, 0.0
  %36 = vadd.xlane.f32.xlu0 %v35
  %v37 = vpop.xlane.xlu0 %36
  %v38 = vrcp.pop 32.0
  %v39 = vmul.f32 %v34, %v38
  %v40 = vmul.f32 %v37, %v38
  %v41 = vsub.f32 %v27, %v39
  %v42 = vsub.f32 %v28, %v40
  %v43 = vmul.f32 %v41, %v41
  %v44 = vmul.f32 %v42, %v42
  %v45 = vsel %vm31, %v43, 0.0
  %46 = vadd.xlane.f32.xlu0 %v45
  %v47 = vpop.xlane.xlu0 %46
  %v48 = vsel %vm31, %v44, 0.0
  %49 = vadd.xlane.f32.xlu0 %v48
  %v50 = vpop.xlane.xlu0 %49
  %v51 = vmul.f32 %v47, %v38
  %v52 = vmul.f32 %v50, %v38
  %v53 = vadd.f32 %v51, 1e-05
  %v54 = vadd.f32 %v52, 1e-05
  %v55 = vrsqrt.pop %v53
  %v56 = vrsqrt.pop %v54
  %v57 = vmul.f32 %v41, %v55
  %v58 = vmul.f32 %v42, %v56
  %v60 = vlaneseq
  %v61 = vshrl.u32 %v60, 7
  %v62 = vsub.s32 0, %v61
  %v63 = vrot.slane %v29, %v62
  %v65 = vmul.f32 %v57, %v63
  %v66 = vmul.f32 %v58, %v63
  %v68 = vlaneseq
  %v69 = vshrl.u32 %v68, 7
  %v70 = vsub.s32 0, %v69
  %v71 = vrot.slane %v30, %v70
  %v73 = vadd.f32 %v65, %v71
  %v74 = vadd.f32 %v66, %v71
  %v75 = vpack.c.bf16 %v74, %v73
  %v76 = vld [vmem:[%s3] sm:$0xf]
  %v77 = vld [vmem:[%s3 + $0x4] sm:$0xf]
  %v78 = vld [vmem:[%s3 + $0x8] sm:$0xf]
  %v79 = vld [vmem:[%s3 + $0xc] sm:$0xf]
  %v80 = vld [vmem:[%s4] sm:$0x1]
  %v82 = vlaneseq
  %v83 = vshrl.u32 %v82, 7
  %v84 = vsub.s32 0, %v83
  %v85 = vrot.slane %v80, %v84
  %v91 = vunpack.c.l.b16 %v76
  %v92 = vunpack.c.l.b16 %v77
  %v93 = vunpack.c.l.b16 %v78
  %v94 = vunpack.c.l.b16 %v79
  %v95 = vpack.c.b16 %v92, %v91
  %v96 = vpack.c.b16 %v94, %v93
  %v100 = vsel %vm31, %v75, 0
  %102 = vmatprep.subr.bf16.mxu0 0
  %103 = vmatpush1.bf16.msra.mxu0 0
  %104 = vmatprep.subr.bf16.mxu0 0
  %105 = vmatpush1.bf16.msra.mxu0 0
  %106 = vmatprep.subr.bf16.mxu0 0
  %107 = vmatpush1.bf16.msra.mxu0 0
  %108 = vmatprep.subr.bf16.mxu0 0
  %109 = vmatpush1.bf16.msra.mxu0 0
  %110 = vmatprep.subr.bf16.mxu0 0
  %111 = vmatpush1.bf16.msra.mxu0 0
  %112 = vmatprep.subr.bf16.mxu0 0
  %113 = vmatpush1.bf16.msra.mxu0 0
  %114 = vmatprep.subr.bf16.mxu0 0
  %115 = vmatpush1.bf16.msra.mxu0 %v96
  %116 = vmatprep.subr.bf16.mxu0 0
  %117 = vmatpush1.bf16.msra.mxu0 %v95
  %118 = vmatprep.subr.bf16.mxu0 0
  %119 = vmatpush2.bf16.msra.mxu0 0
  %120 = vmatprep.subr.bf16.mxu0 0
  %121 = vmatpush2.bf16.msra.mxu0 0
  %122 = vmatprep.subr.bf16.mxu0 0
  %123 = vmatpush2.bf16.msra.mxu0 0
  %124 = vmatprep.subr.bf16.mxu0 0
  %125 = vmatpush2.bf16.msra.mxu0 0
  %126 = vmatprep.subr.bf16.mxu0 0
  %127 = vmatpush2.bf16.msra.mxu0 0
  %128 = vmatprep.subr.bf16.mxu0 0
  %129 = vmatpush2.bf16.msra.mxu0 0
  %130 = vmatprep.subr.bf16.mxu0 0
  %131 = vmatpush2.bf16.msra.mxu0 0
  %132 = vmatprep.subr.bf16.mxu0 0
  %133 = vmatpush2.bf16.msra.mxu0 0
  %134 = vmatprep.mubr.bf16.mxu0 0
  %135 = vmatmul.mubr.bf16.gmra.mxu0 %v100
  %v136 = vpop.f32.mrf.mxu0
  %v137 = vadd.f32 %v85, %v136
  %v138 = vpop.f32.mrf.mxu0
  %v139 = vpop.f32.mrf.mxu0
  %v140 = vadd.f32 %v85, %v139
  %v141 = vpop.f32.mrf.mxu0
  %142 = vdwg.mxu0
  %v143 = vmul.f32 %v137, 0.5
  %v144 = vmul.f32 %v140, 0.5
  %v145 = vmul.f32 %v137, 0.70710677
  %v146 = vmul.f32 %v140, 0.70710677
  %vm147 = vcmp.ge.f32.partialorder %v145, 0.0
  %vm148 = vcmp.ge.f32.partialorder %v146, 0.0
  %v149 = vsel %vm147, 1.0, -1.0
  %v150 = vsel %vm148, 1.0, -1.0
  %v151 = vand.u32 2147483647, %v145
  %v152 = vand.u32 2147483647, %v146
  %v153 = vmul.f32 %v151, 0.3275911
  %v154 = vmul.f32 %v152, 0.3275911
  %v155 = vadd.f32 %v153, 1.0
  %v156 = vadd.f32 %v154, 1.0
  %v157 = vrcp.pop %v155
  %v158 = vmul.f32 1.0, %v157
  %v159 = vrcp.pop %v156
  %v160 = vmul.f32 1.0, %v159
  %v161 = vmul.f32 %v158, 1.0614054
  %v162 = vmul.f32 %v160, 1.0614054
  %v163 = vadd.f32 %v161, -1.4531521
  %v164 = vadd.f32 %v162, -1.4531521
  %v165 = vmul.f32 %v163, %v158
  %v166 = vmul.f32 %v164, %v160
  %v167 = vadd.f32 %v165, 1.4214138
  %v168 = vadd.f32 %v166, 1.4214138
  %v169 = vmul.f32 %v167, %v158
  %v170 = vmul.f32 %v168, %v160
  %v171 = vadd.f32 %v169, -0.28449672
  %v172 = vadd.f32 %v170, -0.28449672
  %v173 = vmul.f32 %v171, %v158
  %v174 = vmul.f32 %v172, %v160
  %v175 = vadd.f32 %v173, 0.2548296
  %v176 = vadd.f32 %v174, 0.2548296
  %v177 = vmul.f32 %v175, %v158
  %v178 = vmul.f32 %v176, %v160
  %v179 = vsub.f32 0.0, %v151
  %v180 = vsub.f32 0.0, %v152
  %v181 = vmul.f32 %v179, %v151
  %v182 = vmul.f32 %v180, %v152
  %v183 = vmul.f32 %v181, 1.442695
  %v184 = vpow.pop %v183
  %v185 = vmul.f32 %v182, 1.442695
  %v186 = vpow.pop %v185
  %v187 = vmul.f32 %v177, %v184
  %v188 = vmul.f32 %v178, %v186
  %v189 = vsub.f32 1.0, %v187
  %v190 = vsub.f32 1.0, %v188
  %v191 = vmul.f32 %v149, %v189
  %v192 = vmul.f32 %v150, %v190
  %v193 = vadd.f32 %v191, 1.0
  %v194 = vadd.f32 %v192, 1.0
  %v195 = vmul.f32 %v143, %v193
  %v196 = vmul.f32 %v144, %v194
  %v197 = vpack.c.bf16 %v196, %v195
  %v198 = vld [vmem:[%s5] sm:$0xf]
  %v199 = vld [vmem:[%s5 + $0x4] sm:$0xf]
  %v200 = vld [vmem:[%s5 + $0x8] sm:$0xf]
  %v201 = vld [vmem:[%s5 + $0xc] sm:$0xf]
  %v202 = vld [vmem:[%s5 + $0x10] sm:$0xf]
  %v203 = vld [vmem:[%s5 + $0x14] sm:$0xf]
  %v204 = vld [vmem:[%s5 + $0x18] sm:$0xf]
  %v205 = vld [vmem:[%s5 + $0x1c] sm:$0xf]
  %v206 = vld [vmem:[%s6] sm:$0x1]
  %v208 = vlaneseq
  %v209 = vshrl.u32 %v208, 7
  %v210 = vsub.s32 0, %v209
  %v211 = vrot.slane %v206, %v210
  %v221 = vunpack.c.l.b16 %v198
  %v222 = vunpack.c.l.b16 %v199
  %v223 = vunpack.c.l.b16 %v200
  %v224 = vunpack.c.l.b16 %v201
  %v225 = vunpack.c.l.b16 %v202
  %v226 = vunpack.c.l.b16 %v203
  %v227 = vunpack.c.l.b16 %v204
  %v228 = vunpack.c.l.b16 %v205
  %v229 = vpack.c.b16 %v222, %v221
  %v230 = vpack.c.b16 %v224, %v223
  %v231 = vpack.c.b16 %v226, %v225
  %v232 = vpack.c.b16 %v228, %v227
  %vm237 = vcmask 523264
  %v239 = vsel %vm237, %v197, 0
  %241 = vmatprep.subr.bf16.mxu0 0
  %242 = vmatpush1.bf16.msra.mxu0 0
  %243 = vmatprep.subr.bf16.mxu0 0
  %244 = vmatpush1.bf16.msra.mxu0 0
  %245 = vmatprep.subr.bf16.mxu0 0
  %246 = vmatpush1.bf16.msra.mxu0 0
  %247 = vmatprep.subr.bf16.mxu0 0
  %248 = vmatpush1.bf16.msra.mxu0 0
  %249 = vmatprep.subr.bf16.mxu0 0
  %250 = vmatpush1.bf16.msra.mxu0 %v232
  %251 = vmatprep.subr.bf16.mxu0 0
  %252 = vmatpush1.bf16.msra.mxu0 %v231
  %253 = vmatprep.subr.bf16.mxu0 0
  %254 = vmatpush1.bf16.msra.mxu0 %v230
  %255 = vmatprep.subr.bf16.mxu0 0
  %256 = vmatpush1.bf16.msra.mxu0 %v229
  %257 = vmatprep.subr.bf16.mxu0 0
  %258 = vmatpush2.bf16.msra.mxu0 0
  %259 = vmatprep.subr.bf16.mxu0 0
  %260 = vmatpush2.bf16.msra.mxu0 0
  %261 = vmatprep.subr.bf16.mxu0 0
  %262 = vmatpush2.bf16.msra.mxu0 0
  %263 = vmatprep.subr.bf16.mxu0 0
  %264 = vmatpush2.bf16.msra.mxu0 0
  %265 = vmatprep.subr.bf16.mxu0 0
  %266 = vmatpush2.bf16.msra.mxu0 0
  %267 = vmatprep.subr.bf16.mxu0 0
  %268 = vmatpush2.bf16.msra.mxu0 0
  %269 = vmatprep.subr.bf16.mxu0 0
  %270 = vmatpush2.bf16.msra.mxu0 0
  %271 = vmatprep.subr.bf16.mxu0 0
  %272 = vmatpush2.bf16.msra.mxu0 0
  %273 = vmatprep.mubr.bf16.mxu0 0
  %274 = vmatmul.mubr.bf16.gmra.mxu0 %v239
  %v275 = vpop.f32.mrf.mxu0
  %v276 = vadd.f32 %v211, %v275
  %v277 = vpop.f32.mrf.mxu0
  %v278 = vpop.f32.mrf.mxu0
  %v279 = vadd.f32 %v211, %v278
  %v280 = vpop.f32.mrf.mxu0
  %281 = vdwg.mxu0
  %v282 = vadd.f32 %v276, %v27
  %v283 = vadd.f32 %v279, %v28
  %284 = vst.msk [vmem:[%s7] sm:$0xff] %vm31, %v282
  %285 = vst.msk [vmem:[%s7 + $0x8] sm:$0xff] %vm31, %v283
  // Predicated region
  $region30: #{_forward_impl.8} parent=0 // pred_check
    _
  $region31: #{_forward_impl.8} parent=0 // pred_check_branch
    %287 = sbr.rel (0) target = $region33
  $region32: #{_forward_impl.8} parent=0 // pred_region
    _
  $region33: #{_forward_impl.8} parent=0 // pred_fallthru
    _
  // Predicated region
  $region34: #{_forward_impl.8} parent=0 // pred_check
    _
  $region35: #{_forward_impl.8} parent=0 // pred_check_branch
    %289 = sbr.rel (0) target = $region37
  $region36: #{_forward_impl.8} parent=0 // pred_region
    _
  $region37: #{_forward_impl.8} parent=0 // pred_fallthru
    _

</llo_original>
